<compile_context>
chip_gen: v5e
topology: v5e:2x2
jax: 0.10.0
libtpu: 0.0.40
codegen_flags: <defaults>
</compile_context>

<pallas_src>
import jax
import jax.numpy as jnp
from jax import lax
from jax.experimental import pallas as pl
from jax.experimental.pallas import tpu as pltpu

# Hyper-parameters fixed by TextCNN.__init__
EMBED_DIM = 256
CLASS_NUM = 3
KERNEL_NUM = 16                      # Co per filter size
KERNEL_SIZES = (3, 4, 5)
PAD = 2                              # Conv2d padding=(2, 0) along the sequence axis
NT = max(KERNEL_SIZES)               # 5 taps in the fused common window
C_GRP = 64                           # lanes per tap group (48 real channels + 16 zero)
C_ACC = 128                          # accumulator / feature lane width (48 real)
N_FUSED = ((NT * C_GRP + 127) // 128) * 128   # 384 = 3 x 128 lanes


def textcnn_kernel(x_ref, w_ref, bias_ref, tvalid_ref, fcw_ref, fcb_ref, probs_ref):
    """Fused conv (one packed matmul) + ReLU + masked max-pool + FC + softmax.

    x_ref:      (TB, Lp2, E)     bf16 padded embeddings (one batch tile)
    w_ref:      (E, N_FUSED)     bf16 packed conv weights, tap t at lanes [64t, 64t+48)
    bias_ref:   (1, C_ACC)       f32  conv bias (zeros in lanes >= 48)
    tvalid_ref: (1, C_ACC)       i32  per-channel valid conv-output length (0 in pad lanes)
    fcw_ref:    (C_ACC, C_ACC)   bf16 fc weight (rows >= 48 and cols >= 3 are zero)
    fcb_ref:    (1, C_ACC)       f32  fc bias (-1e30 in lanes >= 3 so softmax pads -> 0)
    probs_ref:  (TB, C_ACC)      f32  softmax output (lanes 0..2 are the real classes)
    """
    TB, Lp2, E = x_ref.shape
    T = Lp2 - NT + 1                                      # common pooled window length

    # One wide MXU matmul covers all 5 taps x 3 filter banks (N = 384, was 640).
    y = jnp.dot(x_ref[...].reshape(TB * Lp2, E), w_ref[...],
                preferred_element_type=jnp.float32)       # (TB*Lp2, N_FUSED) f32
    y = y.reshape(TB, Lp2, N_FUSED)

    # Lane-aligned 128-wide blocks: block k holds taps {2k, 2k+1} at lanes {0..47, 64..111}.
    b0 = y[:, :, 0:C_ACC]
    b1 = y[:, :, C_ACC:2 * C_ACC]
    b2 = y[:, :, 2 * C_ACC:3 * C_ACC]
    # Bring the odd taps to lanes 0..47 with an XLU lane roll (64 of 128 lanes is
    # direction-symmetric; XLU slot is free while the MXU / VPU are busy).
    b0r = pltpu.roll(b0, shift=C_GRP, axis=2)
    b1r = pltpu.roll(b1, shift=C_GRP, axis=2)

    # Shifted-tap accumulation over the common window. Lanes >= 48 accumulate
    # wrong-tap garbage but are masked (tvalid=0) before the max and hit zero
    # rows of the fc weight, so they never affect the result.
    conv = (b0[:, 0:T, :] + b0r[:, 1:1 + T, :] + b1[:, 2:2 + T, :]
            + b1r[:, 3:3 + T, :] + b2[:, 4:4 + T, :])
    conv = jnp.maximum(conv + bias_ref[...][None, :, :], 0.0)         # bias + ReLU (f32)

    # Mask positions past each filter's true output length (0 fill is safe only
    # because ReLU precedes the pooling), then max-pool over the sequence axis.
    t_iota = lax.broadcasted_iota(jnp.int32, (T, C_ACC), 0)
    valid = t_iota < tvalid_ref[...]                                  # (T, C_ACC)
    feat = jnp.max(jnp.where(valid[None, :, :], conv, 0.0), axis=1)   # (TB, C_ACC)

    # Folded concat + Linear(48, 3): bf16 on the MXU, f32 accumulation.
    logits = jnp.dot(feat.astype(jnp.bfloat16), fcw_ref[...],
                     preferred_element_type=jnp.float32) + fcb_ref[...]

    # softmax over the 3 real logits only: padded lanes carry a -1e30 bias -> exp = 0.
    # Exact f32 division (no approx reciprocal) keeps sum-to-1 within 1e-5.
    m = jnp.max(logits, axis=-1, keepdims=True)
    e = jnp.exp(logits - m)
    probs_ref[...] = e / jnp.sum(e, axis=-1, keepdims=True)


def _vmem_capacity_bytes():
    """Per-core VMEM capacity; falls back to the smallest current generation (v7x)."""
    try:
        return int(pltpu.get_tpu_info().vmem_capacity_bytes)
    except Exception:
        return 64 * 1024 * 1024


def _pack_params(params, L):
    """Pack conv / fc parameters into lane-dense, MXU-friendly operands."""
    E, Co = EMBED_DIM, KERNEL_NUM
    w_fused = jnp.zeros((E, N_FUSED), jnp.float32)
    bias = jnp.zeros((1, C_ACC), jnp.float32)
    tvalid = jnp.zeros((1, C_ACC), jnp.int32)
    fcw = jnp.zeros((C_ACC, C_ACC), jnp.float32)
    fcb = jnp.full((1, C_ACC), -1e30, jnp.float32)            # pad lanes -> softmax 0
    fcb = fcb.at[0, :CLASS_NUM].set(params['fc_b'])
    fct = params['fc_w'].T                                    # (48, 3)
    for j, f in enumerate(KERNEL_SIZES):
        wf = params[f'conv_w{f}'][:, 0]                       # (Co, f, E)
        for t in range(f):                                    # taps >= f stay zero
            col = C_GRP * t + Co * j
            w_fused = w_fused.at[:, col:col + Co].set(wf[:, t, :].T)
        bias = bias.at[0, Co * j:Co * (j + 1)].set(params[f'conv_b{f}'])
        tvalid = tvalid.at[0, Co * j:Co * (j + 1)].set(L + 2 * PAD - f + 1)
        fcw = fcw.at[Co * j:Co * (j + 1), :CLASS_NUM].set(fct[Co * j:Co * (j + 1), :])
    return (w_fused.astype(jnp.bfloat16), bias, tvalid,
            fcw.astype(jnp.bfloat16), fcb)


def textcnn_forward(input_ids, params, *, batch_tile=None):
    B, L = input_ids.shape
    E = EMBED_DIM
    vocab = params['embed'].shape[0]

    # --- geometry: fold Conv2d padding=(2,0) + fused-window extension into the ids;
    #     Lp2 is a multiple of 16 so the bf16 activation packs full sublane pairs ---
    extra = NT - min(KERNEL_SIZES)
    Lp2 = -(-(L + 2 * PAD + extra) // 16) * 16
    right = Lp2 - L - PAD

    # --- per-generation VMEM budget -> batch tile.
    #     Working set per batch row ~ double-buffered bf16 activations (2*Lp2*E*2)
    #     + f32 matmul result (Lp2*N_FUSED*4) + rolled copies / accumulator (~4*Lp2*128*4).
    #     Sized against v7x's 64 MiB/TC; scoped limit raised where the chip has more.
    cap = _vmem_capacity_bytes()
    vmem_limit = int(min(cap, 128 * 1024 * 1024) * 0.75)      # 96 MiB v5e/v6e, 48 MiB v7x
    budget = int(min(cap, 64 * 1024 * 1024) * 0.5)            # conservative across gens
    per_row = Lp2 * (2 * E * 2 + N_FUSED * 4 + 4 * C_ACC * 4)
    if batch_tile is None:
        tb = max(8, min(128, (budget // per_row) // 8 * 8))
        # Keep >= 2 grid steps so dimension_semantics=("parallel",) can feed both
        # TensorCores on v7x (only shrinks tb when the batch itself is small).
        while tb > 8 and -(-B // tb) < 2:
            tb = max(8, (tb // 2) // 8 * 8)
    else:
        tb = batch_tile
    Bp = -(-B // tb) * tb

    # --- fold conv zero-padding into the token ids via a dedicated zero-embedding row
    #     (removes a jnp.pad HBM round trip of the big activation) ---
    pad_id = vocab
    ids = jnp.concatenate([
        jnp.full((B, PAD), pad_id, jnp.int32),
        input_ids.astype(jnp.int32),
        jnp.full((B, right), pad_id, jnp.int32)], axis=1)
    ids = jnp.pad(ids, ((0, Bp - B), (0, 0)), constant_values=pad_id)
    embed_ext = jnp.concatenate(
        [params['embed'], jnp.zeros((1, E), jnp.float32)], axis=0)
    # bf16 MXU inputs (intentional: ~2e-2 abs tolerance vs the f32 reference).
    x_pad = jnp.take(embed_ext, ids, axis=0).astype(jnp.bfloat16)     # (Bp, Lp2, E)
    # TODO(synk): move the embedding gather in-kernel (scalar-prefetch ids + DMA row
    # gather / table-in-VMEM) to avoid the HBM round trip of the padded activation.

    w_fused, bias, tvalid, fcw, fcb = _pack_params(params, L)

    grid = (Bp // tb,)
    flops = 2 * Bp * Lp2 * E * N_FUSED + 2 * Bp * C_ACC * C_ACC
    bytes_accessed = (Bp * Lp2 * E * 2 + E * N_FUSED * 2
                      + C_ACC * C_ACC * 2 + 4 * C_ACC * 4
                      + Bp * C_ACC * 4)

    probs = pl.pallas_call(
        textcnn_kernel,
        out_shape=jax.ShapeDtypeStruct((Bp, C_ACC), jnp.float32),
        grid=grid,
        in_specs=[
            pl.BlockSpec((tb, Lp2, E), lambda b: (b, 0, 0)),          # batch-tiled acts
            pl.BlockSpec((E, N_FUSED), lambda b: (0, 0)),             # packed conv weight
            pl.BlockSpec((1, C_ACC), lambda b: (0, 0)),               # conv bias
            pl.BlockSpec((1, C_ACC), lambda b: (0, 0)),               # valid lengths
            pl.BlockSpec((C_ACC, C_ACC), lambda b: (0, 0)),           # fc weight
            pl.BlockSpec((1, C_ACC), lambda b: (0, 0)),               # fc bias
        ],
        out_specs=pl.BlockSpec((tb, C_ACC), lambda b: (b, 0)),        # lane-dense output
        compiler_params=pltpu.CompilerParams(
            dimension_semantics=("parallel",),
            vmem_limit_bytes=vmem_limit),
        cost_estimate=pl.CostEstimate(
            flops=flops, transcendentals=Bp * C_ACC,
            bytes_accessed=bytes_accessed),
    )(x_pad, w_fused, bias, tvalid, fcw, fcb)
    # TODO(synk): nn.Dropout(0.5) is identity in eval mode and is omitted;
    # tokenizer + CrossEntropyLoss (labels path) are out of kernel scope.
    return probs[:B, :CLASS_NUM]


def ref_forward(input_ids, params):
    """Pure-JAX f32 reference mirroring the PyTorch forward (NCHW conv)."""
    emb = jnp.take(params['embed'], input_ids, axis=0)                # (B, L, E)
    x4 = emb[:, None, :, :]                                           # (B, 1, L, E)
    feats = []
    for f in KERNEL_SIZES:
        w = params[f'conv_w{f}']                                      # (Co, 1, f, E)
        b = params[f'conv_b{f}']
        conv = lax.conv_general_dilated(
            x4, w, window_strides=(1, 1), padding=((PAD, PAD), (0, 0)),
            dimension_numbers=('NCHW', 'OIHW', 'NCHW'))               # (B, Co, T, 1)
        conv = jnp.maximum(conv + b[None, :, None, None], 0.0)[..., 0]
        feats.append(jnp.max(conv, axis=-1))                          # (B, Co)
    feat = jnp.concatenate(feats, axis=1)                             # (B, 48)
    logits = feat @ params['fc_w'].T + params['fc_b']                 # (B, 3)
    return jax.nn.softmax(logits, axis=-1)


def make_params(key, vocab_size):
    ks = jax.random.split(key, 9)
    params = {
        'embed': 0.02 * jax.random.normal(ks[0], (vocab_size, EMBED_DIM), jnp.float32),
        'fc_w': 0.1 * jax.random.normal(ks[1], (CLASS_NUM, KERNEL_NUM * len(KERNEL_SIZES)),
                                        jnp.float32),
        'fc_b': 0.1 * jax.random.normal(ks[2], (CLASS_NUM,), jnp.float32),
    }
    for j, f in enumerate(KERNEL_SIZES):
        params[f'conv_w{f}'] = 0.05 * jax.random.normal(
            ks[3 + 2 * j], (KERNEL_NUM, 1, f, EMBED_DIM), jnp.float32)
        params[f'conv_b{f}'] = 0.05 * jax.random.normal(
            ks[4 + 2 * j], (KERNEL_NUM,), jnp.float32)
    return params


if __name__ == "__main__":
    key = jax.random.PRNGKey(0)
    k_param, k_ids = jax.random.split(key)

    VOCAB = 50
    B, L = 64, 10                    # auto-picks TB=32 -> 2 parallel grid steps
    params = make_params(k_param, VOCAB)
    input_ids = jax.random.randint(k_ids, (B, L), 0, VOCAB, dtype=jnp.int32)

    probs = jax.block_until_ready(jax.jit(textcnn_forward)(input_ids, params))
    probs_ref = jax.block_until_ready(ref_forward(input_ids, params))

    assert probs.shape == (B, CLASS_NUM)
    assert jnp.allclose(jnp.sum(probs, axis=-1), 1.0, atol=1e-5)
    # bf16 MXU inputs vs. a pure-f32 reference -> relaxed tolerance (intentional).
    assert jnp.allclose(probs, probs_ref, atol=2e-2, rtol=0), (
        jnp.max(jnp.abs(probs - probs_ref)))
    print("KERNEL_OK")
</pallas_src>

<mosaic_0001>
module attributes {stable_mosaic.version = 11 : i64} {
  func.func @textcnn_kernel(%arg0: i32, %arg1: memref<32x16x256xbf16, #tpu.memory_space<vmem>>, %arg2: memref<256x384xbf16, #tpu.memory_space<vmem>>, %arg3: memref<1x128xf32, #tpu.memory_space<vmem>>, %arg4: memref<1x128xi32, #tpu.memory_space<vmem>>, %arg5: memref<128x128xbf16, #tpu.memory_space<vmem>>, %arg6: memref<1x128xf32, #tpu.memory_space<vmem>>, %arg7: memref<32x128xf32, #tpu.memory_space<vmem>>) attributes {dimension_semantics = [#tpu.dimension_semantics<parallel>], iteration_bounds = array<i64: 2>, scalar_prefetch = 0 : i64, scratch_operands = 0 : i64, tpu.core_type = #tpu.core_type<tc>, window_params = [{transform_indices = @transform_0, window_bounds = array<i64: 32, 16, 256>}, {pipeline_mode = #tpu.pipeline_mode<synchronous>, transform_indices = @transform_1, window_bounds = array<i64: 256, 384>}, {pipeline_mode = #tpu.pipeline_mode<synchronous>, transform_indices = @transform_2, window_bounds = array<i64: 1, 128>}, {pipeline_mode = #tpu.pipeline_mode<synchronous>, transform_indices = @transform_3, window_bounds = array<i64: 1, 128>}, {pipeline_mode = #tpu.pipeline_mode<synchronous>, transform_indices = @transform_4, window_bounds = array<i64: 128, 128>}, {pipeline_mode = #tpu.pipeline_mode<synchronous>, transform_indices = @transform_5, window_bounds = array<i64: 1, 128>}, {transform_indices = @transform_6, window_bounds = array<i64: 32, 128>}]} {
    %c0 = arith.constant 0 : index
    %c0_0 = arith.constant 0 : index
    %c0_1 = arith.constant 0 : index
    %0 = vector.load %arg1[%c0, %c0_0, %c0_1] : memref<32x16x256xbf16, #tpu.memory_space<vmem>>, vector<32x16x256xbf16>
    %1 = vector.shape_cast %0 : vector<32x16x256xbf16> to vector<512x256xbf16>
    %c0_2 = arith.constant 0 : index
    %c0_3 = arith.constant 0 : index
    %2 = vector.load %arg2[%c0_2, %c0_3] : memref<256x384xbf16, #tpu.memory_space<vmem>>, vector<256x384xbf16>
    %cst = arith.constant dense<0.000000e+00> : vector<512x384xf32>
    %3 = tpu.matmul %1, %2, %cst {dimension_numbers = #tpu.dot_dimension_numbers<[1], [0], [0], [1], [0, 0, 1, 1], [], []>} : vector<512x256xbf16>, vector<256x384xbf16>, vector<512x384xf32> -> vector<512x384xf32>
    %4 = vector.shape_cast %3 : vector<512x384xf32> to vector<32x16x384xf32>
    %5 = vector.extract_strided_slice %4 {offsets = [0, 0, 0], sizes = [32, 16, 128], strides = [1, 1, 1]} : vector<32x16x384xf32> to vector<32x16x128xf32>
    %6 = vector.extract_strided_slice %4 {offsets = [0, 0, 128], sizes = [32, 16, 128], strides = [1, 1, 1]} : vector<32x16x384xf32> to vector<32x16x128xf32>
    %7 = vector.extract_strided_slice %4 {offsets = [0, 0, 256], sizes = [32, 16, 128], strides = [1, 1, 1]} : vector<32x16x384xf32> to vector<32x16x128xf32>
    %c64_i32 = arith.constant 64 : i32
    %8 = tpu.dynamic_rotate %5 by %c64_i32 dim 2 : vector<32x16x128xf32>, i32 -> vector<32x16x128xf32>
    %c64_i32_4 = arith.constant 64 : i32
    %9 = tpu.dynamic_rotate %6 by %c64_i32_4 dim 2 : vector<32x16x128xf32>, i32 -> vector<32x16x128xf32>
    %10 = vector.extract_strided_slice %5 {offsets = [0, 0, 0], sizes = [32, 12, 128], strides = [1, 1, 1]} : vector<32x16x128xf32> to vector<32x12x128xf32>
    %11 = vector.extract_strided_slice %8 {offsets = [0, 1, 0], sizes = [32, 12, 128], strides = [1, 1, 1]} : vector<32x16x128xf32> to vector<32x12x128xf32>
    %12 = arith.addf %10, %11 : vector<32x12x128xf32>
    %13 = vector.extract_strided_slice %6 {offsets = [0, 2, 0], sizes = [32, 12, 128], strides = [1, 1, 1]} : vector<32x16x128xf32> to vector<32x12x128xf32>
    %14 = arith.addf %12, %13 : vector<32x12x128xf32>
    %15 = vector.extract_strided_slice %9 {offsets = [0, 3, 0], sizes = [32, 12, 128], strides = [1, 1, 1]} : vector<32x16x128xf32> to vector<32x12x128xf32>
    %16 = arith.addf %14, %15 : vector<32x12x128xf32>
    %17 = vector.extract_strided_slice %7 {offsets = [0, 4, 0], sizes = [32, 12, 128], strides = [1, 1, 1]} : vector<32x16x128xf32> to vector<32x12x128xf32>
    %18 = arith.addf %16, %17 : vector<32x12x128xf32>
    %c0_5 = arith.constant 0 : index
    %c0_6 = arith.constant 0 : index
    %19 = vector.load %arg3[%c0_5, %c0_6] : memref<1x128xf32, #tpu.memory_space<vmem>>, vector<1x128xf32>
    %20 = vector.shape_cast %19 : vector<1x128xf32> to vector<1x1x128xf32>
    %21 = vector.broadcast %20 : vector<1x1x128xf32> to vector<32x12x128xf32>
    %22 = arith.addf %18, %21 : vector<32x12x128xf32>
    %cst_7 = arith.constant 0.000000e+00 : f32
    %23 = vector.broadcast %cst_7 : f32 to vector<32x12x128xf32>
    %24 = arith.maximumf %22, %23 : vector<32x12x128xf32>
    %25 = tpu.iota {dimensions = array<i32: 0>} : vector<12x128xi32>
    %c0_8 = arith.constant 0 : index
    %c0_9 = arith.constant 0 : index
    %26 = vector.load %arg4[%c0_8, %c0_9] : memref<1x128xi32, #tpu.memory_space<vmem>>, vector<1x128xi32>
    %27 = vector.broadcast %26 : vector<1x128xi32> to vector<12x128xi32>
    %28 = arith.cmpi slt, %25, %27 : vector<12x128xi32>
    %29 = vector.shape_cast %28 : vector<12x128xi1> to vector<1x12x128xi1>
    %cst_10 = arith.constant 0.000000e+00 : f32
    %30 = vector.shape_cast %29 : vector<1x12x128xi1> to vector<1x12x128xi1>
    %31 = vector.broadcast %30 : vector<1x12x128xi1> to vector<32x12x128xi1>
    %32 = vector.broadcast %cst_10 : f32 to vector<32x12x128xf32>
    %33 = arith.select %31, %24, %32 : vector<32x12x128xi1>, vector<32x12x128xf32>
    %cst_11 = arith.constant dense<0xFF800000> : vector<32x128xf32>
    %34 = vector.multi_reduction <maximumf>, %33, %cst_11 [1] : vector<32x12x128xf32> to vector<32x128xf32>
    %35 = arith.truncf %34 : vector<32x128xf32> to vector<32x128xbf16>
    %c0_12 = arith.constant 0 : index
    %c0_13 = arith.constant 0 : index
    %36 = vector.load %arg5[%c0_12, %c0_13] : memref<128x128xbf16, #tpu.memory_space<vmem>>, vector<128x128xbf16>
    %cst_14 = arith.constant dense<0.000000e+00> : vector<32x128xf32>
    %37 = tpu.matmul %35, %36, %cst_14 {dimension_numbers = #tpu.dot_dimension_numbers<[1], [0], [0], [1], [0, 0, 1, 1], [], []>} : vector<32x128xbf16>, vector<128x128xbf16>, vector<32x128xf32> -> vector<32x128xf32>
    %c0_15 = arith.constant 0 : index
    %c0_16 = arith.constant 0 : index
    %38 = vector.load %arg6[%c0_15, %c0_16] : memref<1x128xf32, #tpu.memory_space<vmem>>, vector<1x128xf32>
    %39 = vector.broadcast %38 : vector<1x128xf32> to vector<32x128xf32>
    %40 = arith.addf %37, %39 : vector<32x128xf32>
    %cst_17 = arith.constant dense<0xFF800000> : vector<32xf32>
    %41 = vector.multi_reduction <maximumf>, %40, %cst_17 [1] : vector<32x128xf32> to vector<32xf32>
    %42 = vector.shape_cast %41 : vector<32xf32> to vector<32x1xf32>
    %43 = vector.broadcast %42 : vector<32x1xf32> to vector<32x128xf32>
    %44 = arith.subf %40, %43 : vector<32x128xf32>
    %45 = math.exp %44 : vector<32x128xf32>
    %cst_18 = arith.constant dense<0.000000e+00> : vector<32xf32>
    %46 = vector.multi_reduction <add>, %45, %cst_18 [1] : vector<32x128xf32> to vector<32xf32>
    %47 = vector.shape_cast %46 : vector<32xf32> to vector<32x1xf32>
    %48 = vector.broadcast %47 : vector<32x1xf32> to vector<32x128xf32>
    %49 = arith.divf %45, %48 : vector<32x128xf32>
    %c0_19 = arith.constant 0 : index
    %c0_20 = arith.constant 0 : index
    %50 = vector.load %arg7[%c0_19, %c0_20] : memref<32x128xf32, #tpu.memory_space<vmem>>, vector<32x128xf32>
    tpu.vector_store %arg7[%c0_19, %c0_20], %49 {strides = array<i32>} : memref<32x128xf32, #tpu.memory_space<vmem>>, vector<32x128xf32>,
    return
  }
  func.func @transform_0(%arg0: i32) -> (i32, i32, i32) {
    %c0_i32 = arith.constant 0 : i32
    %c0_i32_0 = arith.constant 0 : i32
    %c0_i32_1 = arith.constant 0 : i32
    return %arg0, %c0_i32, %c0_i32_0 : i32, i32, i32
  }
  func.func @transform_1(%arg0: i32) -> (i32, i32) {
    %c0_i32 = arith.constant 0 : i32
    %c0_i32_0 = arith.constant 0 : i32
    %c0_i32_1 = arith.constant 0 : i32
    return %c0_i32, %c0_i32_0 : i32, i32
  }
  func.func @transform_2(%arg0: i32) -> (i32, i32) {
    %c0_i32 = arith.constant 0 : i32
    %c0_i32_0 = arith.constant 0 : i32
    %c0_i32_1 = arith.constant 0 : i32
    return %c0_i32, %c0_i32_0 : i32, i32
  }
  func.func @transform_3(%arg0: i32) -> (i32, i32) {
    %c0_i32 = arith.constant 0 : i32
    %c0_i32_0 = arith.constant 0 : i32
    %c0_i32_1 = arith.constant 0 : i32
    return %c0_i32, %c0_i32_0 : i32, i32
  }
  func.func @transform_4(%arg0: i32) -> (i32, i32) {
    %c0_i32 = arith.constant 0 : i32
    %c0_i32_0 = arith.constant 0 : i32
    %c0_i32_1 = arith.constant 0 : i32
    return %c0_i32, %c0_i32_0 : i32, i32
  }
  func.func @transform_5(%arg0: i32) -> (i32, i32) {
    %c0_i32 = arith.constant 0 : i32
    %c0_i32_0 = arith.constant 0 : i32
    %c0_i32_1 = arith.constant 0 : i32
    return %c0_i32, %c0_i32_0 : i32, i32
  }
  func.func @transform_6(%arg0: i32) -> (i32, i32) {
    %c0_i32 = arith.constant 0 : i32
    %c0_i32_0 = arith.constant 0 : i32
    return %arg0, %c0_i32 : i32, i32
  }
}

</mosaic_0001>

<llo_original>
// kernel: textcnn_forward.1
$region0: #{textcnn_forward.1}
  #allocation0 [shape = 'u32[]', space=smem, size = 0x4, offset = 0x4, fixed_abs, tag = 'smem constant byte address 0x4 - core index']
  #allocation1 [shape = 'u32[72,128]{1,0:T(1,128)}', space=vmem, size = 0x9000, scoped, tag = 'internal scratch']
  %s0 = inlined_call_operand.vmem [shape: bf16[64,16,256], index: 0, kind: input, shape index: {}]
  %s1 = inlined_call_operand.vmem [shape: bf16[256,384], index: 1, kind: input, shape index: {}]
  %s2 = inlined_call_operand.vmem [shape: f32[1,128], index: 2, kind: input, shape index: {}]
  %s3 = inlined_call_operand.vmem [shape: s32[1,128], index: 3, kind: input, shape index: {}]
  %s4 = inlined_call_operand.vmem [shape: bf16[128,128], index: 4, kind: input, shape index: {}]
  %s5 = inlined_call_operand.vmem [shape: f32[1,128], index: 5, kind: input, shape index: {}]
  %s6 = inlined_call_operand.vmem [shape: f32[64,128], index: 6, kind: output, shape index: {}]
  %s7 = sld [smem:[#allocation0]]
  $region57: #{textcnn_forward.1} parent=0
    _
  %s9 = ssub.s32 1, %s7
  %s10 = scalar_select 0, %s9, %s7
  loop: start=0, step=1, limit=4
  $region2: #{textcnn_forward.1} parent=0 // loop_pre_header
    _
  $region3: #{textcnn_forward.1} parent=0 // loop_header
    %s12 = sphi 0, %s16
    %p13 = scmp.ge.s32.totalorder %s12, 4
    %s22 = sphi 0, %s24
    %s25 = sphi 0, %s22
    %s26 = sphi 0, %s25
    %s42 = sphi 0, %s26
    %s46 = sphi 0, %s46
    %s48 = sphi 0, %s46
    %s49 = sphi 0, %s48
    %s63 = sphi 0, %s49
    %s67 = sphi 0, %s67
    %s69 = sphi 0, %s67
    %s70 = sphi 0, %s69
    %s84 = sphi 0, %s70
    %s88 = sphi 0, %s88
    %s90 = sphi 0, %s88
    %s91 = sphi 0, %s90
    %s105 = sphi 0, %s91
    %s109 = sphi 0, %s109
    %s111 = sphi 0, %s109
    %s112 = sphi 0, %s111
    %s126 = sphi 0, %s112
    %s130 = sphi 0, %s130
    %s132 = sphi 0, %s130
    %s133 = sphi 0, %s132
    %s147 = sphi 0, %s133
    %s153 = sphi 0, %s155
    %s156 = sphi 0, %s153
    %s157 = sphi 0, %s156
    %s173 = sphi 0, %s157
  $region4: #{textcnn_forward.1} parent=0 // loop_header_branch
    %15 = sbr.rel (%p13) target = $region8
  $region5: #{textcnn_forward.1} parent=0 // loop_body
    %s17 = ssub.s32 %s12, 1
    %s18 = ssub.s32 %s12, 2
    %s19 = sadd.s32 %s12, 1
    %s20 = ssub.s32 %s12, %s19
    %p21 = scmp.eq.s32.totalorder %s20, 0
    %s23 = sadd.s32 %s22, 1
    %s24 = scalar_select %p21, %s22, %s23
    %p27 = pneg %p21
    %p28 = scmp.eq.s32.totalorder %s12, 1
    %p29 = por %p27, %p28
    %p30 = scmp.ne.s32.totalorder %s22, %s25
    %p31 = scmp.eq.s32.totalorder %s12, 0
    %p32 = por %p30, %p31
    %p33 = scmp.ne.s32.totalorder %s22, %s25
    %p34 = scmp.eq.s32.totalorder %s17, 1
    %p35 = por %p33, %p34
    %p36 = scmp.ne.s32.totalorder %s25, %s26
    %p37 = scmp.eq.s32.totalorder %s17, 0
    %p38 = por %p36, %p37
    %p39 = scmp.ne.s32.totalorder %s25, %s26
    %p40 = scmp.eq.s32.totalorder %s18, 1
    %p41 = por %p39, %p40
    %p43 = scmp.ne.s32.totalorder %s26, %s42
    %p44 = scmp.eq.s32.totalorder %s18, 0
    %p45 = por %p43, %p44
    %s47 = sadd.s32 %s46, 1
    %p50 = scmp.eq.s32.totalorder %s12, 1
    %p51 = scmp.ne.s32.totalorder %s46, %s48
    %p52 = scmp.eq.s32.totalorder %s12, 0
    %p53 = por %p51, %p52
    %p54 = scmp.ne.s32.totalorder %s46, %s48
    %p55 = scmp.eq.s32.totalorder %s17, 1
    %p56 = por %p54, %p55
    %p57 = scmp.ne.s32.totalorder %s48, %s49
    %p58 = scmp.eq.s32.totalorder %s17, 0
    %p59 = por %p57, %p58
    %p60 = scmp.ne.s32.totalorder %s48, %s49
    %p61 = scmp.eq.s32.totalorder %s18, 1
    %p62 = por %p60, %p61
    %p64 = scmp.ne.s32.totalorder %s49, %s63
    %p65 = scmp.eq.s32.totalorder %s18, 0
    %p66 = por %p64, %p65
    %s68 = sadd.s32 %s67, 1
    %p71 = scmp.eq.s32.totalorder %s12, 1
    %p72 = scmp.ne.s32.totalorder %s67, %s69
    %p73 = scmp.eq.s32.totalorder %s12, 0
    %p74 = por %p72, %p73
    %p75 = scmp.ne.s32.totalorder %s67, %s69
    %p76 = scmp.eq.s32.totalorder %s17, 1
    %p77 = por %p75, %p76
    %p78 = scmp.ne.s32.totalorder %s69, %s70
    %p79 = scmp.eq.s32.totalorder %s17, 0
    %p80 = por %p78, %p79
    %p81 = scmp.ne.s32.totalorder %s69, %s70
    %p82 = scmp.eq.s32.totalorder %s18, 1
    %p83 = por %p81, %p82
    %p85 = scmp.ne.s32.totalorder %s70, %s84
    %p86 = scmp.eq.s32.totalorder %s18, 0
    %p87 = por %p85, %p86
    %s89 = sadd.s32 %s88, 1
    %p92 = scmp.eq.s32.totalorder %s12, 1
    %p93 = scmp.ne.s32.totalorder %s88, %s90
    %p94 = scmp.eq.s32.totalorder %s12, 0
    %p95 = por %p93, %p94
    %p96 = scmp.ne.s32.totalorder %s88, %s90
    %p97 = scmp.eq.s32.totalorder %s17, 1
    %p98 = por %p96, %p97
    %p99 = scmp.ne.s32.totalorder %s90, %s91
    %p100 = scmp.eq.s32.totalorder %s17, 0
    %p101 = por %p99, %p100
    %p102 = scmp.ne.s32.totalorder %s90, %s91
    %p103 = scmp.eq.s32.totalorder %s18, 1
    %p104 = por %p102, %p103
    %p106 = scmp.ne.s32.totalorder %s91, %s105
    %p107 = scmp.eq.s32.totalorder %s18, 0
    %p108 = por %p106, %p107
    %s110 = sadd.s32 %s109, 1
    %p113 = scmp.eq.s32.totalorder %s12, 1
    %p114 = scmp.ne.s32.totalorder %s109, %s111
    %p115 = scmp.eq.s32.totalorder %s12, 0
    %p116 = por %p114, %p115
    %p117 = scmp.ne.s32.totalorder %s109, %s111
    %p118 = scmp.eq.s32.totalorder %s17, 1
    %p119 = por %p117, %p118
    %p120 = scmp.ne.s32.totalorder %s111, %s112
    %p121 = scmp.eq.s32.totalorder %s17, 0
    %p122 = por %p120, %p121
    %p123 = scmp.ne.s32.totalorder %s111, %s112
    %p124 = scmp.eq.s32.totalorder %s18, 1
    %p125 = por %p123, %p124
    %p127 = scmp.ne.s32.totalorder %s112, %s126
    %p128 = scmp.eq.s32.totalorder %s18, 0
    %p129 = por %p127, %p128
    %s131 = sadd.s32 %s130, 1
    %p134 = scmp.eq.s32.totalorder %s12, 1
    %p135 = scmp.ne.s32.totalorder %s130, %s132
    %p136 = scmp.eq.s32.totalorder %s12, 0
    %p137 = por %p135, %p136
    %p138 = scmp.ne.s32.totalorder %s130, %s132
    %p139 = scmp.eq.s32.totalorder %s17, 1
    %p140 = por %p138, %p139
    %p141 = scmp.ne.s32.totalorder %s132, %s133
    %p142 = scmp.eq.s32.totalorder %s17, 0
    %p143 = por %p141, %p142
    %p144 = scmp.ne.s32.totalorder %s132, %s133
    %p145 = scmp.eq.s32.totalorder %s18, 1
    %p146 = por %p144, %p145
    %p148 = scmp.ne.s32.totalorder %s133, %s147
    %p149 = scmp.eq.s32.totalorder %s18, 0
    %p150 = por %p148, %p149
    %s151 = ssub.s32 %s12, %s19
    %p152 = scmp.eq.s32.totalorder %s151, 0
    %s154 = sadd.s32 %s153, 1
    %s155 = scalar_select %p152, %s153, %s154
    %p158 = pneg %p152
    %p159 = scmp.eq.s32.totalorder %s12, 1
    %p160 = por %p158, %p159
    %p161 = scmp.ne.s32.totalorder %s153, %s156
    %p162 = scmp.eq.s32.totalorder %s12, 0
    %p163 = por %p161, %p162
    %p164 = scmp.ne.s32.totalorder %s153, %s156
    %p165 = scmp.eq.s32.totalorder %s17, 1
    %p166 = por %p164, %p165
    %p167 = scmp.ne.s32.totalorder %s156, %s157
    %p168 = scmp.eq.s32.totalorder %s17, 0
    %p169 = por %p167, %p168
    %p170 = scmp.ne.s32.totalorder %s156, %s157
    %p171 = scmp.eq.s32.totalorder %s18, 1
    %p172 = por %p170, %p171
    %p174 = scmp.ne.s32.totalorder %s157, %s173
    %p175 = scmp.eq.s32.totalorder %s18, 0
    %p176 = por %p174, %p175
    %p177 = scmp.le.s32.totalorder 1, %s12
    %p178 = scmp.lt.s32.totalorder %s12, 3
    %p179 = pnand %p177, %p178
    %p180 = pneg %p179
    // Predicated region
    $region9: #{textcnn_forward.1} parent=5 // pred_check
      _
    $region10: #{textcnn_forward.1} parent=5 // pred_check_branch
      %182 = sbr.rel (%p179) target = $region12
    $region11: #{textcnn_forward.1} parent=5 // pred_region
      %s183 = ssub.s32 %s12, 1
      // Predicated region
      $region13: #{textcnn_forward.1} parent=11 // pred_check
        %p184 = pneg %p59
      $region14: #{textcnn_forward.1} parent=11 // pred_check_branch
        %186 = sbr.rel (%p184) target = $region16
      $region15: #{textcnn_forward.1} parent=11 // pred_region
        _
      $region16: #{textcnn_forward.1} parent=11 // pred_fallthru
        _
      // Predicated region
      $region17: #{textcnn_forward.1} parent=11 // pred_check
        %p187 = pneg %p80
      $region18: #{textcnn_forward.1} parent=11 // pred_check_branch
        %189 = sbr.rel (%p187) target = $region20
      $region19: #{textcnn_forward.1} parent=11 // pred_region
        _
      $region20: #{textcnn_forward.1} parent=11 // pred_fallthru
        _
      // Predicated region
      $region21: #{textcnn_forward.1} parent=11 // pred_check
        %p190 = pneg %p101
      $region22: #{textcnn_forward.1} parent=11 // pred_check_branch
        %192 = sbr.rel (%p190) target = $region24
      $region23: #{textcnn_forward.1} parent=11 // pred_region
        _
      $region24: #{textcnn_forward.1} parent=11 // pred_fallthru
        _
      // Predicated region
      $region25: #{textcnn_forward.1} parent=11 // pred_check
        %p193 = pneg %p122
      $region26: #{textcnn_forward.1} parent=11 // pred_check_branch
        %195 = sbr.rel (%p193) target = $region28
      $region27: #{textcnn_forward.1} parent=11 // pred_region
        _
      $region28: #{textcnn_forward.1} parent=11 // pred_fallthru
        _
      // Predicated region
      $region29: #{textcnn_forward.1} parent=11 // pred_check
        %p196 = pneg %p143
      $region30: #{textcnn_forward.1} parent=11 // pred_check_branch
        %198 = sbr.rel (%p196) target = $region32
      $region31: #{textcnn_forward.1} parent=11 // pred_region
        _
      $region32: #{textcnn_forward.1} parent=11 // pred_fallthru
        _
    $region12: #{textcnn_forward.1} parent=5 // pred_fallthru
      _
    %p199 = scmp.lt.s32.totalorder %s12, 2
    // Predicated region
    $region33: #{textcnn_forward.1} parent=5 // pred_check
      %p200 = pneg %p199
    $region34: #{textcnn_forward.1} parent=5 // pred_check_branch
      %202 = sbr.rel (%p200) target = $region36
    $region35: #{textcnn_forward.1} parent=5 // pred_region
      // Predicated region
      $region37: #{textcnn_forward.1} parent=35 // pred_check
        %p203 = pneg %p32
      $region38: #{textcnn_forward.1} parent=35 // pred_check_branch
        %205 = sbr.rel (%p203) target = $region40
      $region39: #{textcnn_forward.1} parent=35 // pred_region
        %s206 = smul.u32 32, %s12
        %p207 = scmp.lt.s32.totalorder %s206, 63
        %s208 = scalar_select %p207, %s206, 63
        %s209 = smul.addr %s208, 4
        %s210 = smul.addr %s209, 4
        %s211 = scalar_lea.vmem %s0, %s210
        %s212 = smul.u32 32, %s12
      $region40: #{textcnn_forward.1} parent=35 // pred_fallthru
        _
    $region36: #{textcnn_forward.1} parent=5 // pred_fallthru
      _
    %p213 = scmp.le.s32.totalorder 1, %s12
    %p214 = scmp.lt.s32.totalorder %s12, 3
    %p215 = pnand %p213, %p214
    %p216 = pneg %p215
    // Predicated region
    $region41: #{textcnn_forward.1} parent=5 // pred_check
      _
    $region42: #{textcnn_forward.1} parent=5 // pred_check_branch
      %218 = sbr.rel (%p215) target = $region44
    $region43: #{textcnn_forward.1} parent=5 // pred_region
      %s219 = ssub.s32 %s12, 1
      %s220 = smul.u32 32, %s17
      %p221 = scmp.lt.s32.totalorder %s220, 63
      %s222 = scalar_select %p221, %s220, 63
      %s223 = smul.addr %s222, 4
      %s224 = smul.addr %s223, 4
      %s225 = scalar_lea.vmem %s0, %s224
      %p226 = pneg %p38
      %p227 = pneg %p35
      %p228 = pneg %p59
      %p229 = pneg %p56
      %p230 = pneg %p80
      %p231 = pneg %p77
      %p232 = pneg %p101
      %p233 = pneg %p98
      %p234 = pneg %p122
      %p235 = pneg %p119
      %p236 = pneg %p143
      %p237 = pneg %p140
      %p238 = pneg %p169
      %p239 = pneg %p166
      %s240 = smul.u32 4, %s17
      %p241 = scmp.lt.s32.totalorder %s240, 7
      %s242 = scalar_select %p241, %s240, 7
      %s243 = smul.addr %s242, 8
      %s244 = scalar_lea.vmem %s6, %s243
      %s245 = smul.u32 32, %s17
      %p246 = scmp.lt.s32.totalorder %s245, 63
      %s247 = scalar_select %p246, %s245, 63
      %s248 = smul.addr %s247, 4
      %s249 = smul.addr %s248, 4
      %s250 = scalar_lea.vmem %s0, %s249
      %s251 = smul.u32 32, %s17
      %s252 = smul.u32 4, %s17
      %p253 = scmp.lt.s32.totalorder %s252, 7
      %s254 = scalar_select %p253, %s252, 7
      %s255 = smul.addr %s254, 8
      %s256 = scalar_lea.vmem %s6, %s255
      %s257 = smul.u32 4, %s17
      %v258 = vld [vmem:[%s250] sm:$0xff]
      %v259 = vld [vmem:[%s250 + $0x8] sm:$0xff]
      %v260 = vld [vmem:[%s250 + $0x10] sm:$0xff]
      %v261 = vld [vmem:[%s250 + $0x18] sm:$0xff]
      %v262 = vld [vmem:[%s250 + $0x20] sm:$0xff]
      %v263 = vld [vmem:[%s250 + $0x28] sm:$0xff]
      %v264 = vld [vmem:[%s250 + $0x30] sm:$0xff]
      %v265 = vld [vmem:[%s250 + $0x38] sm:$0xff]
      %v266 = vld [vmem:[%s250 + $0x40] sm:$0xff]
      %v267 = vld [vmem:[%s250 + $0x48] sm:$0xff]
      %v268 = vld [vmem:[%s250 + $0x50] sm:$0xff]
      %v269 = vld [vmem:[%s250 + $0x58] sm:$0xff]
      %v270 = vld [vmem:[%s250 + $0x60] sm:$0xff]
      %v271 = vld [vmem:[%s250 + $0x68] sm:$0xff]
      %v272 = vld [vmem:[%s250 + $0x70] sm:$0xff]
      %v273 = vld [vmem:[%s250 + $0x78] sm:$0xff]
      %v274 = vld [vmem:[%s250 + $0x80] sm:$0xff]
      %v275 = vld [vmem:[%s250 + $0x88] sm:$0xff]
      %v276 = vld [vmem:[%s250 + $0x90] sm:$0xff]
      %v277 = vld [vmem:[%s250 + $0x98] sm:$0xff]
      %v278 = vld [vmem:[%s250 + $0xa0] sm:$0xff]
      %v279 = vld [vmem:[%s250 + $0xa8] sm:$0xff]
      %v280 = vld [vmem:[%s250 + $0xb0] sm:$0xff]
      %v281 = vld [vmem:[%s250 + $0xb8] sm:$0xff]
      %v282 = vld [vmem:[%s250 + $0xc0] sm:$0xff]
      %v283 = vld [vmem:[%s250 + $0xc8] sm:$0xff]
      %v284 = vld [vmem:[%s250 + $0xd0] sm:$0xff]
      %v285 = vld [vmem:[%s250 + $0xd8] sm:$0xff]
      %v286 = vld [vmem:[%s250 + $0xe0] sm:$0xff]
      %v287 = vld [vmem:[%s250 + $0xe8] sm:$0xff]
      %v288 = vld [vmem:[%s250 + $0xf0] sm:$0xff]
      %v289 = vld [vmem:[%s250 + $0xf8] sm:$0xff]
      %v290 = vld [vmem:[%s250 + $0x100] sm:$0xff]
      %v291 = vld [vmem:[%s250 + $0x108] sm:$0xff]
      %v292 = vld [vmem:[%s250 + $0x110] sm:$0xff]
      %v293 = vld [vmem:[%s250 + $0x118] sm:$0xff]
      %v294 = vld [vmem:[%s250 + $0x120] sm:$0xff]
      %v295 = vld [vmem:[%s250 + $0x128] sm:$0xff]
      %v296 = vld [vmem:[%s250 + $0x130] sm:$0xff]
      %v297 = vld [vmem:[%s250 + $0x138] sm:$0xff]
      %v298 = vld [vmem:[%s250 + $0x140] sm:$0xff]
      %v299 = vld [vmem:[%s250 + $0x148] sm:$0xff]
      %v300 = vld [vmem:[%s250 + $0x150] sm:$0xff]
      %v301 = vld [vmem:[%s250 + $0x158] sm:$0xff]
      %v302 = vld [vmem:[%s250 + $0x160] sm:$0xff]
      %v303 = vld [vmem:[%s250 + $0x168] sm:$0xff]
      %v304 = vld [vmem:[%s250 + $0x170] sm:$0xff]
      %v305 = vld [vmem:[%s250 + $0x178] sm:$0xff]
      %v306 = vld [vmem:[%s250 + $0x180] sm:$0xff]
      %v307 = vld [vmem:[%s250 + $0x188] sm:$0xff]
      %v308 = vld [vmem:[%s250 + $0x190] sm:$0xff]
      %v309 = vld [vmem:[%s250 + $0x198] sm:$0xff]
      %v310 = vld [vmem:[%s250 + $0x1a0] sm:$0xff]
      %v311 = vld [vmem:[%s250 + $0x1a8] sm:$0xff]
      %v312 = vld [vmem:[%s250 + $0x1b0] sm:$0xff]
      %v313 = vld [vmem:[%s250 + $0x1b8] sm:$0xff]
      %v314 = vld [vmem:[%s250 + $0x1c0] sm:$0xff]
      %v315 = vld [vmem:[%s250 + $0x1c8] sm:$0xff]
      %v316 = vld [vmem:[%s250 + $0x1d0] sm:$0xff]
      %v317 = vld [vmem:[%s250 + $0x1d8] sm:$0xff]
      %v318 = vld [vmem:[%s250 + $0x1e0] sm:$0xff]
      %v319 = vld [vmem:[%s250 + $0x1e8] sm:$0xff]
      %v320 = vld [vmem:[%s250 + $0x1f0] sm:$0xff]
      %v321 = vld [vmem:[%s250 + $0x1f8] sm:$0xff]
      %v322 = vld [vmem:[%s1] sm:$0xff]
      %v323 = vld [vmem:[%s1 + $0x8] sm:$0xf]
      %v324 = vld [vmem:[%s1 + $0xc] sm:$0xff]
      %v325 = vld [vmem:[%s1 + $0x14] sm:$0xf]
      %v326 = vld [vmem:[%s1 + $0x18] sm:$0xff]
      %v327 = vld [vmem:[%s1 + $0x20] sm:$0xf]
      %v328 = vld [vmem:[%s1 + $0x24] sm:$0xff]
      %v329 = vld [vmem:[%s1 + $0x2c] sm:$0xf]
      %v330 = vld [vmem:[%s1 + $0x30] sm:$0xff]
      %v331 = vld [vmem:[%s1 + $0x38] sm:$0xf]
      %v332 = vld [vmem:[%s1 + $0x3c] sm:$0xff]
      %v333 = vld [vmem:[%s1 + $0x44] sm:$0xf]
      %v334 = vld [vmem:[%s1 + $0x48] sm:$0xff]
      %v335 = vld [vmem:[%s1 + $0x50] sm:$0xf]
      %v336 = vld [vmem:[%s1 + $0x54] sm:$0xff]
      %v337 = vld [vmem:[%s1 + $0x5c] sm:$0xf]
      %v338 = vld [vmem:[%s1 + $0x60] sm:$0xff]
      %v339 = vld [vmem:[%s1 + $0x68] sm:$0xf]
      %v340 = vld [vmem:[%s1 + $0x6c] sm:$0xff]
      %v341 = vld [vmem:[%s1 + $0x74] sm:$0xf]
      %v342 = vld [vmem:[%s1 + $0x78] sm:$0xff]
      %v343 = vld [vmem:[%s1 + $0x80] sm:$0xf]
      %v344 = vld [vmem:[%s1 + $0x84] sm:$0xff]
      %v345 = vld [vmem:[%s1 + $0x8c] sm:$0xf]
      %v346 = vld [vmem:[%s1 + $0x90] sm:$0xff]
      %v347 = vld [vmem:[%s1 + $0x98] sm:$0xf]
      %v348 = vld [vmem:[%s1 + $0x9c] sm:$0xff]
      %v349 = vld [vmem:[%s1 + $0xa4] sm:$0xf]
      %v350 = vld [vmem:[%s1 + $0xa8] sm:$0xff]
      %v351 = vld [vmem:[%s1 + $0xb0] sm:$0xf]
      %v352 = vld [vmem:[%s1 + $0xb4] sm:$0xff]
      %v353 = vld [vmem:[%s1 + $0xbc] sm:$0xf]
      %v354 = vld [vmem:[%s1 + $0xc0] sm:$0xff]
      %v355 = vld [vmem:[%s1 + $0xc8] sm:$0xf]
      %v356 = vld [vmem:[%s1 + $0xcc] sm:$0xff]
      %v357 = vld [vmem:[%s1 + $0xd4] sm:$0xf]
      %v358 = vld [vmem:[%s1 + $0xd8] sm:$0xff]
      %v359 = vld [vmem:[%s1 + $0xe0] sm:$0xf]
      %v360 = vld [vmem:[%s1 + $0xe4] sm:$0xff]
      %v361 = vld [vmem:[%s1 + $0xec] sm:$0xf]
      %v362 = vld [vmem:[%s1 + $0xf0] sm:$0xff]
      %v363 = vld [vmem:[%s1 + $0xf8] sm:$0xf]
      %v364 = vld [vmem:[%s1 + $0xfc] sm:$0xff]
      %v365 = vld [vmem:[%s1 + $0x104] sm:$0xf]
      %v366 = vld [vmem:[%s1 + $0x108] sm:$0xff]
      %v367 = vld [vmem:[%s1 + $0x110] sm:$0xf]
      %v368 = vld [vmem:[%s1 + $0x114] sm:$0xff]
      %v369 = vld [vmem:[%s1 + $0x11c] sm:$0xf]
      %v370 = vld [vmem:[%s1 + $0x120] sm:$0xff]
      %v371 = vld [vmem:[%s1 + $0x128] sm:$0xf]
      %v372 = vld [vmem:[%s1 + $0x12c] sm:$0xff]
      %v373 = vld [vmem:[%s1 + $0x134] sm:$0xf]
      %v374 = vld [vmem:[%s1 + $0x138] sm:$0xff]
      %v375 = vld [vmem:[%s1 + $0x140] sm:$0xf]
      %v376 = vld [vmem:[%s1 + $0x144] sm:$0xff]
      %v377 = vld [vmem:[%s1 + $0x14c] sm:$0xf]
      %v378 = vld [vmem:[%s1 + $0x150] sm:$0xff]
      %v379 = vld [vmem:[%s1 + $0x158] sm:$0xf]
      %v380 = vld [vmem:[%s1 + $0x15c] sm:$0xff]
      %v381 = vld [vmem:[%s1 + $0x164] sm:$0xf]
      %v382 = vld [vmem:[%s1 + $0x168] sm:$0xff]
      %v383 = vld [vmem:[%s1 + $0x170] sm:$0xf]
      %v384 = vld [vmem:[%s1 + $0x174] sm:$0xff]
      %v385 = vld [vmem:[%s1 + $0x17c] sm:$0xf]
      %v450 = vunpack.c.l.b16 %v258
      %v451 = vunpack.c.h.b16 %v258
      %v452 = vunpack.c.l.b16 %v259
      %v453 = vunpack.c.h.b16 %v259
      %v454 = vunpack.c.l.b16 %v260
      %v455 = vunpack.c.h.b16 %v260
      %v456 = vunpack.c.l.b16 %v261
      %v457 = vunpack.c.h.b16 %v261
      %v458 = vunpack.c.l.b16 %v262
      %v459 = vunpack.c.h.b16 %v262
      %v460 = vunpack.c.l.b16 %v263
      %v461 = vunpack.c.h.b16 %v263
      %v462 = vunpack.c.l.b16 %v264
      %v463 = vunpack.c.h.b16 %v264
      %v464 = vunpack.c.l.b16 %v265
      %v465 = vunpack.c.h.b16 %v265
      %v466 = vunpack.c.l.b16 %v266
      %v467 = vunpack.c.h.b16 %v266
      %v468 = vunpack.c.l.b16 %v267
      %v469 = vunpack.c.h.b16 %v267
      %v470 = vunpack.c.l.b16 %v268
      %v471 = vunpack.c.h.b16 %v268
      %v472 = vunpack.c.l.b16 %v269
      %v473 = vunpack.c.h.b16 %v269
      %v474 = vunpack.c.l.b16 %v270
      %v475 = vunpack.c.h.b16 %v270
      %v476 = vunpack.c.l.b16 %v271
      %v477 = vunpack.c.h.b16 %v271
      %v478 = vunpack.c.l.b16 %v272
      %v479 = vunpack.c.h.b16 %v272
      %v480 = vunpack.c.l.b16 %v273
      %v481 = vunpack.c.h.b16 %v273
      %v482 = vunpack.c.l.b16 %v274
      %v483 = vunpack.c.h.b16 %v274
      %v484 = vunpack.c.l.b16 %v275
      %v485 = vunpack.c.h.b16 %v275
      %v486 = vunpack.c.l.b16 %v276
      %v487 = vunpack.c.h.b16 %v276
      %v488 = vunpack.c.l.b16 %v277
      %v489 = vunpack.c.h.b16 %v277
      %v490 = vunpack.c.l.b16 %v278
      %v491 = vunpack.c.h.b16 %v278
      %v492 = vunpack.c.l.b16 %v279
      %v493 = vunpack.c.h.b16 %v279
      %v494 = vunpack.c.l.b16 %v280
      %v495 = vunpack.c.h.b16 %v280
      %v496 = vunpack.c.l.b16 %v281
      %v497 = vunpack.c.h.b16 %v281
      %v498 = vunpack.c.l.b16 %v282
      %v499 = vunpack.c.h.b16 %v282
      %v500 = vunpack.c.l.b16 %v283
      %v501 = vunpack.c.h.b16 %v283
      %v502 = vunpack.c.l.b16 %v284
      %v503 = vunpack.c.h.b16 %v284
      %v504 = vunpack.c.l.b16 %v285
      %v505 = vunpack.c.h.b16 %v285
      %v506 = vunpack.c.l.b16 %v286
      %v507 = vunpack.c.h.b16 %v286
      %v508 = vunpack.c.l.b16 %v287
      %v509 = vunpack.c.h.b16 %v287
      %v510 = vunpack.c.l.b16 %v288
      %v511 = vunpack.c.h.b16 %v288
      %v512 = vunpack.c.l.b16 %v289
      %v513 = vunpack.c.h.b16 %v289
      %v514 = vunpack.c.l.b16 %v290
      %v515 = vunpack.c.h.b16 %v290
      %v516 = vunpack.c.l.b16 %v291
      %v517 = vunpack.c.h.b16 %v291
      %v518 = vunpack.c.l.b16 %v292
      %v519 = vunpack.c.h.b16 %v292
      %v520 = vunpack.c.l.b16 %v293
      %v521 = vunpack.c.h.b16 %v293
      %v522 = vunpack.c.l.b16 %v294
      %v523 = vunpack.c.h.b16 %v294
      %v524 = vunpack.c.l.b16 %v295
      %v525 = vunpack.c.h.b16 %v295
      %v526 = vunpack.c.l.b16 %v296
      %v527 = vunpack.c.h.b16 %v296
      %v528 = vunpack.c.l.b16 %v297
      %v529 = vunpack.c.h.b16 %v297
      %v530 = vunpack.c.l.b16 %v298
      %v531 = vunpack.c.h.b16 %v298
      %v532 = vunpack.c.l.b16 %v299
      %v533 = vunpack.c.h.b16 %v299
      %v534 = vunpack.c.l.b16 %v300
      %v535 = vunpack.c.h.b16 %v300
      %v536 = vunpack.c.l.b16 %v301
      %v537 = vunpack.c.h.b16 %v301
      %v538 = vunpack.c.l.b16 %v302
      %v539 = vunpack.c.h.b16 %v302
      %v540 = vunpack.c.l.b16 %v303
      %v541 = vunpack.c.h.b16 %v303
      %v542 = vunpack.c.l.b16 %v304
      %v543 = vunpack.c.h.b16 %v304
      %v544 = vunpack.c.l.b16 %v305
      %v545 = vunpack.c.h.b16 %v305
      %v546 = vunpack.c.l.b16 %v306
      %v547 = vunpack.c.h.b16 %v306
      %v548 = vunpack.c.l.b16 %v307
      %v549 = vunpack.c.h.b16 %v307
      %v550 = vunpack.c.l.b16 %v308
      %v551 = vunpack.c.h.b16 %v308
      %v552 = vunpack.c.l.b16 %v309
      %v553 = vunpack.c.h.b16 %v309
      %v554 = vunpack.c.l.b16 %v310
      %v555 = vunpack.c.h.b16 %v310
      %v556 = vunpack.c.l.b16 %v311
      %v557 = vunpack.c.h.b16 %v311
      %v558 = vunpack.c.l.b16 %v312
      %v559 = vunpack.c.h.b16 %v312
      %v560 = vunpack.c.l.b16 %v313
      %v561 = vunpack.c.h.b16 %v313
      %v562 = vunpack.c.l.b16 %v314
      %v563 = vunpack.c.h.b16 %v314
      %v564 = vunpack.c.l.b16 %v315
      %v565 = vunpack.c.h.b16 %v315
      %v566 = vunpack.c.l.b16 %v316
      %v567 = vunpack.c.h.b16 %v316
      %v568 = vunpack.c.l.b16 %v317
      %v569 = vunpack.c.h.b16 %v317
      %v570 = vunpack.c.l.b16 %v318
      %v571 = vunpack.c.h.b16 %v318
      %v572 = vunpack.c.l.b16 %v319
      %v573 = vunpack.c.h.b16 %v319
      %v574 = vunpack.c.l.b16 %v320
      %v575 = vunpack.c.h.b16 %v320
      %v576 = vunpack.c.l.b16 %v321
      %v577 = vunpack.c.h.b16 %v321
      %v578 = vpack.c.b16 %v452, %v450
      %v579 = vpack.c.b16 %v453, %v451
      %v580 = vpack.c.b16 %v456, %v454
      %v581 = vpack.c.b16 %v457, %v455
      %v582 = vpack.c.b16 %v460, %v458
      %v583 = vpack.c.b16 %v461, %v459
      %v584 = vpack.c.b16 %v464, %v462
      %v585 = vpack.c.b16 %v465, %v463
      %v586 = vpack.c.b16 %v468, %v466
      %v587 = vpack.c.b16 %v469, %v467
      %v588 = vpack.c.b16 %v472, %v470
      %v589 = vpack.c.b16 %v473, %v471
      %v590 = vpack.c.b16 %v476, %v474
      %v591 = vpack.c.b16 %v477, %v475
      %v592 = vpack.c.b16 %v480, %v478
      %v593 = vpack.c.b16 %v481, %v479
      %v594 = vpack.c.b16 %v484, %v482
      %v595 = vpack.c.b16 %v485, %v483
      %v596 = vpack.c.b16 %v488, %v486
      %v597 = vpack.c.b16 %v489, %v487
      %v598 = vpack.c.b16 %v492, %v490
      %v599 = vpack.c.b16 %v493, %v491
      %v600 = vpack.c.b16 %v496, %v494
      %v601 = vpack.c.b16 %v497, %v495
      %v602 = vpack.c.b16 %v500, %v498
      %v603 = vpack.c.b16 %v501, %v499
      %v604 = vpack.c.b16 %v504, %v502
      %v605 = vpack.c.b16 %v505, %v503
      %v606 = vpack.c.b16 %v508, %v506
      %v607 = vpack.c.b16 %v509, %v507
      %v608 = vpack.c.b16 %v512, %v510
      %v609 = vpack.c.b16 %v513, %v511
      %v610 = vpack.c.b16 %v516, %v514
      %v611 = vpack.c.b16 %v517, %v515
      %v612 = vpack.c.b16 %v520, %v518
      %v613 = vpack.c.b16 %v521, %v519
      %v614 = vpack.c.b16 %v524, %v522
      %v615 = vpack.c.b16 %v525, %v523
      %v616 = vpack.c.b16 %v528, %v526
      %v617 = vpack.c.b16 %v529, %v527
      %v618 = vpack.c.b16 %v532, %v530
      %v619 = vpack.c.b16 %v533, %v531
      %v620 = vpack.c.b16 %v536, %v534
      %v621 = vpack.c.b16 %v537, %v535
      %v622 = vpack.c.b16 %v540, %v538
      %v623 = vpack.c.b16 %v541, %v539
      %v624 = vpack.c.b16 %v544, %v542
      %v625 = vpack.c.b16 %v545, %v543
      %v626 = vpack.c.b16 %v548, %v546
      %v627 = vpack.c.b16 %v549, %v547
      %v628 = vpack.c.b16 %v552, %v550
      %v629 = vpack.c.b16 %v553, %v551
      %v630 = vpack.c.b16 %v556, %v554
      %v631 = vpack.c.b16 %v557, %v555
      %v632 = vpack.c.b16 %v560, %v558
      %v633 = vpack.c.b16 %v561, %v559
      %v634 = vpack.c.b16 %v564, %v562
      %v635 = vpack.c.b16 %v565, %v563
      %v636 = vpack.c.b16 %v568, %v566
      %v637 = vpack.c.b16 %v569, %v567
      %v638 = vpack.c.b16 %v572, %v570
      %v639 = vpack.c.b16 %v573, %v571
      %v640 = vpack.c.b16 %v576, %v574
      %v641 = vpack.c.b16 %v577, %v575
      %v770 = vunpack.c.l.b16 %v322
      %v771 = vunpack.c.h.b16 %v322
      %v772 = vunpack.c.l.b16 %v323
      %v773 = vunpack.c.l.b16 %v324
      %v774 = vunpack.c.h.b16 %v324
      %v775 = vunpack.c.l.b16 %v325
      %v776 = vunpack.c.l.b16 %v326
      %v777 = vunpack.c.h.b16 %v326
      %v778 = vunpack.c.l.b16 %v327
      %v779 = vunpack.c.l.b16 %v328
      %v780 = vunpack.c.h.b16 %v328
      %v781 = vunpack.c.l.b16 %v329
      %v782 = vunpack.c.l.b16 %v330
      %v783 = vunpack.c.h.b16 %v330
      %v784 = vunpack.c.l.b16 %v331
      %v785 = vunpack.c.l.b16 %v332
      %v786 = vunpack.c.h.b16 %v332
      %v787 = vunpack.c.l.b16 %v333
      %v788 = vunpack.c.l.b16 %v334
      %v789 = vunpack.c.h.b16 %v334
      %v790 = vunpack.c.l.b16 %v335
      %v791 = vunpack.c.l.b16 %v336
      %v792 = vunpack.c.h.b16 %v336
      %v793 = vunpack.c.l.b16 %v337
      %v794 = vunpack.c.l.b16 %v338
      %v795 = vunpack.c.h.b16 %v338
      %v796 = vunpack.c.l.b16 %v339
      %v797 = vunpack.c.l.b16 %v340
      %v798 = vunpack.c.h.b16 %v340
      %v799 = vunpack.c.l.b16 %v341
      %v800 = vunpack.c.l.b16 %v342
      %v801 = vunpack.c.h.b16 %v342
      %v802 = vunpack.c.l.b16 %v343
      %v803 = vunpack.c.l.b16 %v344
      %v804 = vunpack.c.h.b16 %v344
      %v805 = vunpack.c.l.b16 %v345
      %v806 = vunpack.c.l.b16 %v346
      %v807 = vunpack.c.h.b16 %v346
      %v808 = vunpack.c.l.b16 %v347
      %v809 = vunpack.c.l.b16 %v348
      %v810 = vunpack.c.h.b16 %v348
      %v811 = vunpack.c.l.b16 %v349
      %v812 = vunpack.c.l.b16 %v350
      %v813 = vunpack.c.h.b16 %v350
      %v814 = vunpack.c.l.b16 %v351
      %v815 = vunpack.c.l.b16 %v352
      %v816 = vunpack.c.h.b16 %v352
      %v817 = vunpack.c.l.b16 %v353
      %v818 = vunpack.c.l.b16 %v354
      %v819 = vunpack.c.h.b16 %v354
      %v820 = vunpack.c.l.b16 %v355
      %v821 = vunpack.c.l.b16 %v356
      %v822 = vunpack.c.h.b16 %v356
      %v823 = vunpack.c.l.b16 %v357
      %v824 = vunpack.c.l.b16 %v358
      %v825 = vunpack.c.h.b16 %v358
      %v826 = vunpack.c.l.b16 %v359
      %v827 = vunpack.c.l.b16 %v360
      %v828 = vunpack.c.h.b16 %v360
      %v829 = vunpack.c.l.b16 %v361
      %v830 = vunpack.c.l.b16 %v362
      %v831 = vunpack.c.h.b16 %v362
      %v832 = vunpack.c.l.b16 %v363
      %v833 = vunpack.c.l.b16 %v364
      %v834 = vunpack.c.h.b16 %v364
      %v835 = vunpack.c.l.b16 %v365
      %v836 = vunpack.c.l.b16 %v366
      %v837 = vunpack.c.h.b16 %v366
      %v838 = vunpack.c.l.b16 %v367
      %v839 = vunpack.c.l.b16 %v368
      %v840 = vunpack.c.h.b16 %v368
      %v841 = vunpack.c.l.b16 %v369
      %v842 = vunpack.c.l.b16 %v370
      %v843 = vunpack.c.h.b16 %v370
      %v844 = vunpack.c.l.b16 %v371
      %v845 = vunpack.c.l.b16 %v372
      %v846 = vunpack.c.h.b16 %v372
      %v847 = vunpack.c.l.b16 %v373
      %v848 = vunpack.c.l.b16 %v374
      %v849 = vunpack.c.h.b16 %v374
      %v850 = vunpack.c.l.b16 %v375
      %v851 = vunpack.c.l.b16 %v376
      %v852 = vunpack.c.h.b16 %v376
      %v853 = vunpack.c.l.b16 %v377
      %v854 = vunpack.c.l.b16 %v378
      %v855 = vunpack.c.h.b16 %v378
      %v856 = vunpack.c.l.b16 %v379
      %v857 = vunpack.c.l.b16 %v380
      %v858 = vunpack.c.h.b16 %v380
      %v859 = vunpack.c.l.b16 %v381
      %v860 = vunpack.c.l.b16 %v382
      %v861 = vunpack.c.h.b16 %v382
      %v862 = vunpack.c.l.b16 %v383
      %v863 = vunpack.c.l.b16 %v384
      %v864 = vunpack.c.h.b16 %v384
      %v865 = vunpack.c.l.b16 %v385
      %v866 = vpack.c.b16 %v773, %v770
      %v867 = vpack.c.b16 %v774, %v771
      %v868 = vpack.c.b16 %v775, %v772
      %v869 = vpack.c.b16 %v779, %v776
      %v870 = vpack.c.b16 %v780, %v777
      %v871 = vpack.c.b16 %v781, %v778
      %v872 = vpack.c.b16 %v785, %v782
      %v873 = vpack.c.b16 %v786, %v783
      %v874 = vpack.c.b16 %v787, %v784
      %v875 = vpack.c.b16 %v791, %v788
      %v876 = vpack.c.b16 %v792, %v789
      %v877 = vpack.c.b16 %v793, %v790
      %v878 = vpack.c.b16 %v797, %v794
      %v879 = vpack.c.b16 %v798, %v795
      %v880 = vpack.c.b16 %v799, %v796
      %v881 = vpack.c.b16 %v803, %v800
      %v882 = vpack.c.b16 %v804, %v801
      %v883 = vpack.c.b16 %v805, %v802
      %v884 = vpack.c.b16 %v809, %v806
      %v885 = vpack.c.b16 %v810, %v807
      %v886 = vpack.c.b16 %v811, %v808
      %v887 = vpack.c.b16 %v815, %v812
      %v888 = vpack.c.b16 %v816, %v813
      %v889 = vpack.c.b16 %v817, %v814
      %v890 = vpack.c.b16 %v821, %v818
      %v891 = vpack.c.b16 %v822, %v819
      %v892 = vpack.c.b16 %v823, %v820
      %v893 = vpack.c.b16 %v827, %v824
      %v894 = vpack.c.b16 %v828, %v825
      %v895 = vpack.c.b16 %v829, %v826
      %v896 = vpack.c.b16 %v833, %v830
      %v897 = vpack.c.b16 %v834, %v831
      %v898 = vpack.c.b16 %v835, %v832
      %v899 = vpack.c.b16 %v839, %v836
      %v900 = vpack.c.b16 %v840, %v837
      %v901 = vpack.c.b16 %v841, %v838
      %v902 = vpack.c.b16 %v845, %v842
      %v903 = vpack.c.b16 %v846, %v843
      %v904 = vpack.c.b16 %v847, %v844
      %v905 = vpack.c.b16 %v851, %v848
      %v906 = vpack.c.b16 %v852, %v849
      %v907 = vpack.c.b16 %v853, %v850
      %v908 = vpack.c.b16 %v857, %v854
      %v909 = vpack.c.b16 %v858, %v855
      %v910 = vpack.c.b16 %v859, %v856
      %v911 = vpack.c.b16 %v863, %v860
      %v912 = vpack.c.b16 %v864, %v861
      %v913 = vpack.c.b16 %v865, %v862
      %962 = vmatpush.bf16.msra.mxu0 %v887
      %963 = vmatpush.bf16.msra.mxu0 %v884
      %964 = vmatpush.bf16.msra.mxu0 %v881
      %965 = vmatpush.bf16.msra.mxu0 %v878
      %966 = vmatpush.bf16.msra.mxu0 %v875
      %967 = vmatpush.bf16.msra.mxu0 %v872
      %968 = vmatpush.bf16.msra.mxu0 %v869
      %969 = vmatpush.bf16.msra.mxu0 %v866
      %970 = vmatmul.bf16.gmra.mxu0 %v578
      %v971 = vpop.f32.mrf.mxu0
      %v972 = vadd.f32 0.0, %v971
      %v973 = vpop.f32.mrf.mxu0
      %v974 = vadd.f32 0.0, %v973
      %975 = vmatmul.bf16.gmra.mxu0 %v580
      %v976 = vpop.f32.mrf.mxu0
      %v977 = vadd.f32 0.0, %v976
      %v978 = vpop.f32.mrf.mxu0
      %v979 = vadd.f32 0.0, %v978
      %980 = vmatmul.bf16.gmra.mxu0 %v582
      %v981 = vpop.f32.mrf.mxu0
      %v982 = vadd.f32 0.0, %v981
      %v983 = vpop.f32.mrf.mxu0
      %v984 = vadd.f32 0.0, %v983
      %985 = vmatmul.bf16.gmra.mxu0 %v584
      %v986 = vpop.f32.mrf.mxu0
      %v987 = vadd.f32 0.0, %v986
      %v988 = vpop.f32.mrf.mxu0
      %v989 = vadd.f32 0.0, %v988
      %990 = vmatmul.bf16.gmra.mxu0 %v586
      %v991 = vpop.f32.mrf.mxu0
      %v992 = vadd.f32 0.0, %v991
      %v993 = vpop.f32.mrf.mxu0
      %v994 = vadd.f32 0.0, %v993
      %995 = vmatmul.bf16.gmra.mxu0 %v588
      %v996 = vpop.f32.mrf.mxu0
      %v997 = vadd.f32 0.0, %v996
      %v998 = vpop.f32.mrf.mxu0
      %v999 = vadd.f32 0.0, %v998
      %1000 = vmatmul.bf16.gmra.mxu0 %v590
      %v1001 = vpop.f32.mrf.mxu0
      %v1002 = vadd.f32 0.0, %v1001
      %v1003 = vpop.f32.mrf.mxu0
      %v1004 = vadd.f32 0.0, %v1003
      %1005 = vmatmul.bf16.gmra.mxu0 %v592
      %v1006 = vpop.f32.mrf.mxu0
      %v1007 = vadd.f32 0.0, %v1006
      %v1008 = vpop.f32.mrf.mxu0
      %v1009 = vadd.f32 0.0, %v1008
      %1010 = vmatmul.bf16.gmra.mxu0 %v594
      %v1011 = vpop.f32.mrf.mxu0
      %v1012 = vadd.f32 0.0, %v1011
      %v1013 = vpop.f32.mrf.mxu0
      %v1014 = vadd.f32 0.0, %v1013
      %1015 = vmatmul.bf16.gmra.mxu0 %v596
      %v1016 = vpop.f32.mrf.mxu0
      %v1017 = vadd.f32 0.0, %v1016
      %v1018 = vpop.f32.mrf.mxu0
      %v1019 = vadd.f32 0.0, %v1018
      %1020 = vmatmul.bf16.gmra.mxu0 %v598
      %v1021 = vpop.f32.mrf.mxu0
      %v1022 = vadd.f32 0.0, %v1021
      %v1023 = vpop.f32.mrf.mxu0
      %v1024 = vadd.f32 0.0, %v1023
      %1025 = vmatmul.bf16.gmra.mxu0 %v600
      %v1026 = vpop.f32.mrf.mxu0
      %v1027 = vadd.f32 0.0, %v1026
      %v1028 = vpop.f32.mrf.mxu0
      %v1029 = vadd.f32 0.0, %v1028
      %1030 = vmatmul.bf16.gmra.mxu0 %v602
      %v1031 = vpop.f32.mrf.mxu0
      %v1032 = vadd.f32 0.0, %v1031
      %v1033 = vpop.f32.mrf.mxu0
      %v1034 = vadd.f32 0.0, %v1033
      %1035 = vmatmul.bf16.gmra.mxu0 %v604
      %v1036 = vpop.f32.mrf.mxu0
      %v1037 = vadd.f32 0.0, %v1036
      %v1038 = vpop.f32.mrf.mxu0
      %v1039 = vadd.f32 0.0, %v1038
      %1040 = vmatmul.bf16.gmra.mxu0 %v606
      %v1041 = vpop.f32.mrf.mxu0
      %v1042 = vadd.f32 0.0, %v1041
      %v1043 = vpop.f32.mrf.mxu0
      %v1044 = vadd.f32 0.0, %v1043
      %1045 = vmatmul.bf16.gmra.mxu0 %v608
      %v1046 = vpop.f32.mrf.mxu0
      %v1047 = vadd.f32 0.0, %v1046
      %v1048 = vpop.f32.mrf.mxu0
      %v1049 = vadd.f32 0.0, %v1048
      %1050 = vmatmul.bf16.gmra.mxu0 %v610
      %v1051 = vpop.f32.mrf.mxu0
      %v1052 = vadd.f32 0.0, %v1051
      %v1053 = vpop.f32.mrf.mxu0
      %v1054 = vadd.f32 0.0, %v1053
      %1055 = vmatmul.bf16.gmra.mxu0 %v612
      %v1056 = vpop.f32.mrf.mxu0
      %v1057 = vadd.f32 0.0, %v1056
      %v1058 = vpop.f32.mrf.mxu0
      %v1059 = vadd.f32 0.0, %v1058
      %1060 = vmatmul.bf16.gmra.mxu0 %v614
      %v1061 = vpop.f32.mrf.mxu0
      %v1062 = vadd.f32 0.0, %v1061
      %v1063 = vpop.f32.mrf.mxu0
      %v1064 = vadd.f32 0.0, %v1063
      %1065 = vmatmul.bf16.gmra.mxu0 %v616
      %v1066 = vpop.f32.mrf.mxu0
      %v1067 = vadd.f32 0.0, %v1066
      %v1068 = vpop.f32.mrf.mxu0
      %v1069 = vadd.f32 0.0, %v1068
      %1070 = vmatmul.bf16.gmra.mxu0 %v618
      %v1071 = vpop.f32.mrf.mxu0
      %v1072 = vadd.f32 0.0, %v1071
      %v1073 = vpop.f32.mrf.mxu0
      %v1074 = vadd.f32 0.0, %v1073
      %1075 = vmatmul.bf16.gmra.mxu0 %v620
      %v1076 = vpop.f32.mrf.mxu0
      %v1077 = vadd.f32 0.0, %v1076
      %v1078 = vpop.f32.mrf.mxu0
      %v1079 = vadd.f32 0.0, %v1078
      %1080 = vmatmul.bf16.gmra.mxu0 %v622
      %v1081 = vpop.f32.mrf.mxu0
      %v1082 = vadd.f32 0.0, %v1081
      %v1083 = vpop.f32.mrf.mxu0
      %v1084 = vadd.f32 0.0, %v1083
      %1085 = vmatmul.bf16.gmra.mxu0 %v624
      %v1086 = vpop.f32.mrf.mxu0
      %v1087 = vadd.f32 0.0, %v1086
      %v1088 = vpop.f32.mrf.mxu0
      %v1089 = vadd.f32 0.0, %v1088
      %1090 = vmatmul.bf16.gmra.mxu0 %v626
      %v1091 = vpop.f32.mrf.mxu0
      %v1092 = vadd.f32 0.0, %v1091
      %v1093 = vpop.f32.mrf.mxu0
      %v1094 = vadd.f32 0.0, %v1093
      %1095 = vmatmul.bf16.gmra.mxu0 %v628
      %v1096 = vpop.f32.mrf.mxu0
      %v1097 = vadd.f32 0.0, %v1096
      %v1098 = vpop.f32.mrf.mxu0
      %v1099 = vadd.f32 0.0, %v1098
      %1100 = vmatmul.bf16.gmra.mxu0 %v630
      %v1101 = vpop.f32.mrf.mxu0
      %v1102 = vadd.f32 0.0, %v1101
      %v1103 = vpop.f32.mrf.mxu0
      %v1104 = vadd.f32 0.0, %v1103
      %1105 = vmatmul.bf16.gmra.mxu0 %v632
      %v1106 = vpop.f32.mrf.mxu0
      %v1107 = vadd.f32 0.0, %v1106
      %v1108 = vpop.f32.mrf.mxu0
      %v1109 = vadd.f32 0.0, %v1108
      %1110 = vmatmul.bf16.gmra.mxu0 %v634
      %v1111 = vpop.f32.mrf.mxu0
      %v1112 = vadd.f32 0.0, %v1111
      %v1113 = vpop.f32.mrf.mxu0
      %v1114 = vadd.f32 0.0, %v1113
      %1115 = vmatmul.bf16.gmra.mxu0 %v636
      %v1116 = vpop.f32.mrf.mxu0
      %v1117 = vadd.f32 0.0, %v1116
      %v1118 = vpop.f32.mrf.mxu0
      %v1119 = vadd.f32 0.0, %v1118
      %1120 = vmatmul.bf16.gmra.mxu0 %v638
      %v1121 = vpop.f32.mrf.mxu0
      %v1122 = vadd.f32 0.0, %v1121
      %v1123 = vpop.f32.mrf.mxu0
      %v1124 = vadd.f32 0.0, %v1123
      %1125 = vmatmul.bf16.gmra.mxu0 %v640
      %v1126 = vpop.f32.mrf.mxu0
      %v1127 = vadd.f32 0.0, %v1126
      %v1128 = vpop.f32.mrf.mxu0
      %v1129 = vadd.f32 0.0, %v1128
      %1130 = vdwg.mxu0
      %1131 = vmatpush.bf16.msra.mxu0 %v911
      %1132 = vmatpush.bf16.msra.mxu0 %v908
      %1133 = vmatpush.bf16.msra.mxu0 %v905
      %1134 = vmatpush.bf16.msra.mxu0 %v902
      %1135 = vmatpush.bf16.msra.mxu0 %v899
      %1136 = vmatpush.bf16.msra.mxu0 %v896
      %1137 = vmatpush.bf16.msra.mxu0 %v893
      %1138 = vmatpush.bf16.msra.mxu0 %v890
      %1139 = vmatmul.bf16.gmra.mxu0 %v579
      %v1140 = vpop.f32.mrf.mxu0
      %v1141 = vadd.f32 %v972, %v1140
      %v1142 = vpop.f32.mrf.mxu0
      %v1143 = vadd.f32 %v974, %v1142
      %1144 = vmatmul.bf16.gmra.mxu0 %v581
      %v1145 = vpop.f32.mrf.mxu0
      %v1146 = vadd.f32 %v977, %v1145
      %v1147 = vpop.f32.mrf.mxu0
      %v1148 = vadd.f32 %v979, %v1147
      %1149 = vmatmul.bf16.gmra.mxu0 %v583
      %v1150 = vpop.f32.mrf.mxu0
      %v1151 = vadd.f32 %v982, %v1150
      %v1152 = vpop.f32.mrf.mxu0
      %v1153 = vadd.f32 %v984, %v1152
      %1154 = vmatmul.bf16.gmra.mxu0 %v585
      %v1155 = vpop.f32.mrf.mxu0
      %v1156 = vadd.f32 %v987, %v1155
      %v1157 = vpop.f32.mrf.mxu0
      %v1158 = vadd.f32 %v989, %v1157
      %1159 = vmatmul.bf16.gmra.mxu0 %v587
      %v1160 = vpop.f32.mrf.mxu0
      %v1161 = vadd.f32 %v992, %v1160
      %v1162 = vpop.f32.mrf.mxu0
      %v1163 = vadd.f32 %v994, %v1162
      %1164 = vmatmul.bf16.gmra.mxu0 %v589
      %v1165 = vpop.f32.mrf.mxu0
      %v1166 = vadd.f32 %v997, %v1165
      %v1167 = vpop.f32.mrf.mxu0
      %v1168 = vadd.f32 %v999, %v1167
      %1169 = vmatmul.bf16.gmra.mxu0 %v591
      %v1170 = vpop.f32.mrf.mxu0
      %v1171 = vadd.f32 %v1002, %v1170
      %v1172 = vpop.f32.mrf.mxu0
      %v1173 = vadd.f32 %v1004, %v1172
      %1174 = vmatmul.bf16.gmra.mxu0 %v593
      %v1175 = vpop.f32.mrf.mxu0
      %v1176 = vadd.f32 %v1007, %v1175
      %v1177 = vpop.f32.mrf.mxu0
      %v1178 = vadd.f32 %v1009, %v1177
      %1179 = vmatmul.bf16.gmra.mxu0 %v595
      %v1180 = vpop.f32.mrf.mxu0
      %v1181 = vadd.f32 %v1012, %v1180
      %v1182 = vpop.f32.mrf.mxu0
      %v1183 = vadd.f32 %v1014, %v1182
      %1184 = vmatmul.bf16.gmra.mxu0 %v597
      %v1185 = vpop.f32.mrf.mxu0
      %v1186 = vadd.f32 %v1017, %v1185
      %v1187 = vpop.f32.mrf.mxu0
      %v1188 = vadd.f32 %v1019, %v1187
      %1189 = vmatmul.bf16.gmra.mxu0 %v599
      %v1190 = vpop.f32.mrf.mxu0
      %v1191 = vadd.f32 %v1022, %v1190
      %v1192 = vpop.f32.mrf.mxu0
      %v1193 = vadd.f32 %v1024, %v1192
      %1194 = vmatmul.bf16.gmra.mxu0 %v601
      %v1195 = vpop.f32.mrf.mxu0
      %v1196 = vadd.f32 %v1027, %v1195
      %v1197 = vpop.f32.mrf.mxu0
      %v1198 = vadd.f32 %v1029, %v1197
      %1199 = vmatmul.bf16.gmra.mxu0 %v603
      %v1200 = vpop.f32.mrf.mxu0
      %v1201 = vadd.f32 %v1032, %v1200
      %v1202 = vpop.f32.mrf.mxu0
      %v1203 = vadd.f32 %v1034, %v1202
      %1204 = vmatmul.bf16.gmra.mxu0 %v605
      %v1205 = vpop.f32.mrf.mxu0
      %v1206 = vadd.f32 %v1037, %v1205
      %v1207 = vpop.f32.mrf.mxu0
      %v1208 = vadd.f32 %v1039, %v1207
      %1209 = vmatmul.bf16.gmra.mxu0 %v607
      %v1210 = vpop.f32.mrf.mxu0
      %v1211 = vadd.f32 %v1042, %v1210
      %v1212 = vpop.f32.mrf.mxu0
      %v1213 = vadd.f32 %v1044, %v1212
      %1214 = vmatmul.bf16.gmra.mxu0 %v609
      %v1215 = vpop.f32.mrf.mxu0
      %v1216 = vadd.f32 %v1047, %v1215
      %v1217 = vpop.f32.mrf.mxu0
      %v1218 = vadd.f32 %v1049, %v1217
      %1219 = vmatmul.bf16.gmra.mxu0 %v611
      %v1220 = vpop.f32.mrf.mxu0
      %v1221 = vadd.f32 %v1052, %v1220
      %v1222 = vpop.f32.mrf.mxu0
      %v1223 = vadd.f32 %v1054, %v1222
      %1224 = vmatmul.bf16.gmra.mxu0 %v613
      %v1225 = vpop.f32.mrf.mxu0
      %v1226 = vadd.f32 %v1057, %v1225
      %v1227 = vpop.f32.mrf.mxu0
      %v1228 = vadd.f32 %v1059, %v1227
      %1229 = vmatmul.bf16.gmra.mxu0 %v615
      %v1230 = vpop.f32.mrf.mxu0
      %v1231 = vadd.f32 %v1062, %v1230
      %v1232 = vpop.f32.mrf.mxu0
      %v1233 = vadd.f32 %v1064, %v1232
      %1234 = vmatmul.bf16.gmra.mxu0 %v617
      %v1235 = vpop.f32.mrf.mxu0
      %v1236 = vadd.f32 %v1067, %v1235
      %v1237 = vpop.f32.mrf.mxu0
      %v1238 = vadd.f32 %v1069, %v1237
      %1239 = vmatmul.bf16.gmra.mxu0 %v619
      %v1240 = vpop.f32.mrf.mxu0
      %v1241 = vadd.f32 %v1072, %v1240
      %v1242 = vpop.f32.mrf.mxu0
      %v1243 = vadd.f32 %v1074, %v1242
      %1244 = vmatmul.bf16.gmra.mxu0 %v621
      %v1245 = vpop.f32.mrf.mxu0
      %v1246 = vadd.f32 %v1077, %v1245
      %v1247 = vpop.f32.mrf.mxu0
      %v1248 = vadd.f32 %v1079, %v1247
      %1249 = vmatmul.bf16.gmra.mxu0 %v623
      %v1250 = vpop.f32.mrf.mxu0
      %v1251 = vadd.f32 %v1082, %v1250
      %v1252 = vpop.f32.mrf.mxu0
      %v1253 = vadd.f32 %v1084, %v1252
      %1254 = vmatmul.bf16.gmra.mxu0 %v625
      %v1255 = vpop.f32.mrf.mxu0
      %v1256 = vadd.f32 %v1087, %v1255
      %v1257 = vpop.f32.mrf.mxu0
      %v1258 = vadd.f32 %v1089, %v1257
      %1259 = vmatmul.bf16.gmra.mxu0 %v627
      %v1260 = vpop.f32.mrf.mxu0
      %v1261 = vadd.f32 %v1092, %v1260
      %v1262 = vpop.f32.mrf.mxu0
      %v1263 = vadd.f32 %v1094, %v1262
      %1264 = vmatmul.bf16.gmra.mxu0 %v629
      %v1265 = vpop.f32.mrf.mxu0
      %v1266 = vadd.f32 %v1097, %v1265
      %v1267 = vpop.f32.mrf.mxu0
      %v1268 = vadd.f32 %v1099, %v1267
      %1269 = vmatmul.bf16.gmra.mxu0 %v631
      %v1270 = vpop.f32.mrf.mxu0
      %v1271 = vadd.f32 %v1102, %v1270
      %v1272 = vpop.f32.mrf.mxu0
      %v1273 = vadd.f32 %v1104, %v1272
      %1274 = vmatmul.bf16.gmra.mxu0 %v633
      %v1275 = vpop.f32.mrf.mxu0
      %v1276 = vadd.f32 %v1107, %v1275
      %v1277 = vpop.f32.mrf.mxu0
      %v1278 = vadd.f32 %v1109, %v1277
      %1279 = vmatmul.bf16.gmra.mxu0 %v635
      %v1280 = vpop.f32.mrf.mxu0
      %v1281 = vadd.f32 %v1112, %v1280
      %v1282 = vpop.f32.mrf.mxu0
      %v1283 = vadd.f32 %v1114, %v1282
      %1284 = vmatmul.bf16.gmra.mxu0 %v637
      %v1285 = vpop.f32.mrf.mxu0
      %v1286 = vadd.f32 %v1117, %v1285
      %v1287 = vpop.f32.mrf.mxu0
      %v1288 = vadd.f32 %v1119, %v1287
      %1289 = vmatmul.bf16.gmra.mxu0 %v639
      %v1290 = vpop.f32.mrf.mxu0
      %v1291 = vadd.f32 %v1122, %v1290
      %v1292 = vpop.f32.mrf.mxu0
      %v1293 = vadd.f32 %v1124, %v1292
      %1294 = vmatmul.bf16.gmra.mxu0 %v641
      %v1295 = vpop.f32.mrf.mxu0
      %v1296 = vadd.f32 %v1127, %v1295
      %v1297 = vpop.f32.mrf.mxu0
      %v1298 = vadd.f32 %v1129, %v1297
      %1299 = vdwg.mxu0
      %1300 = vmatpush.bf16.msra.mxu0 %v888
      %1301 = vmatpush.bf16.msra.mxu0 %v885
      %1302 = vmatpush.bf16.msra.mxu0 %v882
      %1303 = vmatpush.bf16.msra.mxu0 %v879
      %1304 = vmatpush.bf16.msra.mxu0 %v876
      %1305 = vmatpush.bf16.msra.mxu0 %v873
      %1306 = vmatpush.bf16.msra.mxu0 %v870
      %1307 = vmatpush.bf16.msra.mxu0 %v867
      %1308 = vmatmul.bf16.gmra.mxu0 %v578
      %v1309 = vpop.f32.mrf.mxu0
      %v1310 = vadd.f32 0.0, %v1309
      %v1311 = vpop.f32.mrf.mxu0
      %v1312 = vadd.f32 0.0, %v1311
      %1313 = vmatmul.bf16.gmra.mxu0 %v580
      %v1314 = vpop.f32.mrf.mxu0
      %v1315 = vadd.f32 0.0, %v1314
      %v1316 = vpop.f32.mrf.mxu0
      %v1317 = vadd.f32 0.0, %v1316
      %1318 = vmatmul.bf16.gmra.mxu0 %v582
      %v1319 = vpop.f32.mrf.mxu0
      %v1320 = vadd.f32 0.0, %v1319
      %v1321 = vpop.f32.mrf.mxu0
      %v1322 = vadd.f32 0.0, %v1321
      %1323 = vmatmul.bf16.gmra.mxu0 %v584
      %v1324 = vpop.f32.mrf.mxu0
      %v1325 = vadd.f32 0.0, %v1324
      %v1326 = vpop.f32.mrf.mxu0
      %v1327 = vadd.f32 0.0, %v1326
      %1328 = vmatmul.bf16.gmra.mxu0 %v586
      %v1329 = vpop.f32.mrf.mxu0
      %v1330 = vadd.f32 0.0, %v1329
      %v1331 = vpop.f32.mrf.mxu0
      %v1332 = vadd.f32 0.0, %v1331
      %1333 = vmatmul.bf16.gmra.mxu0 %v588
      %v1334 = vpop.f32.mrf.mxu0
      %v1335 = vadd.f32 0.0, %v1334
      %v1336 = vpop.f32.mrf.mxu0
      %v1337 = vadd.f32 0.0, %v1336
      %1338 = vmatmul.bf16.gmra.mxu0 %v590
      %v1339 = vpop.f32.mrf.mxu0
      %v1340 = vadd.f32 0.0, %v1339
      %v1341 = vpop.f32.mrf.mxu0
      %v1342 = vadd.f32 0.0, %v1341
      %1343 = vmatmul.bf16.gmra.mxu0 %v592
      %v1344 = vpop.f32.mrf.mxu0
      %v1345 = vadd.f32 0.0, %v1344
      %v1346 = vpop.f32.mrf.mxu0
      %v1347 = vadd.f32 0.0, %v1346
      %1348 = vmatmul.bf16.gmra.mxu0 %v594
      %v1349 = vpop.f32.mrf.mxu0
      %v1350 = vadd.f32 0.0, %v1349
      %v1351 = vpop.f32.mrf.mxu0
      %v1352 = vadd.f32 0.0, %v1351
      %1353 = vmatmul.bf16.gmra.mxu0 %v596
      %v1354 = vpop.f32.mrf.mxu0
      %v1355 = vadd.f32 0.0, %v1354
      %v1356 = vpop.f32.mrf.mxu0
      %v1357 = vadd.f32 0.0, %v1356
      %1358 = vmatmul.bf16.gmra.mxu0 %v598
      %v1359 = vpop.f32.mrf.mxu0
      %v1360 = vadd.f32 0.0, %v1359
      %v1361 = vpop.f32.mrf.mxu0
      %v1362 = vadd.f32 0.0, %v1361
      %1363 = vmatmul.bf16.gmra.mxu0 %v600
      %v1364 = vpop.f32.mrf.mxu0
      %v1365 = vadd.f32 0.0, %v1364
      %v1366 = vpop.f32.mrf.mxu0
      %v1367 = vadd.f32 0.0, %v1366
      %1368 = vmatmul.bf16.gmra.mxu0 %v602
      %v1369 = vpop.f32.mrf.mxu0
      %v1370 = vadd.f32 0.0, %v1369
      %v1371 = vpop.f32.mrf.mxu0
      %v1372 = vadd.f32 0.0, %v1371
      %1373 = vmatmul.bf16.gmra.mxu0 %v604
      %v1374 = vpop.f32.mrf.mxu0
      %v1375 = vadd.f32 0.0, %v1374
      %v1376 = vpop.f32.mrf.mxu0
      %v1377 = vadd.f32 0.0, %v1376
      %1378 = vmatmul.bf16.gmra.mxu0 %v606
      %v1379 = vpop.f32.mrf.mxu0
      %v1380 = vadd.f32 0.0, %v1379
      %v1381 = vpop.f32.mrf.mxu0
      %v1382 = vadd.f32 0.0, %v1381
      %1383 = vmatmul.bf16.gmra.mxu0 %v608
      %v1384 = vpop.f32.mrf.mxu0
      %v1385 = vadd.f32 0.0, %v1384
      %v1386 = vpop.f32.mrf.mxu0
      %v1387 = vadd.f32 0.0, %v1386
      %1388 = vmatmul.bf16.gmra.mxu0 %v610
      %v1389 = vpop.f32.mrf.mxu0
      %v1390 = vadd.f32 0.0, %v1389
      %v1391 = vpop.f32.mrf.mxu0
      %v1392 = vadd.f32 0.0, %v1391
      %1393 = vmatmul.bf16.gmra.mxu0 %v612
      %v1394 = vpop.f32.mrf.mxu0
      %v1395 = vadd.f32 0.0, %v1394
      %v1396 = vpop.f32.mrf.mxu0
      %v1397 = vadd.f32 0.0, %v1396
      %1398 = vmatmul.bf16.gmra.mxu0 %v614
      %v1399 = vpop.f32.mrf.mxu0
      %v1400 = vadd.f32 0.0, %v1399
      %v1401 = vpop.f32.mrf.mxu0
      %v1402 = vadd.f32 0.0, %v1401
      %1403 = vmatmul.bf16.gmra.mxu0 %v616
      %v1404 = vpop.f32.mrf.mxu0
      %v1405 = vadd.f32 0.0, %v1404
      %v1406 = vpop.f32.mrf.mxu0
      %v1407 = vadd.f32 0.0, %v1406
      %1408 = vmatmul.bf16.gmra.mxu0 %v618
      %v1409 = vpop.f32.mrf.mxu0
      %v1410 = vadd.f32 0.0, %v1409
      %v1411 = vpop.f32.mrf.mxu0
      %v1412 = vadd.f32 0.0, %v1411
      %1413 = vmatmul.bf16.gmra.mxu0 %v620
      %v1414 = vpop.f32.mrf.mxu0
      %v1415 = vadd.f32 0.0, %v1414
      %v1416 = vpop.f32.mrf.mxu0
      %v1417 = vadd.f32 0.0, %v1416
      %1418 = vmatmul.bf16.gmra.mxu0 %v622
      %v1419 = vpop.f32.mrf.mxu0
      %v1420 = vadd.f32 0.0, %v1419
      %v1421 = vpop.f32.mrf.mxu0
      %v1422 = vadd.f32 0.0, %v1421
      %1423 = vmatmul.bf16.gmra.mxu0 %v624
      %v1424 = vpop.f32.mrf.mxu0
      %v1425 = vadd.f32 0.0, %v1424
      %v1426 = vpop.f32.mrf.mxu0
      %v1427 = vadd.f32 0.0, %v1426
      %1428 = vmatmul.bf16.gmra.mxu0 %v626
      %v1429 = vpop.f32.mrf.mxu0
      %v1430 = vadd.f32 0.0, %v1429
      %v1431 = vpop.f32.mrf.mxu0
      %v1432 = vadd.f32 0.0, %v1431
      %1433 = vmatmul.bf16.gmra.mxu0 %v628
      %v1434 = vpop.f32.mrf.mxu0
      %v1435 = vadd.f32 0.0, %v1434
      %v1436 = vpop.f32.mrf.mxu0
      %v1437 = vadd.f32 0.0, %v1436
      %1438 = vmatmul.bf16.gmra.mxu0 %v630
      %v1439 = vpop.f32.mrf.mxu0
      %v1440 = vadd.f32 0.0, %v1439
      %v1441 = vpop.f32.mrf.mxu0
      %v1442 = vadd.f32 0.0, %v1441
      %1443 = vmatmul.bf16.gmra.mxu0 %v632
      %v1444 = vpop.f32.mrf.mxu0
      %v1445 = vadd.f32 0.0, %v1444
      %v1446 = vpop.f32.mrf.mxu0
      %v1447 = vadd.f32 0.0, %v1446
      %1448 = vmatmul.bf16.gmra.mxu0 %v634
      %v1449 = vpop.f32.mrf.mxu0
      %v1450 = vadd.f32 0.0, %v1449
      %v1451 = vpop.f32.mrf.mxu0
      %v1452 = vadd.f32 0.0, %v1451
      %1453 = vmatmul.bf16.gmra.mxu0 %v636
      %v1454 = vpop.f32.mrf.mxu0
      %v1455 = vadd.f32 0.0, %v1454
      %v1456 = vpop.f32.mrf.mxu0
      %v1457 = vadd.f32 0.0, %v1456
      %1458 = vmatmul.bf16.gmra.mxu0 %v638
      %v1459 = vpop.f32.mrf.mxu0
      %v1460 = vadd.f32 0.0, %v1459
      %v1461 = vpop.f32.mrf.mxu0
      %v1462 = vadd.f32 0.0, %v1461
      %1463 = vmatmul.bf16.gmra.mxu0 %v640
      %v1464 = vpop.f32.mrf.mxu0
      %v1465 = vadd.f32 0.0, %v1464
      %v1466 = vpop.f32.mrf.mxu0
      %v1467 = vadd.f32 0.0, %v1466
      %1468 = vdwg.mxu0
      %1469 = vmatpush.bf16.msra.mxu0 %v912
      %1470 = vmatpush.bf16.msra.mxu0 %v909
      %1471 = vmatpush.bf16.msra.mxu0 %v906
      %1472 = vmatpush.bf16.msra.mxu0 %v903
      %1473 = vmatpush.bf16.msra.mxu0 %v900
      %1474 = vmatpush.bf16.msra.mxu0 %v897
      %1475 = vmatpush.bf16.msra.mxu0 %v894
      %1476 = vmatpush.bf16.msra.mxu0 %v891
      %1477 = vmatmul.bf16.gmra.mxu0 %v579
      %v1478 = vpop.f32.mrf.mxu0
      %v1479 = vadd.f32 %v1310, %v1478
      %v1480 = vpop.f32.mrf.mxu0
      %v1481 = vadd.f32 %v1312, %v1480
      %1482 = vmatmul.bf16.gmra.mxu0 %v581
      %v1483 = vpop.f32.mrf.mxu0
      %v1484 = vadd.f32 %v1315, %v1483
      %v1485 = vpop.f32.mrf.mxu0
      %v1486 = vadd.f32 %v1317, %v1485
      %1487 = vmatmul.bf16.gmra.mxu0 %v583
      %v1488 = vpop.f32.mrf.mxu0
      %v1489 = vadd.f32 %v1320, %v1488
      %v1490 = vpop.f32.mrf.mxu0
      %v1491 = vadd.f32 %v1322, %v1490
      %1492 = vmatmul.bf16.gmra.mxu0 %v585
      %v1493 = vpop.f32.mrf.mxu0
      %v1494 = vadd.f32 %v1325, %v1493
      %v1495 = vpop.f32.mrf.mxu0
      %v1496 = vadd.f32 %v1327, %v1495
      %1497 = vmatmul.bf16.gmra.mxu0 %v587
      %v1498 = vpop.f32.mrf.mxu0
      %v1499 = vadd.f32 %v1330, %v1498
      %v1500 = vpop.f32.mrf.mxu0
      %v1501 = vadd.f32 %v1332, %v1500
      %1502 = vmatmul.bf16.gmra.mxu0 %v589
      %v1503 = vpop.f32.mrf.mxu0
      %v1504 = vadd.f32 %v1335, %v1503
      %v1505 = vpop.f32.mrf.mxu0
      %v1506 = vadd.f32 %v1337, %v1505
      %1507 = vmatmul.bf16.gmra.mxu0 %v591
      %v1508 = vpop.f32.mrf.mxu0
      %v1509 = vadd.f32 %v1340, %v1508
      %v1510 = vpop.f32.mrf.mxu0
      %v1511 = vadd.f32 %v1342, %v1510
      %1512 = vmatmul.bf16.gmra.mxu0 %v593
      %v1513 = vpop.f32.mrf.mxu0
      %v1514 = vadd.f32 %v1345, %v1513
      %v1515 = vpop.f32.mrf.mxu0
      %v1516 = vadd.f32 %v1347, %v1515
      %1517 = vmatmul.bf16.gmra.mxu0 %v595
      %v1518 = vpop.f32.mrf.mxu0
      %v1519 = vadd.f32 %v1350, %v1518
      %v1520 = vpop.f32.mrf.mxu0
      %v1521 = vadd.f32 %v1352, %v1520
      %1522 = vmatmul.bf16.gmra.mxu0 %v597
      %v1523 = vpop.f32.mrf.mxu0
      %v1524 = vadd.f32 %v1355, %v1523
      %v1525 = vpop.f32.mrf.mxu0
      %v1526 = vadd.f32 %v1357, %v1525
      %1527 = vmatmul.bf16.gmra.mxu0 %v599
      %v1528 = vpop.f32.mrf.mxu0
      %v1529 = vadd.f32 %v1360, %v1528
      %v1530 = vpop.f32.mrf.mxu0
      %v1531 = vadd.f32 %v1362, %v1530
      %1532 = vmatmul.bf16.gmra.mxu0 %v601
      %v1533 = vpop.f32.mrf.mxu0
      %v1534 = vadd.f32 %v1365, %v1533
      %v1535 = vpop.f32.mrf.mxu0
      %v1536 = vadd.f32 %v1367, %v1535
      %1537 = vmatmul.bf16.gmra.mxu0 %v603
      %v1538 = vpop.f32.mrf.mxu0
      %v1539 = vadd.f32 %v1370, %v1538
      %v1540 = vpop.f32.mrf.mxu0
      %v1541 = vadd.f32 %v1372, %v1540
      %1542 = vmatmul.bf16.gmra.mxu0 %v605
      %v1543 = vpop.f32.mrf.mxu0
      %v1544 = vadd.f32 %v1375, %v1543
      %v1545 = vpop.f32.mrf.mxu0
      %v1546 = vadd.f32 %v1377, %v1545
      %1547 = vmatmul.bf16.gmra.mxu0 %v607
      %v1548 = vpop.f32.mrf.mxu0
      %v1549 = vadd.f32 %v1380, %v1548
      %v1550 = vpop.f32.mrf.mxu0
      %v1551 = vadd.f32 %v1382, %v1550
      %1552 = vmatmul.bf16.gmra.mxu0 %v609
      %v1553 = vpop.f32.mrf.mxu0
      %v1554 = vadd.f32 %v1385, %v1553
      %v1555 = vpop.f32.mrf.mxu0
      %v1556 = vadd.f32 %v1387, %v1555
      %1557 = vmatmul.bf16.gmra.mxu0 %v611
      %v1558 = vpop.f32.mrf.mxu0
      %v1559 = vadd.f32 %v1390, %v1558
      %v1560 = vpop.f32.mrf.mxu0
      %v1561 = vadd.f32 %v1392, %v1560
      %1562 = vmatmul.bf16.gmra.mxu0 %v613
      %v1563 = vpop.f32.mrf.mxu0
      %v1564 = vadd.f32 %v1395, %v1563
      %v1565 = vpop.f32.mrf.mxu0
      %v1566 = vadd.f32 %v1397, %v1565
      %1567 = vmatmul.bf16.gmra.mxu0 %v615
      %v1568 = vpop.f32.mrf.mxu0
      %v1569 = vadd.f32 %v1400, %v1568
      %v1570 = vpop.f32.mrf.mxu0
      %v1571 = vadd.f32 %v1402, %v1570
      %1572 = vmatmul.bf16.gmra.mxu0 %v617
      %v1573 = vpop.f32.mrf.mxu0
      %v1574 = vadd.f32 %v1405, %v1573
      %v1575 = vpop.f32.mrf.mxu0
      %v1576 = vadd.f32 %v1407, %v1575
      %1577 = vmatmul.bf16.gmra.mxu0 %v619
      %v1578 = vpop.f32.mrf.mxu0
      %v1579 = vadd.f32 %v1410, %v1578
      %v1580 = vpop.f32.mrf.mxu0
      %v1581 = vadd.f32 %v1412, %v1580
      %1582 = vmatmul.bf16.gmra.mxu0 %v621
      %v1583 = vpop.f32.mrf.mxu0
      %v1584 = vadd.f32 %v1415, %v1583
      %v1585 = vpop.f32.mrf.mxu0
      %v1586 = vadd.f32 %v1417, %v1585
      %1587 = vmatmul.bf16.gmra.mxu0 %v623
      %v1588 = vpop.f32.mrf.mxu0
      %v1589 = vadd.f32 %v1420, %v1588
      %v1590 = vpop.f32.mrf.mxu0
      %v1591 = vadd.f32 %v1422, %v1590
      %1592 = vmatmul.bf16.gmra.mxu0 %v625
      %v1593 = vpop.f32.mrf.mxu0
      %v1594 = vadd.f32 %v1425, %v1593
      %v1595 = vpop.f32.mrf.mxu0
      %v1596 = vadd.f32 %v1427, %v1595
      %1597 = vmatmul.bf16.gmra.mxu0 %v627
      %v1598 = vpop.f32.mrf.mxu0
      %v1599 = vadd.f32 %v1430, %v1598
      %v1600 = vpop.f32.mrf.mxu0
      %v1601 = vadd.f32 %v1432, %v1600
      %1602 = vmatmul.bf16.gmra.mxu0 %v629
      %v1603 = vpop.f32.mrf.mxu0
      %v1604 = vadd.f32 %v1435, %v1603
      %v1605 = vpop.f32.mrf.mxu0
      %v1606 = vadd.f32 %v1437, %v1605
      %1607 = vmatmul.bf16.gmra.mxu0 %v631
      %v1608 = vpop.f32.mrf.mxu0
      %v1609 = vadd.f32 %v1440, %v1608
      %v1610 = vpop.f32.mrf.mxu0
      %v1611 = vadd.f32 %v1442, %v1610
      %1612 = vmatmul.bf16.gmra.mxu0 %v633
      %v1613 = vpop.f32.mrf.mxu0
      %v1614 = vadd.f32 %v1445, %v1613
      %v1615 = vpop.f32.mrf.mxu0
      %v1616 = vadd.f32 %v1447, %v1615
      %1617 = vmatmul.bf16.gmra.mxu0 %v635
      %v1618 = vpop.f32.mrf.mxu0
      %v1619 = vadd.f32 %v1450, %v1618
      %v1620 = vpop.f32.mrf.mxu0
      %v1621 = vadd.f32 %v1452, %v1620
      %1622 = vmatmul.bf16.gmra.mxu0 %v637
      %v1623 = vpop.f32.mrf.mxu0
      %v1624 = vadd.f32 %v1455, %v1623
      %v1625 = vpop.f32.mrf.mxu0
      %v1626 = vadd.f32 %v1457, %v1625
      %1627 = vmatmul.bf16.gmra.mxu0 %v639
      %v1628 = vpop.f32.mrf.mxu0
      %v1629 = vadd.f32 %v1460, %v1628
      %v1630 = vpop.f32.mrf.mxu0
      %v1631 = vadd.f32 %v1462, %v1630
      %1632 = vmatmul.bf16.gmra.mxu0 %v641
      %v1633 = vpop.f32.mrf.mxu0
      %v1634 = vadd.f32 %v1465, %v1633
      %v1635 = vpop.f32.mrf.mxu0
      %v1636 = vadd.f32 %v1467, %v1635
      %1637 = vdwg.mxu0
      %1638 = vmatpush.bf16.msra.mxu0 %v889
      %1639 = vmatpush.bf16.msra.mxu0 %v886
      %1640 = vmatpush.bf16.msra.mxu0 %v883
      %1641 = vmatpush.bf16.msra.mxu0 %v880
      %1642 = vmatpush.bf16.msra.mxu0 %v877
      %1643 = vmatpush.bf16.msra.mxu0 %v874
      %1644 = vmatpush.bf16.msra.mxu0 %v871
      %1645 = vmatpush.bf16.msra.mxu0 %v868
      %1646 = vmatmul.bf16.gmra.mxu0 %v578
      %v1647 = vpop.f32.mrf.mxu0
      %v1648 = vadd.f32 0.0, %v1647
      %v1649 = vpop.f32.mrf.mxu0
      %v1650 = vadd.f32 0.0, %v1649
      %1651 = vmatmul.bf16.gmra.mxu0 %v580
      %v1652 = vpop.f32.mrf.mxu0
      %v1653 = vadd.f32 0.0, %v1652
      %v1654 = vpop.f32.mrf.mxu0
      %v1655 = vadd.f32 0.0, %v1654
      %1656 = vmatmul.bf16.gmra.mxu0 %v582
      %v1657 = vpop.f32.mrf.mxu0
      %v1658 = vadd.f32 0.0, %v1657
      %v1659 = vpop.f32.mrf.mxu0
      %v1660 = vadd.f32 0.0, %v1659
      %1661 = vmatmul.bf16.gmra.mxu0 %v584
      %v1662 = vpop.f32.mrf.mxu0
      %v1663 = vadd.f32 0.0, %v1662
      %v1664 = vpop.f32.mrf.mxu0
      %v1665 = vadd.f32 0.0, %v1664
      %1666 = vmatmul.bf16.gmra.mxu0 %v586
      %v1667 = vpop.f32.mrf.mxu0
      %v1668 = vadd.f32 0.0, %v1667
      %v1669 = vpop.f32.mrf.mxu0
      %v1670 = vadd.f32 0.0, %v1669
      %1671 = vmatmul.bf16.gmra.mxu0 %v588
      %v1672 = vpop.f32.mrf.mxu0
      %v1673 = vadd.f32 0.0, %v1672
      %v1674 = vpop.f32.mrf.mxu0
      %v1675 = vadd.f32 0.0, %v1674
      %1676 = vmatmul.bf16.gmra.mxu0 %v590
      %v1677 = vpop.f32.mrf.mxu0
      %v1678 = vadd.f32 0.0, %v1677
      %v1679 = vpop.f32.mrf.mxu0
      %v1680 = vadd.f32 0.0, %v1679
      %1681 = vmatmul.bf16.gmra.mxu0 %v592
      %v1682 = vpop.f32.mrf.mxu0
      %v1683 = vadd.f32 0.0, %v1682
      %v1684 = vpop.f32.mrf.mxu0
      %v1685 = vadd.f32 0.0, %v1684
      %1686 = vmatmul.bf16.gmra.mxu0 %v594
      %v1687 = vpop.f32.mrf.mxu0
      %v1688 = vadd.f32 0.0, %v1687
      %v1689 = vpop.f32.mrf.mxu0
      %v1690 = vadd.f32 0.0, %v1689
      %1691 = vmatmul.bf16.gmra.mxu0 %v596
      %v1692 = vpop.f32.mrf.mxu0
      %v1693 = vadd.f32 0.0, %v1692
      %v1694 = vpop.f32.mrf.mxu0
      %v1695 = vadd.f32 0.0, %v1694
      %1696 = vmatmul.bf16.gmra.mxu0 %v598
      %v1697 = vpop.f32.mrf.mxu0
      %v1698 = vadd.f32 0.0, %v1697
      %v1699 = vpop.f32.mrf.mxu0
      %v1700 = vadd.f32 0.0, %v1699
      %1701 = vmatmul.bf16.gmra.mxu0 %v600
      %v1702 = vpop.f32.mrf.mxu0
      %v1703 = vadd.f32 0.0, %v1702
      %v1704 = vpop.f32.mrf.mxu0
      %v1705 = vadd.f32 0.0, %v1704
      %1706 = vmatmul.bf16.gmra.mxu0 %v602
      %v1707 = vpop.f32.mrf.mxu0
      %v1708 = vadd.f32 0.0, %v1707
      %v1709 = vpop.f32.mrf.mxu0
      %v1710 = vadd.f32 0.0, %v1709
      %1711 = vmatmul.bf16.gmra.mxu0 %v604
      %v1712 = vpop.f32.mrf.mxu0
      %v1713 = vadd.f32 0.0, %v1712
      %v1714 = vpop.f32.mrf.mxu0
      %v1715 = vadd.f32 0.0, %v1714
      %1716 = vmatmul.bf16.gmra.mxu0 %v606
      %v1717 = vpop.f32.mrf.mxu0
      %v1718 = vadd.f32 0.0, %v1717
      %v1719 = vpop.f32.mrf.mxu0
      %v1720 = vadd.f32 0.0, %v1719
      %1721 = vmatmul.bf16.gmra.mxu0 %v608
      %v1722 = vpop.f32.mrf.mxu0
      %v1723 = vadd.f32 0.0, %v1722
      %v1724 = vpop.f32.mrf.mxu0
      %v1725 = vadd.f32 0.0, %v1724
      %1726 = vmatmul.bf16.gmra.mxu0 %v610
      %v1727 = vpop.f32.mrf.mxu0
      %v1728 = vadd.f32 0.0, %v1727
      %v1729 = vpop.f32.mrf.mxu0
      %v1730 = vadd.f32 0.0, %v1729
      %1731 = vmatmul.bf16.gmra.mxu0 %v612
      %v1732 = vpop.f32.mrf.mxu0
      %v1733 = vadd.f32 0.0, %v1732
      %v1734 = vpop.f32.mrf.mxu0
      %v1735 = vadd.f32 0.0, %v1734
      %1736 = vmatmul.bf16.gmra.mxu0 %v614
      %v1737 = vpop.f32.mrf.mxu0
      %v1738 = vadd.f32 0.0, %v1737
      %v1739 = vpop.f32.mrf.mxu0
      %v1740 = vadd.f32 0.0, %v1739
      %1741 = vmatmul.bf16.gmra.mxu0 %v616
      %v1742 = vpop.f32.mrf.mxu0
      %v1743 = vadd.f32 0.0, %v1742
      %v1744 = vpop.f32.mrf.mxu0
      %v1745 = vadd.f32 0.0, %v1744
      %1746 = vmatmul.bf16.gmra.mxu0 %v618
      %v1747 = vpop.f32.mrf.mxu0
      %v1748 = vadd.f32 0.0, %v1747
      %v1749 = vpop.f32.mrf.mxu0
      %v1750 = vadd.f32 0.0, %v1749
      %1751 = vmatmul.bf16.gmra.mxu0 %v620
      %v1752 = vpop.f32.mrf.mxu0
      %v1753 = vadd.f32 0.0, %v1752
      %v1754 = vpop.f32.mrf.mxu0
      %v1755 = vadd.f32 0.0, %v1754
      %1756 = vmatmul.bf16.gmra.mxu0 %v622
      %v1757 = vpop.f32.mrf.mxu0
      %v1758 = vadd.f32 0.0, %v1757
      %v1759 = vpop.f32.mrf.mxu0
      %v1760 = vadd.f32 0.0, %v1759
      %1761 = vmatmul.bf16.gmra.mxu0 %v624
      %v1762 = vpop.f32.mrf.mxu0
      %v1763 = vadd.f32 0.0, %v1762
      %v1764 = vpop.f32.mrf.mxu0
      %v1765 = vadd.f32 0.0, %v1764
      %1766 = vmatmul.bf16.gmra.mxu0 %v626
      %v1767 = vpop.f32.mrf.mxu0
      %v1768 = vadd.f32 0.0, %v1767
      %v1769 = vpop.f32.mrf.mxu0
      %v1770 = vadd.f32 0.0, %v1769
      %1771 = vmatmul.bf16.gmra.mxu0 %v628
      %v1772 = vpop.f32.mrf.mxu0
      %v1773 = vadd.f32 0.0, %v1772
      %v1774 = vpop.f32.mrf.mxu0
      %v1775 = vadd.f32 0.0, %v1774
      %1776 = vmatmul.bf16.gmra.mxu0 %v630
      %v1777 = vpop.f32.mrf.mxu0
      %v1778 = vadd.f32 0.0, %v1777
      %v1779 = vpop.f32.mrf.mxu0
      %v1780 = vadd.f32 0.0, %v1779
      %1781 = vmatmul.bf16.gmra.mxu0 %v632
      %v1782 = vpop.f32.mrf.mxu0
      %v1783 = vadd.f32 0.0, %v1782
      %v1784 = vpop.f32.mrf.mxu0
      %v1785 = vadd.f32 0.0, %v1784
      %1786 = vmatmul.bf16.gmra.mxu0 %v634
      %v1787 = vpop.f32.mrf.mxu0
      %v1788 = vadd.f32 0.0, %v1787
      %v1789 = vpop.f32.mrf.mxu0
      %v1790 = vadd.f32 0.0, %v1789
      %1791 = vmatmul.bf16.gmra.mxu0 %v636
      %v1792 = vpop.f32.mrf.mxu0
      %v1793 = vadd.f32 0.0, %v1792
      %v1794 = vpop.f32.mrf.mxu0
      %v1795 = vadd.f32 0.0, %v1794
      %1796 = vmatmul.bf16.gmra.mxu0 %v638
      %v1797 = vpop.f32.mrf.mxu0
      %v1798 = vadd.f32 0.0, %v1797
      %v1799 = vpop.f32.mrf.mxu0
      %v1800 = vadd.f32 0.0, %v1799
      %1801 = vmatmul.bf16.gmra.mxu0 %v640
      %v1802 = vpop.f32.mrf.mxu0
      %v1803 = vadd.f32 0.0, %v1802
      %v1804 = vpop.f32.mrf.mxu0
      %v1805 = vadd.f32 0.0, %v1804
      %1806 = vdwg.mxu0
      %1807 = vmatpush.bf16.msra.mxu0 %v913
      %1808 = vmatpush.bf16.msra.mxu0 %v910
      %1809 = vmatpush.bf16.msra.mxu0 %v907
      %1810 = vmatpush.bf16.msra.mxu0 %v904
      %1811 = vmatpush.bf16.msra.mxu0 %v901
      %1812 = vmatpush.bf16.msra.mxu0 %v898
      %1813 = vmatpush.bf16.msra.mxu0 %v895
      %1814 = vmatpush.bf16.msra.mxu0 %v892
      %1815 = vmatmul.bf16.gmra.mxu0 %v579
      %v1816 = vpop.f32.mrf.mxu0
      %v1817 = vadd.f32 %v1648, %v1816
      %v1818 = vpop.f32.mrf.mxu0
      %v1819 = vadd.f32 %v1650, %v1818
      %1820 = vmatmul.bf16.gmra.mxu0 %v581
      %v1821 = vpop.f32.mrf.mxu0
      %v1822 = vadd.f32 %v1653, %v1821
      %v1823 = vpop.f32.mrf.mxu0
      %v1824 = vadd.f32 %v1655, %v1823
      %1825 = vmatmul.bf16.gmra.mxu0 %v583
      %v1826 = vpop.f32.mrf.mxu0
      %v1827 = vadd.f32 %v1658, %v1826
      %v1828 = vpop.f32.mrf.mxu0
      %v1829 = vadd.f32 %v1660, %v1828
      %1830 = vmatmul.bf16.gmra.mxu0 %v585
      %v1831 = vpop.f32.mrf.mxu0
      %v1832 = vadd.f32 %v1663, %v1831
      %v1833 = vpop.f32.mrf.mxu0
      %v1834 = vadd.f32 %v1665, %v1833
      %1835 = vmatmul.bf16.gmra.mxu0 %v587
      %v1836 = vpop.f32.mrf.mxu0
      %v1837 = vadd.f32 %v1668, %v1836
      %v1838 = vpop.f32.mrf.mxu0
      %v1839 = vadd.f32 %v1670, %v1838
      %1840 = vmatmul.bf16.gmra.mxu0 %v589
      %v1841 = vpop.f32.mrf.mxu0
      %v1842 = vadd.f32 %v1673, %v1841
      %v1843 = vpop.f32.mrf.mxu0
      %v1844 = vadd.f32 %v1675, %v1843
      %1845 = vmatmul.bf16.gmra.mxu0 %v591
      %v1846 = vpop.f32.mrf.mxu0
      %v1847 = vadd.f32 %v1678, %v1846
      %v1848 = vpop.f32.mrf.mxu0
      %v1849 = vadd.f32 %v1680, %v1848
      %1850 = vmatmul.bf16.gmra.mxu0 %v593
      %v1851 = vpop.f32.mrf.mxu0
      %v1852 = vadd.f32 %v1683, %v1851
      %v1853 = vpop.f32.mrf.mxu0
      %v1854 = vadd.f32 %v1685, %v1853
      %1855 = vmatmul.bf16.gmra.mxu0 %v595
      %v1856 = vpop.f32.mrf.mxu0
      %v1857 = vadd.f32 %v1688, %v1856
      %v1858 = vpop.f32.mrf.mxu0
      %v1859 = vadd.f32 %v1690, %v1858
      %1860 = vmatmul.bf16.gmra.mxu0 %v597
      %v1861 = vpop.f32.mrf.mxu0
      %v1862 = vadd.f32 %v1693, %v1861
      %v1863 = vpop.f32.mrf.mxu0
      %v1864 = vadd.f32 %v1695, %v1863
      %1865 = vmatmul.bf16.gmra.mxu0 %v599
      %v1866 = vpop.f32.mrf.mxu0
      %v1867 = vadd.f32 %v1698, %v1866
      %v1868 = vpop.f32.mrf.mxu0
      %v1869 = vadd.f32 %v1700, %v1868
      %1870 = vmatmul.bf16.gmra.mxu0 %v601
      %v1871 = vpop.f32.mrf.mxu0
      %v1872 = vadd.f32 %v1703, %v1871
      %v1873 = vpop.f32.mrf.mxu0
      %v1874 = vadd.f32 %v1705, %v1873
      %1875 = vmatmul.bf16.gmra.mxu0 %v603
      %v1876 = vpop.f32.mrf.mxu0
      %v1877 = vadd.f32 %v1708, %v1876
      %v1878 = vpop.f32.mrf.mxu0
      %v1879 = vadd.f32 %v1710, %v1878
      %1880 = vmatmul.bf16.gmra.mxu0 %v605
      %v1881 = vpop.f32.mrf.mxu0
      %v1882 = vadd.f32 %v1713, %v1881
      %v1883 = vpop.f32.mrf.mxu0
      %v1884 = vadd.f32 %v1715, %v1883
      %1885 = vmatmul.bf16.gmra.mxu0 %v607
      %v1886 = vpop.f32.mrf.mxu0
      %v1887 = vadd.f32 %v1718, %v1886
      %v1888 = vpop.f32.mrf.mxu0
      %v1889 = vadd.f32 %v1720, %v1888
      %1890 = vmatmul.bf16.gmra.mxu0 %v609
      %v1891 = vpop.f32.mrf.mxu0
      %v1892 = vadd.f32 %v1723, %v1891
      %v1893 = vpop.f32.mrf.mxu0
      %v1894 = vadd.f32 %v1725, %v1893
      %1895 = vmatmul.bf16.gmra.mxu0 %v611
      %v1896 = vpop.f32.mrf.mxu0
      %v1897 = vadd.f32 %v1728, %v1896
      %v1898 = vpop.f32.mrf.mxu0
      %v1899 = vadd.f32 %v1730, %v1898
      %1900 = vmatmul.bf16.gmra.mxu0 %v613
      %v1901 = vpop.f32.mrf.mxu0
      %v1902 = vadd.f32 %v1733, %v1901
      %v1903 = vpop.f32.mrf.mxu0
      %v1904 = vadd.f32 %v1735, %v1903
      %1905 = vmatmul.bf16.gmra.mxu0 %v615
      %v1906 = vpop.f32.mrf.mxu0
      %v1907 = vadd.f32 %v1738, %v1906
      %v1908 = vpop.f32.mrf.mxu0
      %v1909 = vadd.f32 %v1740, %v1908
      %1910 = vmatmul.bf16.gmra.mxu0 %v617
      %v1911 = vpop.f32.mrf.mxu0
      %v1912 = vadd.f32 %v1743, %v1911
      %v1913 = vpop.f32.mrf.mxu0
      %v1914 = vadd.f32 %v1745, %v1913
      %1915 = vmatmul.bf16.gmra.mxu0 %v619
      %v1916 = vpop.f32.mrf.mxu0
      %v1917 = vadd.f32 %v1748, %v1916
      %v1918 = vpop.f32.mrf.mxu0
      %v1919 = vadd.f32 %v1750, %v1918
      %1920 = vmatmul.bf16.gmra.mxu0 %v621
      %v1921 = vpop.f32.mrf.mxu0
      %v1922 = vadd.f32 %v1753, %v1921
      %v1923 = vpop.f32.mrf.mxu0
      %v1924 = vadd.f32 %v1755, %v1923
      %1925 = vmatmul.bf16.gmra.mxu0 %v623
      %v1926 = vpop.f32.mrf.mxu0
      %v1927 = vadd.f32 %v1758, %v1926
      %v1928 = vpop.f32.mrf.mxu0
      %v1929 = vadd.f32 %v1760, %v1928
      %1930 = vmatmul.bf16.gmra.mxu0 %v625
      %v1931 = vpop.f32.mrf.mxu0
      %v1932 = vadd.f32 %v1763, %v1931
      %v1933 = vpop.f32.mrf.mxu0
      %v1934 = vadd.f32 %v1765, %v1933
      %1935 = vmatmul.bf16.gmra.mxu0 %v627
      %v1936 = vpop.f32.mrf.mxu0
      %v1937 = vadd.f32 %v1768, %v1936
      %v1938 = vpop.f32.mrf.mxu0
      %v1939 = vadd.f32 %v1770, %v1938
      %1940 = vmatmul.bf16.gmra.mxu0 %v629
      %v1941 = vpop.f32.mrf.mxu0
      %v1942 = vadd.f32 %v1773, %v1941
      %v1943 = vpop.f32.mrf.mxu0
      %v1944 = vadd.f32 %v1775, %v1943
      %1945 = vmatmul.bf16.gmra.mxu0 %v631
      %v1946 = vpop.f32.mrf.mxu0
      %v1947 = vadd.f32 %v1778, %v1946
      %v1948 = vpop.f32.mrf.mxu0
      %v1949 = vadd.f32 %v1780, %v1948
      %1950 = vmatmul.bf16.gmra.mxu0 %v633
      %v1951 = vpop.f32.mrf.mxu0
      %v1952 = vadd.f32 %v1783, %v1951
      %v1953 = vpop.f32.mrf.mxu0
      %v1954 = vadd.f32 %v1785, %v1953
      %1955 = vmatmul.bf16.gmra.mxu0 %v635
      %v1956 = vpop.f32.mrf.mxu0
      %v1957 = vadd.f32 %v1788, %v1956
      %v1958 = vpop.f32.mrf.mxu0
      %v1959 = vadd.f32 %v1790, %v1958
      %1960 = vmatmul.bf16.gmra.mxu0 %v637
      %v1961 = vpop.f32.mrf.mxu0
      %v1962 = vadd.f32 %v1793, %v1961
      %v1963 = vpop.f32.mrf.mxu0
      %v1964 = vadd.f32 %v1795, %v1963
      %1965 = vmatmul.bf16.gmra.mxu0 %v639
      %v1966 = vpop.f32.mrf.mxu0
      %v1967 = vadd.f32 %v1798, %v1966
      %v1968 = vpop.f32.mrf.mxu0
      %v1969 = vadd.f32 %v1800, %v1968
      %1970 = vmatmul.bf16.gmra.mxu0 %v641
      %v1971 = vpop.f32.mrf.mxu0
      %v1972 = vadd.f32 %v1803, %v1971
      %v1973 = vpop.f32.mrf.mxu0
      %v1974 = vadd.f32 %v1805, %v1973
      %1975 = vdwg.mxu0
      %1976 = vrot.lane.b32.xlu0 %v1141, 64
      %v1977 = vpop.permute.xlu0 %1976
      %1978 = vrot.lane.b32.xlu0 %v1143, 64
      %v1979 = vpop.permute.xlu0 %1978
      %1980 = vrot.lane.b32.xlu0 %v1146, 64
      %v1981 = vpop.permute.xlu0 %1980
      %1982 = vrot.lane.b32.xlu0 %v1148, 64
      %v1983 = vpop.permute.xlu0 %1982
      %1984 = vrot.lane.b32.xlu0 %v1151, 64
      %v1985 = vpop.permute.xlu0 %1984
      %1986 = vrot.lane.b32.xlu0 %v1153, 64
      %v1987 = vpop.permute.xlu0 %1986
      %1988 = vrot.lane.b32.xlu0 %v1156, 64
      %v1989 = vpop.permute.xlu0 %1988
      %1990 = vrot.lane.b32.xlu0 %v1158, 64
      %v1991 = vpop.permute.xlu0 %1990
      %1992 = vrot.lane.b32.xlu0 %v1161, 64
      %v1993 = vpop.permute.xlu0 %1992
      %1994 = vrot.lane.b32.xlu0 %v1163, 64
      %v1995 = vpop.permute.xlu0 %1994
      %1996 = vrot.lane.b32.xlu0 %v1166, 64
      %v1997 = vpop.permute.xlu0 %1996
      %1998 = vrot.lane.b32.xlu0 %v1168, 64
      %v1999 = vpop.permute.xlu0 %1998
      %2000 = vrot.lane.b32.xlu0 %v1171, 64
      %v2001 = vpop.permute.xlu0 %2000
      %2002 = vrot.lane.b32.xlu0 %v1173, 64
      %v2003 = vpop.permute.xlu0 %2002
      %2004 = vrot.lane.b32.xlu0 %v1176, 64
      %v2005 = vpop.permute.xlu0 %2004
      %2006 = vrot.lane.b32.xlu0 %v1178, 64
      %v2007 = vpop.permute.xlu0 %2006
      %2008 = vrot.lane.b32.xlu0 %v1181, 64
      %v2009 = vpop.permute.xlu0 %2008
      %2010 = vrot.lane.b32.xlu0 %v1183, 64
      %v2011 = vpop.permute.xlu0 %2010
      %2012 = vrot.lane.b32.xlu0 %v1186, 64
      %v2013 = vpop.permute.xlu0 %2012
      %2014 = vrot.lane.b32.xlu0 %v1188, 64
      %v2015 = vpop.permute.xlu0 %2014
      %2016 = vrot.lane.b32.xlu0 %v1191, 64
      %v2017 = vpop.permute.xlu0 %2016
      %2018 = vrot.lane.b32.xlu0 %v1193, 64
      %v2019 = vpop.permute.xlu0 %2018
      %2020 = vrot.lane.b32.xlu0 %v1196, 64
      %v2021 = vpop.permute.xlu0 %2020
      %2022 = vrot.lane.b32.xlu0 %v1198, 64
      %v2023 = vpop.permute.xlu0 %2022
      %2024 = vrot.lane.b32.xlu0 %v1201, 64
      %v2025 = vpop.permute.xlu0 %2024
      %2026 = vrot.lane.b32.xlu0 %v1203, 64
      %v2027 = vpop.permute.xlu0 %2026
      %2028 = vrot.lane.b32.xlu0 %v1206, 64
      %v2029 = vpop.permute.xlu0 %2028
      %2030 = vrot.lane.b32.xlu0 %v1208, 64
      %v2031 = vpop.permute.xlu0 %2030
      %2032 = vrot.lane.b32.xlu0 %v1211, 64
      %v2033 = vpop.permute.xlu0 %2032
      %2034 = vrot.lane.b32.xlu0 %v1213, 64
      %v2035 = vpop.permute.xlu0 %2034
      %2036 = vrot.lane.b32.xlu0 %v1216, 64
      %v2037 = vpop.permute.xlu0 %2036
      %2038 = vrot.lane.b32.xlu0 %v1218, 64
      %v2039 = vpop.permute.xlu0 %2038
      %2040 = vrot.lane.b32.xlu0 %v1221, 64
      %v2041 = vpop.permute.xlu0 %2040
      %2042 = vrot.lane.b32.xlu0 %v1223, 64
      %v2043 = vpop.permute.xlu0 %2042
      %2044 = vrot.lane.b32.xlu0 %v1226, 64
      %v2045 = vpop.permute.xlu0 %2044
      %2046 = vrot.lane.b32.xlu0 %v1228, 64
      %v2047 = vpop.permute.xlu0 %2046
      %2048 = vrot.lane.b32.xlu0 %v1231, 64
      %v2049 = vpop.permute.xlu0 %2048
      %2050 = vrot.lane.b32.xlu0 %v1233, 64
      %v2051 = vpop.permute.xlu0 %2050
      %2052 = vrot.lane.b32.xlu0 %v1236, 64
      %v2053 = vpop.permute.xlu0 %2052
      %2054 = vrot.lane.b32.xlu0 %v1238, 64
      %v2055 = vpop.permute.xlu0 %2054
      %2056 = vrot.lane.b32.xlu0 %v1241, 64
      %v2057 = vpop.permute.xlu0 %2056
      %2058 = vrot.lane.b32.xlu0 %v1243, 64
      %v2059 = vpop.permute.xlu0 %2058
      %2060 = vrot.lane.b32.xlu0 %v1246, 64
      %v2061 = vpop.permute.xlu0 %2060
      %2062 = vrot.lane.b32.xlu0 %v1248, 64
      %v2063 = vpop.permute.xlu0 %2062
      %2064 = vrot.lane.b32.xlu0 %v1251, 64
      %v2065 = vpop.permute.xlu0 %2064
      %2066 = vrot.lane.b32.xlu0 %v1253, 64
      %v2067 = vpop.permute.xlu0 %2066
      %2068 = vrot.lane.b32.xlu0 %v1256, 64
      %v2069 = vpop.permute.xlu0 %2068
      %2070 = vrot.lane.b32.xlu0 %v1258, 64
      %v2071 = vpop.permute.xlu0 %2070
      %2072 = vrot.lane.b32.xlu0 %v1261, 64
      %v2073 = vpop.permute.xlu0 %2072
      %2074 = vrot.lane.b32.xlu0 %v1263, 64
      %v2075 = vpop.permute.xlu0 %2074
      %2076 = vrot.lane.b32.xlu0 %v1266, 64
      %v2077 = vpop.permute.xlu0 %2076
      %2078 = vrot.lane.b32.xlu0 %v1268, 64
      %v2079 = vpop.permute.xlu0 %2078
      %2080 = vrot.lane.b32.xlu0 %v1271, 64
      %v2081 = vpop.permute.xlu0 %2080
      %2082 = vrot.lane.b32.xlu0 %v1273, 64
      %v2083 = vpop.permute.xlu0 %2082
      %2084 = vrot.lane.b32.xlu0 %v1276, 64
      %v2085 = vpop.permute.xlu0 %2084
      %2086 = vrot.lane.b32.xlu0 %v1278, 64
      %v2087 = vpop.permute.xlu0 %2086
      %2088 = vrot.lane.b32.xlu0 %v1281, 64
      %v2089 = vpop.permute.xlu0 %2088
      %2090 = vrot.lane.b32.xlu0 %v1283, 64
      %v2091 = vpop.permute.xlu0 %2090
      %2092 = vrot.lane.b32.xlu0 %v1286, 64
      %v2093 = vpop.permute.xlu0 %2092
      %2094 = vrot.lane.b32.xlu0 %v1288, 64
      %v2095 = vpop.permute.xlu0 %2094
      %2096 = vrot.lane.b32.xlu0 %v1291, 64
      %v2097 = vpop.permute.xlu0 %2096
      %2098 = vrot.lane.b32.xlu0 %v1293, 64
      %v2099 = vpop.permute.xlu0 %2098
      %2100 = vrot.lane.b32.xlu0 %v1296, 64
      %v2101 = vpop.permute.xlu0 %2100
      %2102 = vrot.lane.b32.xlu0 %v1298, 64
      %v2103 = vpop.permute.xlu0 %2102
      %2104 = vrot.lane.b32.xlu0 %v1479, 64
      %v2105 = vpop.permute.xlu0 %2104
      %2106 = vrot.lane.b32.xlu0 %v1481, 64
      %v2107 = vpop.permute.xlu0 %2106
      %2108 = vrot.lane.b32.xlu0 %v1484, 64
      %v2109 = vpop.permute.xlu0 %2108
      %2110 = vrot.lane.b32.xlu0 %v1486, 64
      %v2111 = vpop.permute.xlu0 %2110
      %2112 = vrot.lane.b32.xlu0 %v1489, 64
      %v2113 = vpop.permute.xlu0 %2112
      %2114 = vrot.lane.b32.xlu0 %v1491, 64
      %v2115 = vpop.permute.xlu0 %2114
      %2116 = vrot.lane.b32.xlu0 %v1494, 64
      %v2117 = vpop.permute.xlu0 %2116
      %2118 = vrot.lane.b32.xlu0 %v1496, 64
      %v2119 = vpop.permute.xlu0 %2118
      %2120 = vrot.lane.b32.xlu0 %v1499, 64
      %v2121 = vpop.permute.xlu0 %2120
      %2122 = vrot.lane.b32.xlu0 %v1501, 64
      %v2123 = vpop.permute.xlu0 %2122
      %2124 = vrot.lane.b32.xlu0 %v1504, 64
      %v2125 = vpop.permute.xlu0 %2124
      %2126 = vrot.lane.b32.xlu0 %v1506, 64
      %v2127 = vpop.permute.xlu0 %2126
      %2128 = vrot.lane.b32.xlu0 %v1509, 64
      %v2129 = vpop.permute.xlu0 %2128
      %2130 = vrot.lane.b32.xlu0 %v1511, 64
      %v2131 = vpop.permute.xlu0 %2130
      %2132 = vrot.lane.b32.xlu0 %v1514, 64
      %v2133 = vpop.permute.xlu0 %2132
      %2134 = vrot.lane.b32.xlu0 %v1516, 64
      %v2135 = vpop.permute.xlu0 %2134
      %2136 = vrot.lane.b32.xlu0 %v1519, 64
      %v2137 = vpop.permute.xlu0 %2136
      %2138 = vrot.lane.b32.xlu0 %v1521, 64
      %v2139 = vpop.permute.xlu0 %2138
      %2140 = vrot.lane.b32.xlu0 %v1524, 64
      %v2141 = vpop.permute.xlu0 %2140
      %2142 = vrot.lane.b32.xlu0 %v1526, 64
      %v2143 = vpop.permute.xlu0 %2142
      %2144 = vrot.lane.b32.xlu0 %v1529, 64
      %v2145 = vpop.permute.xlu0 %2144
      %2146 = vrot.lane.b32.xlu0 %v1531, 64
      %v2147 = vpop.permute.xlu0 %2146
      %2148 = vrot.lane.b32.xlu0 %v1534, 64
      %v2149 = vpop.permute.xlu0 %2148
      %2150 = vrot.lane.b32.xlu0 %v1536, 64
      %v2151 = vpop.permute.xlu0 %2150
      %2152 = vrot.lane.b32.xlu0 %v1539, 64
      %v2153 = vpop.permute.xlu0 %2152
      %2154 = vrot.lane.b32.xlu0 %v1541, 64
      %v2155 = vpop.permute.xlu0 %2154
      %2156 = vrot.lane.b32.xlu0 %v1544, 64
      %v2157 = vpop.permute.xlu0 %2156
      %2158 = vrot.lane.b32.xlu0 %v1546, 64
      %v2159 = vpop.permute.xlu0 %2158
      %2160 = vrot.lane.b32.xlu0 %v1549, 64
      %v2161 = vpop.permute.xlu0 %2160
      %2162 = vrot.lane.b32.xlu0 %v1551, 64
      %v2163 = vpop.permute.xlu0 %2162
      %2164 = vrot.lane.b32.xlu0 %v1554, 64
      %v2165 = vpop.permute.xlu0 %2164
      %2166 = vrot.lane.b32.xlu0 %v1556, 64
      %v2167 = vpop.permute.xlu0 %2166
      %2168 = vrot.lane.b32.xlu0 %v1559, 64
      %v2169 = vpop.permute.xlu0 %2168
      %2170 = vrot.lane.b32.xlu0 %v1561, 64
      %v2171 = vpop.permute.xlu0 %2170
      %2172 = vrot.lane.b32.xlu0 %v1564, 64
      %v2173 = vpop.permute.xlu0 %2172
      %2174 = vrot.lane.b32.xlu0 %v1566, 64
      %v2175 = vpop.permute.xlu0 %2174
      %2176 = vrot.lane.b32.xlu0 %v1569, 64
      %v2177 = vpop.permute.xlu0 %2176
      %2178 = vrot.lane.b32.xlu0 %v1571, 64
      %v2179 = vpop.permute.xlu0 %2178
      %2180 = vrot.lane.b32.xlu0 %v1574, 64
      %v2181 = vpop.permute.xlu0 %2180
      %2182 = vrot.lane.b32.xlu0 %v1576, 64
      %v2183 = vpop.permute.xlu0 %2182
      %2184 = vrot.lane.b32.xlu0 %v1579, 64
      %v2185 = vpop.permute.xlu0 %2184
      %2186 = vrot.lane.b32.xlu0 %v1581, 64
      %v2187 = vpop.permute.xlu0 %2186
      %2188 = vrot.lane.b32.xlu0 %v1584, 64
      %v2189 = vpop.permute.xlu0 %2188
      %2190 = vrot.lane.b32.xlu0 %v1586, 64
      %v2191 = vpop.permute.xlu0 %2190
      %2192 = vrot.lane.b32.xlu0 %v1589, 64
      %v2193 = vpop.permute.xlu0 %2192
      %2194 = vrot.lane.b32.xlu0 %v1591, 64
      %v2195 = vpop.permute.xlu0 %2194
      %2196 = vrot.lane.b32.xlu0 %v1594, 64
      %v2197 = vpop.permute.xlu0 %2196
      %2198 = vrot.lane.b32.xlu0 %v1596, 64
      %v2199 = vpop.permute.xlu0 %2198
      %2200 = vrot.lane.b32.xlu0 %v1599, 64
      %v2201 = vpop.permute.xlu0 %2200
      %2202 = vrot.lane.b32.xlu0 %v1601, 64
      %v2203 = vpop.permute.xlu0 %2202
      %2204 = vrot.lane.b32.xlu0 %v1604, 64
      %v2205 = vpop.permute.xlu0 %2204
      %2206 = vrot.lane.b32.xlu0 %v1606, 64
      %v2207 = vpop.permute.xlu0 %2206
      %2208 = vrot.lane.b32.xlu0 %v1609, 64
      %v2209 = vpop.permute.xlu0 %2208
      %2210 = vrot.lane.b32.xlu0 %v1611, 64
      %v2211 = vpop.permute.xlu0 %2210
      %2212 = vrot.lane.b32.xlu0 %v1614, 64
      %v2213 = vpop.permute.xlu0 %2212
      %2214 = vrot.lane.b32.xlu0 %v1616, 64
      %v2215 = vpop.permute.xlu0 %2214
      %2216 = vrot.lane.b32.xlu0 %v1619, 64
      %v2217 = vpop.permute.xlu0 %2216
      %2218 = vrot.lane.b32.xlu0 %v1621, 64
      %v2219 = vpop.permute.xlu0 %2218
      %2220 = vrot.lane.b32.xlu0 %v1624, 64
      %v2221 = vpop.permute.xlu0 %2220
      %2222 = vrot.lane.b32.xlu0 %v1626, 64
      %v2223 = vpop.permute.xlu0 %2222
      %2224 = vrot.lane.b32.xlu0 %v1629, 64
      %v2225 = vpop.permute.xlu0 %2224
      %2226 = vrot.lane.b32.xlu0 %v1631, 64
      %v2227 = vpop.permute.xlu0 %2226
      %2228 = vrot.lane.b32.xlu0 %v1634, 64
      %v2229 = vpop.permute.xlu0 %2228
      %2230 = vrot.lane.b32.xlu0 %v1636, 64
      %v2231 = vpop.permute.xlu0 %2230
      %vm2296 = vcmask 1046528
      %v2297 = vrot.slane %v1977, 1
      %v2298 = vrot.slane %v1979, 1
      %v2299 = vsel %vm2296, %v2297, %v2298
      %v2300 = vrot.slane %v1981, 1
      %v2301 = vrot.slane %v1983, 1
      %v2302 = vsel %vm2296, %v2300, %v2301
      %v2303 = vrot.slane %v1985, 1
      %v2304 = vrot.slane %v1987, 1
      %v2305 = vsel %vm2296, %v2303, %v2304
      %v2306 = vrot.slane %v1989, 1
      %v2307 = vrot.slane %v1991, 1
      %v2308 = vsel %vm2296, %v2306, %v2307
      %v2309 = vrot.slane %v1993, 1
      %v2310 = vrot.slane %v1995, 1
      %v2311 = vsel %vm2296, %v2309, %v2310
      %v2312 = vrot.slane %v1997, 1
      %v2313 = vrot.slane %v1999, 1
      %v2314 = vsel %vm2296, %v2312, %v2313
      %v2315 = vrot.slane %v2001, 1
      %v2316 = vrot.slane %v2003, 1
      %v2317 = vsel %vm2296, %v2315, %v2316
      %v2318 = vrot.slane %v2005, 1
      %v2319 = vrot.slane %v2007, 1
      %v2320 = vsel %vm2296, %v2318, %v2319
      %v2321 = vrot.slane %v2009, 1
      %v2322 = vrot.slane %v2011, 1
      %v2323 = vsel %vm2296, %v2321, %v2322
      %v2324 = vrot.slane %v2013, 1
      %v2325 = vrot.slane %v2015, 1
      %v2326 = vsel %vm2296, %v2324, %v2325
      %v2327 = vrot.slane %v2017, 1
      %v2328 = vrot.slane %v2019, 1
      %v2329 = vsel %vm2296, %v2327, %v2328
      %v2330 = vrot.slane %v2021, 1
      %v2331 = vrot.slane %v2023, 1
      %v2332 = vsel %vm2296, %v2330, %v2331
      %v2333 = vrot.slane %v2025, 1
      %v2334 = vrot.slane %v2027, 1
      %v2335 = vsel %vm2296, %v2333, %v2334
      %v2336 = vrot.slane %v2029, 1
      %v2337 = vrot.slane %v2031, 1
      %v2338 = vsel %vm2296, %v2336, %v2337
      %v2339 = vrot.slane %v2033, 1
      %v2340 = vrot.slane %v2035, 1
      %v2341 = vsel %vm2296, %v2339, %v2340
      %v2342 = vrot.slane %v2037, 1
      %v2343 = vrot.slane %v2039, 1
      %v2344 = vsel %vm2296, %v2342, %v2343
      %v2345 = vrot.slane %v2041, 1
      %v2346 = vrot.slane %v2043, 1
      %v2347 = vsel %vm2296, %v2345, %v2346
      %v2348 = vrot.slane %v2045, 1
      %v2349 = vrot.slane %v2047, 1
      %v2350 = vsel %vm2296, %v2348, %v2349
      %v2351 = vrot.slane %v2049, 1
      %v2352 = vrot.slane %v2051, 1
      %v2353 = vsel %vm2296, %v2351, %v2352
      %v2354 = vrot.slane %v2053, 1
      %v2355 = vrot.slane %v2055, 1
      %v2356 = vsel %vm2296, %v2354, %v2355
      %v2357 = vrot.slane %v2057, 1
      %v2358 = vrot.slane %v2059, 1
      %v2359 = vsel %vm2296, %v2357, %v2358
      %v2360 = vrot.slane %v2061, 1
      %v2361 = vrot.slane %v2063, 1
      %v2362 = vsel %vm2296, %v2360, %v2361
      %v2363 = vrot.slane %v2065, 1
      %v2364 = vrot.slane %v2067, 1
      %v2365 = vsel %vm2296, %v2363, %v2364
      %v2366 = vrot.slane %v2069, 1
      %v2367 = vrot.slane %v2071, 1
      %v2368 = vsel %vm2296, %v2366, %v2367
      %v2369 = vrot.slane %v2073, 1
      %v2370 = vrot.slane %v2075, 1
      %v2371 = vsel %vm2296, %v2369, %v2370
      %v2372 = vrot.slane %v2077, 1
      %v2373 = vrot.slane %v2079, 1
      %v2374 = vsel %vm2296, %v2372, %v2373
      %v2375 = vrot.slane %v2081, 1
      %v2376 = vrot.slane %v2083, 1
      %v2377 = vsel %vm2296, %v2375, %v2376
      %v2378 = vrot.slane %v2085, 1
      %v2379 = vrot.slane %v2087, 1
      %v2380 = vsel %vm2296, %v2378, %v2379
      %v2381 = vrot.slane %v2089, 1
      %v2382 = vrot.slane %v2091, 1
      %v2383 = vsel %vm2296, %v2381, %v2382
      %v2384 = vrot.slane %v2093, 1
      %v2385 = vrot.slane %v2095, 1
      %v2386 = vsel %vm2296, %v2384, %v2385
      %v2387 = vrot.slane %v2097, 1
      %v2388 = vrot.slane %v2099, 1
      %v2389 = vsel %vm2296, %v2387, %v2388
      %v2390 = vrot.slane %v2101, 1
      %v2391 = vrot.slane %v2103, 1
      %v2392 = vsel %vm2296, %v2390, %v2391
      %v2457 = vadd.f32 %v1141, %v2299
      %v2458 = vadd.f32 %v1143, %v2298
      %v2459 = vadd.f32 %v1146, %v2302
      %v2460 = vadd.f32 %v1148, %v2301
      %v2461 = vadd.f32 %v1151, %v2305
      %v2462 = vadd.f32 %v1153, %v2304
      %v2463 = vadd.f32 %v1156, %v2308
      %v2464 = vadd.f32 %v1158, %v2307
      %v2465 = vadd.f32 %v1161, %v2311
      %v2466 = vadd.f32 %v1163, %v2310
      %v2467 = vadd.f32 %v1166, %v2314
      %v2468 = vadd.f32 %v1168, %v2313
      %v2469 = vadd.f32 %v1171, %v2317
      %v2470 = vadd.f32 %v1173, %v2316
      %v2471 = vadd.f32 %v1176, %v2320
      %v2472 = vadd.f32 %v1178, %v2319
      %v2473 = vadd.f32 %v1181, %v2323
      %v2474 = vadd.f32 %v1183, %v2322
      %v2475 = vadd.f32 %v1186, %v2326
      %v2476 = vadd.f32 %v1188, %v2325
      %v2477 = vadd.f32 %v1191, %v2329
      %v2478 = vadd.f32 %v1193, %v2328
      %v2479 = vadd.f32 %v1196, %v2332
      %v2480 = vadd.f32 %v1198, %v2331
      %v2481 = vadd.f32 %v1201, %v2335
      %v2482 = vadd.f32 %v1203, %v2334
      %v2483 = vadd.f32 %v1206, %v2338
      %v2484 = vadd.f32 %v1208, %v2337
      %v2485 = vadd.f32 %v1211, %v2341
      %v2486 = vadd.f32 %v1213, %v2340
      %v2487 = vadd.f32 %v1216, %v2344
      %v2488 = vadd.f32 %v1218, %v2343
      %v2489 = vadd.f32 %v1221, %v2347
      %v2490 = vadd.f32 %v1223, %v2346
      %v2491 = vadd.f32 %v1226, %v2350
      %v2492 = vadd.f32 %v1228, %v2349
      %v2493 = vadd.f32 %v1231, %v2353
      %v2494 = vadd.f32 %v1233, %v2352
      %v2495 = vadd.f32 %v1236, %v2356
      %v2496 = vadd.f32 %v1238, %v2355
      %v2497 = vadd.f32 %v1241, %v2359
      %v2498 = vadd.f32 %v1243, %v2358
      %v2499 = vadd.f32 %v1246, %v2362
      %v2500 = vadd.f32 %v1248, %v2361
      %v2501 = vadd.f32 %v1251, %v2365
      %v2502 = vadd.f32 %v1253, %v2364
      %v2503 = vadd.f32 %v1256, %v2368
      %v2504 = vadd.f32 %v1258, %v2367
      %v2505 = vadd.f32 %v1261, %v2371
      %v2506 = vadd.f32 %v1263, %v2370
      %v2507 = vadd.f32 %v1266, %v2374
      %v2508 = vadd.f32 %v1268, %v2373
      %v2509 = vadd.f32 %v1271, %v2377
      %v2510 = vadd.f32 %v1273, %v2376
      %v2511 = vadd.f32 %v1276, %v2380
      %v2512 = vadd.f32 %v1278, %v2379
      %v2513 = vadd.f32 %v1281, %v2383
      %v2514 = vadd.f32 %v1283, %v2382
      %v2515 = vadd.f32 %v1286, %v2386
      %v2516 = vadd.f32 %v1288, %v2385
      %v2517 = vadd.f32 %v1291, %v2389
      %v2518 = vadd.f32 %v1293, %v2388
      %v2519 = vadd.f32 %v1296, %v2392
      %v2520 = vadd.f32 %v1298, %v2391
      %vm2585 = vcmask 1045504
      %v2586 = vrot.slane %v1479, 2
      %v2587 = vrot.slane %v1481, 2
      %v2588 = vsel %vm2585, %v2586, %v2587
      %v2589 = vrot.slane %v1484, 2
      %v2590 = vrot.slane %v1486, 2
      %v2591 = vsel %vm2585, %v2589, %v2590
      %v2592 = vrot.slane %v1489, 2
      %v2593 = vrot.slane %v1491, 2
      %v2594 = vsel %vm2585, %v2592, %v2593
      %v2595 = vrot.slane %v1494, 2
      %v2596 = vrot.slane %v1496, 2
      %v2597 = vsel %vm2585, %v2595, %v2596
      %v2598 = vrot.slane %v1499, 2
      %v2599 = vrot.slane %v1501, 2
      %v2600 = vsel %vm2585, %v2598, %v2599
      %v2601 = vrot.slane %v1504, 2
      %v2602 = vrot.slane %v1506, 2
      %v2603 = vsel %vm2585, %v2601, %v2602
      %v2604 = vrot.slane %v1509, 2
      %v2605 = vrot.slane %v1511, 2
      %v2606 = vsel %vm2585, %v2604, %v2605
      %v2607 = vrot.slane %v1514, 2
      %v2608 = vrot.slane %v1516, 2
      %v2609 = vsel %vm2585, %v2607, %v2608
      %v2610 = vrot.slane %v1519, 2
      %v2611 = vrot.slane %v1521, 2
      %v2612 = vsel %vm2585, %v2610, %v2611
      %v2613 = vrot.slane %v1524, 2
      %v2614 = vrot.slane %v1526, 2
      %v2615 = vsel %vm2585, %v2613, %v2614
      %v2616 = vrot.slane %v1529, 2
      %v2617 = vrot.slane %v1531, 2
      %v2618 = vsel %vm2585, %v2616, %v2617
      %v2619 = vrot.slane %v1534, 2
      %v2620 = vrot.slane %v1536, 2
      %v2621 = vsel %vm2585, %v2619, %v2620
      %v2622 = vrot.slane %v1539, 2
      %v2623 = vrot.slane %v1541, 2
      %v2624 = vsel %vm2585, %v2622, %v2623
      %v2625 = vrot.slane %v1544, 2
      %v2626 = vrot.slane %v1546, 2
      %v2627 = vsel %vm2585, %v2625, %v2626
      %v2628 = vrot.slane %v1549, 2
      %v2629 = vrot.slane %v1551, 2
      %v2630 = vsel %vm2585, %v2628, %v2629
      %v2631 = vrot.slane %v1554, 2
      %v2632 = vrot.slane %v1556, 2
      %v2633 = vsel %vm2585, %v2631, %v2632
      %v2634 = vrot.slane %v1559, 2
      %v2635 = vrot.slane %v1561, 2
      %v2636 = vsel %vm2585, %v2634, %v2635
      %v2637 = vrot.slane %v1564, 2
      %v2638 = vrot.slane %v1566, 2
      %v2639 = vsel %vm2585, %v2637, %v2638
      %v2640 = vrot.slane %v1569, 2
      %v2641 = vrot.slane %v1571, 2
      %v2642 = vsel %vm2585, %v2640, %v2641
      %v2643 = vrot.slane %v1574, 2
      %v2644 = vrot.slane %v1576, 2
      %v2645 = vsel %vm2585, %v2643, %v2644
      %v2646 = vrot.slane %v1579, 2
      %v2647 = vrot.slane %v1581, 2
      %v2648 = vsel %vm2585, %v2646, %v2647
      %v2649 = vrot.slane %v1584, 2
      %v2650 = vrot.slane %v1586, 2
      %v2651 = vsel %vm2585, %v2649, %v2650
      %v2652 = vrot.slane %v1589, 2
      %v2653 = vrot.slane %v1591, 2
      %v2654 = vsel %vm2585, %v2652, %v2653
      %v2655 = vrot.slane %v1594, 2
      %v2656 = vrot.slane %v1596, 2
      %v2657 = vsel %vm2585, %v2655, %v2656
      %v2658 = vrot.slane %v1599, 2
      %v2659 = vrot.slane %v1601, 2
      %v2660 = vsel %vm2585, %v2658, %v2659
      %v2661 = vrot.slane %v1604, 2
      %v2662 = vrot.slane %v1606, 2
      %v2663 = vsel %vm2585, %v2661, %v2662
      %v2664 = vrot.slane %v1609, 2
      %v2665 = vrot.slane %v1611, 2
      %v2666 = vsel %vm2585, %v2664, %v2665
      %v2667 = vrot.slane %v1614, 2
      %v2668 = vrot.slane %v1616, 2
      %v2669 = vsel %vm2585, %v2667, %v2668
      %v2670 = vrot.slane %v1619, 2
      %v2671 = vrot.slane %v1621, 2
      %v2672 = vsel %vm2585, %v2670, %v2671
      %v2673 = vrot.slane %v1624, 2
      %v2674 = vrot.slane %v1626, 2
      %v2675 = vsel %vm2585, %v2673, %v2674
      %v2676 = vrot.slane %v1629, 2
      %v2677 = vrot.slane %v1631, 2
      %v2678 = vsel %vm2585, %v2676, %v2677
      %v2679 = vrot.slane %v1634, 2
      %v2680 = vrot.slane %v1636, 2
      %v2681 = vsel %vm2585, %v2679, %v2680
      %v2746 = vadd.f32 %v2457, %v2588
      %v2747 = vadd.f32 %v2458, %v2587
      %v2748 = vadd.f32 %v2459, %v2591
      %v2749 = vadd.f32 %v2460, %v2590
      %v2750 = vadd.f32 %v2461, %v2594
      %v2751 = vadd.f32 %v2462, %v2593
      %v2752 = vadd.f32 %v2463, %v2597
      %v2753 = vadd.f32 %v2464, %v2596
      %v2754 = vadd.f32 %v2465, %v2600
      %v2755 = vadd.f32 %v2466, %v2599
      %v2756 = vadd.f32 %v2467, %v2603
      %v2757 = vadd.f32 %v2468, %v2602
      %v2758 = vadd.f32 %v2469, %v2606
      %v2759 = vadd.f32 %v2470, %v2605
      %v2760 = vadd.f32 %v2471, %v2609
      %v2761 = vadd.f32 %v2472, %v2608
      %v2762 = vadd.f32 %v2473, %v2612
      %v2763 = vadd.f32 %v2474, %v2611
      %v2764 = vadd.f32 %v2475, %v2615
      %v2765 = vadd.f32 %v2476, %v2614
      %v2766 = vadd.f32 %v2477, %v2618
      %v2767 = vadd.f32 %v2478, %v2617
      %v2768 = vadd.f32 %v2479, %v2621
      %v2769 = vadd.f32 %v2480, %v2620
      %v2770 = vadd.f32 %v2481, %v2624
      %v2771 = vadd.f32 %v2482, %v2623
      %v2772 = vadd.f32 %v2483, %v2627
      %v2773 = vadd.f32 %v2484, %v2626
      %v2774 = vadd.f32 %v2485, %v2630
      %v2775 = vadd.f32 %v2486, %v2629
      %v2776 = vadd.f32 %v2487, %v2633
      %v2777 = vadd.f32 %v2488, %v2632
      %v2778 = vadd.f32 %v2489, %v2636
      %v2779 = vadd.f32 %v2490, %v2635
      %v2780 = vadd.f32 %v2491, %v2639
      %v2781 = vadd.f32 %v2492, %v2638
      %v2782 = vadd.f32 %v2493, %v2642
      %v2783 = vadd.f32 %v2494, %v2641
      %v2784 = vadd.f32 %v2495, %v2645
      %v2785 = vadd.f32 %v2496, %v2644
      %v2786 = vadd.f32 %v2497, %v2648
      %v2787 = vadd.f32 %v2498, %v2647
      %v2788 = vadd.f32 %v2499, %v2651
      %v2789 = vadd.f32 %v2500, %v2650
      %v2790 = vadd.f32 %v2501, %v2654
      %v2791 = vadd.f32 %v2502, %v2653
      %v2792 = vadd.f32 %v2503, %v2657
      %v2793 = vadd.f32 %v2504, %v2656
      %v2794 = vadd.f32 %v2505, %v2660
      %v2795 = vadd.f32 %v2506, %v2659
      %v2796 = vadd.f32 %v2507, %v2663
      %v2797 = vadd.f32 %v2508, %v2662
      %v2798 = vadd.f32 %v2509, %v2666
      %v2799 = vadd.f32 %v2510, %v2665
      %v2800 = vadd.f32 %v2511, %v2669
      %v2801 = vadd.f32 %v2512, %v2668
      %v2802 = vadd.f32 %v2513, %v2672
      %v2803 = vadd.f32 %v2514, %v2671
      %v2804 = vadd.f32 %v2515, %v2675
      %v2805 = vadd.f32 %v2516, %v2674
      %v2806 = vadd.f32 %v2517, %v2678
      %v2807 = vadd.f32 %v2518, %v2677
      %v2808 = vadd.f32 %v2519, %v2681
      %v2809 = vadd.f32 %v2520, %v2680
      %vm2874 = vcmask 1044480
      %v2875 = vrot.slane %v2105, 3
      %v2876 = vrot.slane %v2107, 3
      %v2877 = vsel %vm2874, %v2875, %v2876
      %v2878 = vrot.slane %v2109, 3
      %v2879 = vrot.slane %v2111, 3
      %v2880 = vsel %vm2874, %v2878, %v2879
      %v2881 = vrot.slane %v2113, 3
      %v2882 = vrot.slane %v2115, 3
      %v2883 = vsel %vm2874, %v2881, %v2882
      %v2884 = vrot.slane %v2117, 3
      %v2885 = vrot.slane %v2119, 3
      %v2886 = vsel %vm2874, %v2884, %v2885
      %v2887 = vrot.slane %v2121, 3
      %v2888 = vrot.slane %v2123, 3
      %v2889 = vsel %vm2874, %v2887, %v2888
      %v2890 = vrot.slane %v2125, 3
      %v2891 = vrot.slane %v2127, 3
      %v2892 = vsel %vm2874, %v2890, %v2891
      %v2893 = vrot.slane %v2129, 3
      %v2894 = vrot.slane %v2131, 3
      %v2895 = vsel %vm2874, %v2893, %v2894
      %v2896 = vrot.slane %v2133, 3
      %v2897 = vrot.slane %v2135, 3
      %v2898 = vsel %vm2874, %v2896, %v2897
      %v2899 = vrot.slane %v2137, 3
      %v2900 = vrot.slane %v2139, 3
      %v2901 = vsel %vm2874, %v2899, %v2900
      %v2902 = vrot.slane %v2141, 3
      %v2903 = vrot.slane %v2143, 3
      %v2904 = vsel %vm2874, %v2902, %v2903
      %v2905 = vrot.slane %v2145, 3
      %v2906 = vrot.slane %v2147, 3
      %v2907 = vsel %vm2874, %v2905, %v2906
      %v2908 = vrot.slane %v2149, 3
      %v2909 = vrot.slane %v2151, 3
      %v2910 = vsel %vm2874, %v2908, %v2909
      %v2911 = vrot.slane %v2153, 3
      %v2912 = vrot.slane %v2155, 3
      %v2913 = vsel %vm2874, %v2911, %v2912
      %v2914 = vrot.slane %v2157, 3
      %v2915 = vrot.slane %v2159, 3
      %v2916 = vsel %vm2874, %v2914, %v2915
      %v2917 = vrot.slane %v2161, 3
      %v2918 = vrot.slane %v2163, 3
      %v2919 = vsel %vm2874, %v2917, %v2918
      %v2920 = vrot.slane %v2165, 3
      %v2921 = vrot.slane %v2167, 3
      %v2922 = vsel %vm2874, %v2920, %v2921
      %v2923 = vrot.slane %v2169, 3
      %v2924 = vrot.slane %v2171, 3
      %v2925 = vsel %vm2874, %v2923, %v2924
      %v2926 = vrot.slane %v2173, 3
      %v2927 = vrot.slane %v2175, 3
      %v2928 = vsel %vm2874, %v2926, %v2927
      %v2929 = vrot.slane %v2177, 3
      %v2930 = vrot.slane %v2179, 3
      %v2931 = vsel %vm2874, %v2929, %v2930
      %v2932 = vrot.slane %v2181, 3
      %v2933 = vrot.slane %v2183, 3
      %v2934 = vsel %vm2874, %v2932, %v2933
      %v2935 = vrot.slane %v2185, 3
      %v2936 = vrot.slane %v2187, 3
      %v2937 = vsel %vm2874, %v2935, %v2936
      %v2938 = vrot.slane %v2189, 3
      %v2939 = vrot.slane %v2191, 3
      %v2940 = vsel %vm2874, %v2938, %v2939
      %v2941 = vrot.slane %v2193, 3
      %v2942 = vrot.slane %v2195, 3
      %v2943 = vsel %vm2874, %v2941, %v2942
      %v2944 = vrot.slane %v2197, 3
      %v2945 = vrot.slane %v2199, 3
      %v2946 = vsel %vm2874, %v2944, %v2945
      %v2947 = vrot.slane %v2201, 3
      %v2948 = vrot.slane %v2203, 3
      %v2949 = vsel %vm2874, %v2947, %v2948
      %v2950 = vrot.slane %v2205, 3
      %v2951 = vrot.slane %v2207, 3
      %v2952 = vsel %vm2874, %v2950, %v2951
      %v2953 = vrot.slane %v2209, 3
      %v2954 = vrot.slane %v2211, 3
      %v2955 = vsel %vm2874, %v2953, %v2954
      %v2956 = vrot.slane %v2213, 3
      %v2957 = vrot.slane %v2215, 3
      %v2958 = vsel %vm2874, %v2956, %v2957
      %v2959 = vrot.slane %v2217, 3
      %v2960 = vrot.slane %v2219, 3
      %v2961 = vsel %vm2874, %v2959, %v2960
      %v2962 = vrot.slane %v2221, 3
      %v2963 = vrot.slane %v2223, 3
      %v2964 = vsel %vm2874, %v2962, %v2963
      %v2965 = vrot.slane %v2225, 3
      %v2966 = vrot.slane %v2227, 3
      %v2967 = vsel %vm2874, %v2965, %v2966
      %v2968 = vrot.slane %v2229, 3
      %v2969 = vrot.slane %v2231, 3
      %v2970 = vsel %vm2874, %v2968, %v2969
      %v3035 = vadd.f32 %v2746, %v2877
      %v3036 = vadd.f32 %v2747, %v2876
      %v3037 = vadd.f32 %v2748, %v2880
      %v3038 = vadd.f32 %v2749, %v2879
      %v3039 = vadd.f32 %v2750, %v2883
      %v3040 = vadd.f32 %v2751, %v2882
      %v3041 = vadd.f32 %v2752, %v2886
      %v3042 = vadd.f32 %v2753, %v2885
      %v3043 = vadd.f32 %v2754, %v2889
      %v3044 = vadd.f32 %v2755, %v2888
      %v3045 = vadd.f32 %v2756, %v2892
      %v3046 = vadd.f32 %v2757, %v2891
      %v3047 = vadd.f32 %v2758, %v2895
      %v3048 = vadd.f32 %v2759, %v2894
      %v3049 = vadd.f32 %v2760, %v2898
      %v3050 = vadd.f32 %v2761, %v2897
      %v3051 = vadd.f32 %v2762, %v2901
      %v3052 = vadd.f32 %v2763, %v2900
      %v3053 = vadd.f32 %v2764, %v2904
      %v3054 = vadd.f32 %v2765, %v2903
      %v3055 = vadd.f32 %v2766, %v2907
      %v3056 = vadd.f32 %v2767, %v2906
      %v3057 = vadd.f32 %v2768, %v2910
      %v3058 = vadd.f32 %v2769, %v2909
      %v3059 = vadd.f32 %v2770, %v2913
      %v3060 = vadd.f32 %v2771, %v2912
      %v3061 = vadd.f32 %v2772, %v2916
      %v3062 = vadd.f32 %v2773, %v2915
      %v3063 = vadd.f32 %v2774, %v2919
      %v3064 = vadd.f32 %v2775, %v2918
      %v3065 = vadd.f32 %v2776, %v2922
      %v3066 = vadd.f32 %v2777, %v2921
      %v3067 = vadd.f32 %v2778, %v2925
      %v3068 = vadd.f32 %v2779, %v2924
      %v3069 = vadd.f32 %v2780, %v2928
      %v3070 = vadd.f32 %v2781, %v2927
      %v3071 = vadd.f32 %v2782, %v2931
      %v3072 = vadd.f32 %v2783, %v2930
      %v3073 = vadd.f32 %v2784, %v2934
      %v3074 = vadd.f32 %v2785, %v2933
      %v3075 = vadd.f32 %v2786, %v2937
      %v3076 = vadd.f32 %v2787, %v2936
      %v3077 = vadd.f32 %v2788, %v2940
      %v3078 = vadd.f32 %v2789, %v2939
      %v3079 = vadd.f32 %v2790, %v2943
      %v3080 = vadd.f32 %v2791, %v2942
      %v3081 = vadd.f32 %v2792, %v2946
      %v3082 = vadd.f32 %v2793, %v2945
      %v3083 = vadd.f32 %v2794, %v2949
      %v3084 = vadd.f32 %v2795, %v2948
      %v3085 = vadd.f32 %v2796, %v2952
      %v3086 = vadd.f32 %v2797, %v2951
      %v3087 = vadd.f32 %v2798, %v2955
      %v3088 = vadd.f32 %v2799, %v2954
      %v3089 = vadd.f32 %v2800, %v2958
      %v3090 = vadd.f32 %v2801, %v2957
      %v3091 = vadd.f32 %v2802, %v2961
      %v3092 = vadd.f32 %v2803, %v2960
      %v3093 = vadd.f32 %v2804, %v2964
      %v3094 = vadd.f32 %v2805, %v2963
      %v3095 = vadd.f32 %v2806, %v2967
      %v3096 = vadd.f32 %v2807, %v2966
      %v3097 = vadd.f32 %v2808, %v2970
      %v3098 = vadd.f32 %v2809, %v2969
      %vm3163 = vcmask 1043456
      %v3164 = vrot.slane %v1817, 4
      %v3165 = vrot.slane %v1819, 4
      %v3166 = vsel %vm3163, %v3164, %v3165
      %v3167 = vrot.slane %v1822, 4
      %v3168 = vrot.slane %v1824, 4
      %v3169 = vsel %vm3163, %v3167, %v3168
      %v3170 = vrot.slane %v1827, 4
      %v3171 = vrot.slane %v1829, 4
      %v3172 = vsel %vm3163, %v3170, %v3171
      %v3173 = vrot.slane %v1832, 4
      %v3174 = vrot.slane %v1834, 4
      %v3175 = vsel %vm3163, %v3173, %v3174
      %v3176 = vrot.slane %v1837, 4
      %v3177 = vrot.slane %v1839, 4
      %v3178 = vsel %vm3163, %v3176, %v3177
      %v3179 = vrot.slane %v1842, 4
      %v3180 = vrot.slane %v1844, 4
      %v3181 = vsel %vm3163, %v3179, %v3180
      %v3182 = vrot.slane %v1847, 4
      %v3183 = vrot.slane %v1849, 4
      %v3184 = vsel %vm3163, %v3182, %v3183
      %v3185 = vrot.slane %v1852, 4
      %v3186 = vrot.slane %v1854, 4
      %v3187 = vsel %vm3163, %v3185, %v3186
      %v3188 = vrot.slane %v1857, 4
      %v3189 = vrot.slane %v1859, 4
      %v3190 = vsel %vm3163, %v3188, %v3189
      %v3191 = vrot.slane %v1862, 4
      %v3192 = vrot.slane %v1864, 4
      %v3193 = vsel %vm3163, %v3191, %v3192
      %v3194 = vrot.slane %v1867, 4
      %v3195 = vrot.slane %v1869, 4
      %v3196 = vsel %vm3163, %v3194, %v3195
      %v3197 = vrot.slane %v1872, 4
      %v3198 = vrot.slane %v1874, 4
      %v3199 = vsel %vm3163, %v3197, %v3198
      %v3200 = vrot.slane %v1877, 4
      %v3201 = vrot.slane %v1879, 4
      %v3202 = vsel %vm3163, %v3200, %v3201
      %v3203 = vrot.slane %v1882, 4
      %v3204 = vrot.slane %v1884, 4
      %v3205 = vsel %vm3163, %v3203, %v3204
      %v3206 = vrot.slane %v1887, 4
      %v3207 = vrot.slane %v1889, 4
      %v3208 = vsel %vm3163, %v3206, %v3207
      %v3209 = vrot.slane %v1892, 4
      %v3210 = vrot.slane %v1894, 4
      %v3211 = vsel %vm3163, %v3209, %v3210
      %v3212 = vrot.slane %v1897, 4
      %v3213 = vrot.slane %v1899, 4
      %v3214 = vsel %vm3163, %v3212, %v3213
      %v3215 = vrot.slane %v1902, 4
      %v3216 = vrot.slane %v1904, 4
      %v3217 = vsel %vm3163, %v3215, %v3216
      %v3218 = vrot.slane %v1907, 4
      %v3219 = vrot.slane %v1909, 4
      %v3220 = vsel %vm3163, %v3218, %v3219
      %v3221 = vrot.slane %v1912, 4
      %v3222 = vrot.slane %v1914, 4
      %v3223 = vsel %vm3163, %v3221, %v3222
      %v3224 = vrot.slane %v1917, 4
      %v3225 = vrot.slane %v1919, 4
      %v3226 = vsel %vm3163, %v3224, %v3225
      %v3227 = vrot.slane %v1922, 4
      %v3228 = vrot.slane %v1924, 4
      %v3229 = vsel %vm3163, %v3227, %v3228
      %v3230 = vrot.slane %v1927, 4
      %v3231 = vrot.slane %v1929, 4
      %v3232 = vsel %vm3163, %v3230, %v3231
      %v3233 = vrot.slane %v1932, 4
      %v3234 = vrot.slane %v1934, 4
      %v3235 = vsel %vm3163, %v3233, %v3234
      %v3236 = vrot.slane %v1937, 4
      %v3237 = vrot.slane %v1939, 4
      %v3238 = vsel %vm3163, %v3236, %v3237
      %v3239 = vrot.slane %v1942, 4
      %v3240 = vrot.slane %v1944, 4
      %v3241 = vsel %vm3163, %v3239, %v3240
      %v3242 = vrot.slane %v1947, 4
      %v3243 = vrot.slane %v1949, 4
      %v3244 = vsel %vm3163, %v3242, %v3243
      %v3245 = vrot.slane %v1952, 4
      %v3246 = vrot.slane %v1954, 4
      %v3247 = vsel %vm3163, %v3245, %v3246
      %v3248 = vrot.slane %v1957, 4
      %v3249 = vrot.slane %v1959, 4
      %v3250 = vsel %vm3163, %v3248, %v3249
      %v3251 = vrot.slane %v1962, 4
      %v3252 = vrot.slane %v1964, 4
      %v3253 = vsel %vm3163, %v3251, %v3252
      %v3254 = vrot.slane %v1967, 4
      %v3255 = vrot.slane %v1969, 4
      %v3256 = vsel %vm3163, %v3254, %v3255
      %v3257 = vrot.slane %v1972, 4
      %v3258 = vrot.slane %v1974, 4
      %v3259 = vsel %vm3163, %v3257, %v3258
      %v3324 = vadd.f32 %v3035, %v3166
      %v3325 = vadd.f32 %v3036, %v3165
      %v3326 = vadd.f32 %v3037, %v3169
      %v3327 = vadd.f32 %v3038, %v3168
      %v3328 = vadd.f32 %v3039, %v3172
      %v3329 = vadd.f32 %v3040, %v3171
      %v3330 = vadd.f32 %v3041, %v3175
      %v3331 = vadd.f32 %v3042, %v3174
      %v3332 = vadd.f32 %v3043, %v3178
      %v3333 = vadd.f32 %v3044, %v3177
      %v3334 = vadd.f32 %v3045, %v3181
      %v3335 = vadd.f32 %v3046, %v3180
      %v3336 = vadd.f32 %v3047, %v3184
      %v3337 = vadd.f32 %v3048, %v3183
      %v3338 = vadd.f32 %v3049, %v3187
      %v3339 = vadd.f32 %v3050, %v3186
      %v3340 = vadd.f32 %v3051, %v3190
      %v3341 = vadd.f32 %v3052, %v3189
      %v3342 = vadd.f32 %v3053, %v3193
      %v3343 = vadd.f32 %v3054, %v3192
      %v3344 = vadd.f32 %v3055, %v3196
      %v3345 = vadd.f32 %v3056, %v3195
      %v3346 = vadd.f32 %v3057, %v3199
      %v3347 = vadd.f32 %v3058, %v3198
      %v3348 = vadd.f32 %v3059, %v3202
      %v3349 = vadd.f32 %v3060, %v3201
      %v3350 = vadd.f32 %v3061, %v3205
      %v3351 = vadd.f32 %v3062, %v3204
      %v3352 = vadd.f32 %v3063, %v3208
      %v3353 = vadd.f32 %v3064, %v3207
      %v3354 = vadd.f32 %v3065, %v3211
      %v3355 = vadd.f32 %v3066, %v3210
      %v3356 = vadd.f32 %v3067, %v3214
      %v3357 = vadd.f32 %v3068, %v3213
      %v3358 = vadd.f32 %v3069, %v3217
      %v3359 = vadd.f32 %v3070, %v3216
      %v3360 = vadd.f32 %v3071, %v3220
      %v3361 = vadd.f32 %v3072, %v3219
      %v3362 = vadd.f32 %v3073, %v3223
      %v3363 = vadd.f32 %v3074, %v3222
      %v3364 = vadd.f32 %v3075, %v3226
      %v3365 = vadd.f32 %v3076, %v3225
      %v3366 = vadd.f32 %v3077, %v3229
      %v3367 = vadd.f32 %v3078, %v3228
      %v3368 = vadd.f32 %v3079, %v3232
      %v3369 = vadd.f32 %v3080, %v3231
      %v3370 = vadd.f32 %v3081, %v3235
      %v3371 = vadd.f32 %v3082, %v3234
      %v3372 = vadd.f32 %v3083, %v3238
      %v3373 = vadd.f32 %v3084, %v3237
      %v3374 = vadd.f32 %v3085, %v3241
      %v3375 = vadd.f32 %v3086, %v3240
      %v3376 = vadd.f32 %v3087, %v3244
      %v3377 = vadd.f32 %v3088, %v3243
      %v3378 = vadd.f32 %v3089, %v3247
      %v3379 = vadd.f32 %v3090, %v3246
      %v3380 = vadd.f32 %v3091, %v3250
      %v3381 = vadd.f32 %v3092, %v3249
      %v3382 = vadd.f32 %v3093, %v3253
      %v3383 = vadd.f32 %v3094, %v3252
      %v3384 = vadd.f32 %v3095, %v3256
      %v3385 = vadd.f32 %v3096, %v3255
      %v3386 = vadd.f32 %v3097, %v3259
      %v3387 = vadd.f32 %v3098, %v3258
      %v3388 = vld [vmem:[%s2] sm:$0x1]
      %v3390 = vperm.slane %v3388, 0
      %v3392 = vadd.f32 %v3324, %v3390
      %v3393 = vadd.f32 %v3325, %v3390
      %v3394 = vadd.f32 %v3326, %v3390
      %v3395 = vadd.f32 %v3327, %v3390
      %v3396 = vadd.f32 %v3328, %v3390
      %v3397 = vadd.f32 %v3329, %v3390
      %v3398 = vadd.f32 %v3330, %v3390
      %v3399 = vadd.f32 %v3331, %v3390
      %v3400 = vadd.f32 %v3332, %v3390
      %v3401 = vadd.f32 %v3333, %v3390
      %v3402 = vadd.f32 %v3334, %v3390
      %v3403 = vadd.f32 %v3335, %v3390
      %v3404 = vadd.f32 %v3336, %v3390
      %v3405 = vadd.f32 %v3337, %v3390
      %v3406 = vadd.f32 %v3338, %v3390
      %v3407 = vadd.f32 %v3339, %v3390
      %v3408 = vadd.f32 %v3340, %v3390
      %v3409 = vadd.f32 %v3341, %v3390
      %v3410 = vadd.f32 %v3342, %v3390
      %v3411 = vadd.f32 %v3343, %v3390
      %v3412 = vadd.f32 %v3344, %v3390
      %v3413 = vadd.f32 %v3345, %v3390
      %v3414 = vadd.f32 %v3346, %v3390
      %v3415 = vadd.f32 %v3347, %v3390
      %v3416 = vadd.f32 %v3348, %v3390
      %v3417 = vadd.f32 %v3349, %v3390
      %v3418 = vadd.f32 %v3350, %v3390
      %v3419 = vadd.f32 %v3351, %v3390
      %v3420 = vadd.f32 %v3352, %v3390
      %v3421 = vadd.f32 %v3353, %v3390
      %v3422 = vadd.f32 %v3354, %v3390
      %v3423 = vadd.f32 %v3355, %v3390
      %v3424 = vadd.f32 %v3356, %v3390
      %v3425 = vadd.f32 %v3357, %v3390
      %v3426 = vadd.f32 %v3358, %v3390
      %v3427 = vadd.f32 %v3359, %v3390
      %v3428 = vadd.f32 %v3360, %v3390
      %v3429 = vadd.f32 %v3361, %v3390
      %v3430 = vadd.f32 %v3362, %v3390
      %v3431 = vadd.f32 %v3363, %v3390
      %v3432 = vadd.f32 %v3364, %v3390
      %v3433 = vadd.f32 %v3365, %v3390
      %v3434 = vadd.f32 %v3366, %v3390
      %v3435 = vadd.f32 %v3367, %v3390
      %v3436 = vadd.f32 %v3368, %v3390
      %v3437 = vadd.f32 %v3369, %v3390
      %v3438 = vadd.f32 %v3370, %v3390
      %v3439 = vadd.f32 %v3371, %v3390
      %v3440 = vadd.f32 %v3372, %v3390
      %v3441 = vadd.f32 %v3373, %v3390
      %v3442 = vadd.f32 %v3374, %v3390
      %v3443 = vadd.f32 %v3375, %v3390
      %v3444 = vadd.f32 %v3376, %v3390
      %v3445 = vadd.f32 %v3377, %v3390
      %v3446 = vadd.f32 %v3378, %v3390
      %v3447 = vadd.f32 %v3379, %v3390
      %v3448 = vadd.f32 %v3380, %v3390
      %v3449 = vadd.f32 %v3381, %v3390
      %v3450 = vadd.f32 %v3382, %v3390
      %v3451 = vadd.f32 %v3383, %v3390
      %v3452 = vadd.f32 %v3384, %v3390
      %v3453 = vadd.f32 %v3385, %v3390
      %v3454 = vadd.f32 %v3386, %v3390
      %v3455 = vadd.f32 %v3387, %v3390
      %v3456 = vmax.f32 %v3392, 0.0
      %v3457 = vmax.f32 %v3393, 0.0
      %v3458 = vmax.f32 %v3394, 0.0
      %v3459 = vmax.f32 %v3395, 0.0
      %v3460 = vmax.f32 %v3396, 0.0
      %v3461 = vmax.f32 %v3397, 0.0
      %v3462 = vmax.f32 %v3398, 0.0
      %v3463 = vmax.f32 %v3399, 0.0
      %v3464 = vmax.f32 %v3400, 0.0
      %v3465 = vmax.f32 %v3401, 0.0
      %v3466 = vmax.f32 %v3402, 0.0
      %v3467 = vmax.f32 %v3403, 0.0
      %v3468 = vmax.f32 %v3404, 0.0
      %v3469 = vmax.f32 %v3405, 0.0
      %v3470 = vmax.f32 %v3406, 0.0
      %v3471 = vmax.f32 %v3407, 0.0
      %v3472 = vmax.f32 %v3408, 0.0
      %v3473 = vmax.f32 %v3409, 0.0
      %v3474 = vmax.f32 %v3410, 0.0
      %v3475 = vmax.f32 %v3411, 0.0
      %v3476 = vmax.f32 %v3412, 0.0
      %v3477 = vmax.f32 %v3413, 0.0
      %v3478 = vmax.f32 %v3414, 0.0
      %v3479 = vmax.f32 %v3415, 0.0
      %v3480 = vmax.f32 %v3416, 0.0
      %v3481 = vmax.f32 %v3417, 0.0
      %v3482 = vmax.f32 %v3418, 0.0
      %v3483 = vmax.f32 %v3419, 0.0
      %v3484 = vmax.f32 %v3420, 0.0
      %v3485 = vmax.f32 %v3421, 0.0
      %v3486 = vmax.f32 %v3422, 0.0
      %v3487 = vmax.f32 %v3423, 0.0
      %v3488 = vmax.f32 %v3424, 0.0
      %v3489 = vmax.f32 %v3425, 0.0
      %v3490 = vmax.f32 %v3426, 0.0
      %v3491 = vmax.f32 %v3427, 0.0
      %v3492 = vmax.f32 %v3428, 0.0
      %v3493 = vmax.f32 %v3429, 0.0
      %v3494 = vmax.f32 %v3430, 0.0
      %v3495 = vmax.f32 %v3431, 0.0
      %v3496 = vmax.f32 %v3432, 0.0
      %v3497 = vmax.f32 %v3433, 0.0
      %v3498 = vmax.f32 %v3434, 0.0
      %v3499 = vmax.f32 %v3435, 0.0
      %v3500 = vmax.f32 %v3436, 0.0
      %v3501 = vmax.f32 %v3437, 0.0
      %v3502 = vmax.f32 %v3438, 0.0
      %v3503 = vmax.f32 %v3439, 0.0
      %v3504 = vmax.f32 %v3440, 0.0
      %v3505 = vmax.f32 %v3441, 0.0
      %v3506 = vmax.f32 %v3442, 0.0
      %v3507 = vmax.f32 %v3443, 0.0
      %v3508 = vmax.f32 %v3444, 0.0
      %v3509 = vmax.f32 %v3445, 0.0
      %v3510 = vmax.f32 %v3446, 0.0
      %v3511 = vmax.f32 %v3447, 0.0
      %v3512 = vmax.f32 %v3448, 0.0
      %v3513 = vmax.f32 %v3449, 0.0
      %v3514 = vmax.f32 %v3450, 0.0
      %v3515 = vmax.f32 %v3451, 0.0
      %v3516 = vmax.f32 %v3452, 0.0
      %v3517 = vmax.f32 %v3453, 0.0
      %v3518 = vmax.f32 %v3454, 0.0
      %v3519 = vmax.f32 %v3455, 0.0
      %v3520 = vlaneseq
      %v3521 = vshrl.u32 %v3520, 7
      %v3522 = vadd.s32 %v3521, 8
      %v3523 = vld [vmem:[%s3] sm:$0x1]
      %v3524 = vperm.slane %v3523, 0
      %vm3525 = vcmp.lt.s32.totalorder %v3521, %v3524
      %vm3526 = vcmp.lt.s32.totalorder %v3522, %v3524
      %v3527 = vsel %vm3525, 1, 0
      %v3528 = vsel %vm3526, 1, 0
      %vm3529 = vcmp.eq.s32.totalorder %v3527, 1
      %vm3530 = vcmp.eq.s32.totalorder %v3528, 1
      %v3531 = vsel %vm3529, %v3456, 0.0
      %v3532 = vsel %vm3530, %v3457, 0.0
      %v3533 = vsel %vm3529, %v3458, 0.0
      %v3534 = vsel %vm3530, %v3459, 0.0
      %v3535 = vsel %vm3529, %v3460, 0.0
      %v3536 = vsel %vm3530, %v3461, 0.0
      %v3537 = vsel %vm3529, %v3462, 0.0
      %v3538 = vsel %vm3530, %v3463, 0.0
      %v3539 = vsel %vm3529, %v3464, 0.0
      %v3540 = vsel %vm3530, %v3465, 0.0
      %v3541 = vsel %vm3529, %v3466, 0.0
      %v3542 = vsel %vm3530, %v3467, 0.0
      %v3543 = vsel %vm3529, %v3468, 0.0
      %v3544 = vsel %vm3530, %v3469, 0.0
      %v3545 = vsel %vm3529, %v3470, 0.0
      %v3546 = vsel %vm3530, %v3471, 0.0
      %v3547 = vsel %vm3529, %v3472, 0.0
      %v3548 = vsel %vm3530, %v3473, 0.0
      %v3549 = vsel %vm3529, %v3474, 0.0
      %v3550 = vsel %vm3530, %v3475, 0.0
      %v3551 = vsel %vm3529, %v3476, 0.0
      %v3552 = vsel %vm3530, %v3477, 0.0
      %v3553 = vsel %vm3529, %v3478, 0.0
      %v3554 = vsel %vm3530, %v3479, 0.0
      %v3555 = vsel %vm3529, %v3480, 0.0
      %v3556 = vsel %vm3530, %v3481, 0.0
      %v3557 = vsel %vm3529, %v3482, 0.0
      %v3558 = vsel %vm3530, %v3483, 0.0
      %v3559 = vsel %vm3529, %v3484, 0.0
      %v3560 = vsel %vm3530, %v3485, 0.0
      %v3561 = vsel %vm3529, %v3486, 0.0
      %v3562 = vsel %vm3530, %v3487, 0.0
      %v3563 = vsel %vm3529, %v3488, 0.0
      %v3564 = vsel %vm3530, %v3489, 0.0
      %v3565 = vsel %vm3529, %v3490, 0.0
      %v3566 = vsel %vm3530, %v3491, 0.0
      %v3567 = vsel %vm3529, %v3492, 0.0
      %v3568 = vsel %vm3530, %v3493, 0.0
      %v3569 = vsel %vm3529, %v3494, 0.0
      %v3570 = vsel %vm3530, %v3495, 0.0
      %v3571 = vsel %vm3529, %v3496, 0.0
      %v3572 = vsel %vm3530, %v3497, 0.0
      %v3573 = vsel %vm3529, %v3498, 0.0
      %v3574 = vsel %vm3530, %v3499, 0.0
      %v3575 = vsel %vm3529, %v3500, 0.0
      %v3576 = vsel %vm3530, %v3501, 0.0
      %v3577 = vsel %vm3529, %v3502, 0.0
      %v3578 = vsel %vm3530, %v3503, 0.0
      %v3579 = vsel %vm3529, %v3504, 0.0
      %v3580 = vsel %vm3530, %v3505, 0.0
      %v3581 = vsel %vm3529, %v3506, 0.0
      %v3582 = vsel %vm3530, %v3507, 0.0
      %v3583 = vsel %vm3529, %v3508, 0.0
      %v3584 = vsel %vm3530, %v3509, 0.0
      %v3585 = vsel %vm3529, %v3510, 0.0
      %v3586 = vsel %vm3530, %v3511, 0.0
      %v3587 = vsel %vm3529, %v3512, 0.0
      %v3588 = vsel %vm3530, %v3513, 0.0
      %v3589 = vsel %vm3529, %v3514, 0.0
      %v3590 = vsel %vm3530, %v3515, 0.0
      %v3591 = vsel %vm3529, %v3516, 0.0
      %v3592 = vsel %vm3530, %v3517, 0.0
      %v3593 = vsel %vm3529, %v3518, 0.0
      %v3594 = vsel %vm3530, %v3519, 0.0
      %v3595 = vsel %vm3163, %v3532, -inf
      %v3596 = vmax.f32 %v3531, %v3595
      %v3597 = vrot.slane %v3596, 4
      %v3598 = vmax.f32 %v3596, %v3597
      %v3599 = vrot.slane %v3598, 2
      %v3600 = vmax.f32 %v3598, %v3599
      %v3601 = vrot.slane %v3600, 1
      %v3602 = vmax.f32 %v3600, %v3601
      %v3603 = vsel %vm3163, %v3534, -inf
      %v3604 = vmax.f32 %v3533, %v3603
      %v3605 = vrot.slane %v3604, 4
      %v3606 = vmax.f32 %v3604, %v3605
      %v3607 = vrot.slane %v3606, 2
      %v3608 = vmax.f32 %v3606, %v3607
      %v3609 = vrot.slane %v3608, 1
      %v3610 = vmax.f32 %v3608, %v3609
      %v3611 = vsel %vm3163, %v3536, -inf
      %v3612 = vmax.f32 %v3535, %v3611
      %v3613 = vrot.slane %v3612, 4
      %v3614 = vmax.f32 %v3612, %v3613
      %v3615 = vrot.slane %v3614, 2
      %v3616 = vmax.f32 %v3614, %v3615
      %v3617 = vrot.slane %v3616, 1
      %v3618 = vmax.f32 %v3616, %v3617
      %v3619 = vsel %vm3163, %v3538, -inf
      %v3620 = vmax.f32 %v3537, %v3619
      %v3621 = vrot.slane %v3620, 4
      %v3622 = vmax.f32 %v3620, %v3621
      %v3623 = vrot.slane %v3622, 2
      %v3624 = vmax.f32 %v3622, %v3623
      %v3625 = vrot.slane %v3624, 1
      %v3626 = vmax.f32 %v3624, %v3625
      %v3627 = vsel %vm3163, %v3540, -inf
      %v3628 = vmax.f32 %v3539, %v3627
      %v3629 = vrot.slane %v3628, 4
      %v3630 = vmax.f32 %v3628, %v3629
      %v3631 = vrot.slane %v3630, 2
      %v3632 = vmax.f32 %v3630, %v3631
      %v3633 = vrot.slane %v3632, 1
      %v3634 = vmax.f32 %v3632, %v3633
      %v3635 = vsel %vm3163, %v3542, -inf
      %v3636 = vmax.f32 %v3541, %v3635
      %v3637 = vrot.slane %v3636, 4
      %v3638 = vmax.f32 %v3636, %v3637
      %v3639 = vrot.slane %v3638, 2
      %v3640 = vmax.f32 %v3638, %v3639
      %v3641 = vrot.slane %v3640, 1
      %v3642 = vmax.f32 %v3640, %v3641
      %v3643 = vsel %vm3163, %v3544, -inf
      %v3644 = vmax.f32 %v3543, %v3643
      %v3645 = vrot.slane %v3644, 4
      %v3646 = vmax.f32 %v3644, %v3645
      %v3647 = vrot.slane %v3646, 2
      %v3648 = vmax.f32 %v3646, %v3647
      %v3649 = vrot.slane %v3648, 1
      %v3650 = vmax.f32 %v3648, %v3649
      %v3651 = vsel %vm3163, %v3546, -inf
      %v3652 = vmax.f32 %v3545, %v3651
      %v3653 = vrot.slane %v3652, 4
      %v3654 = vmax.f32 %v3652, %v3653
      %v3655 = vrot.slane %v3654, 2
      %v3656 = vmax.f32 %v3654, %v3655
      %v3657 = vrot.slane %v3656, 1
      %v3658 = vmax.f32 %v3656, %v3657
      %v3659 = vsel %vm3163, %v3548, -inf
      %v3660 = vmax.f32 %v3547, %v3659
      %v3661 = vrot.slane %v3660, 4
      %v3662 = vmax.f32 %v3660, %v3661
      %v3663 = vrot.slane %v3662, 2
      %v3664 = vmax.f32 %v3662, %v3663
      %v3665 = vrot.slane %v3664, 1
      %v3666 = vmax.f32 %v3664, %v3665
      %v3667 = vsel %vm3163, %v3550, -inf
      %v3668 = vmax.f32 %v3549, %v3667
      %v3669 = vrot.slane %v3668, 4
      %v3670 = vmax.f32 %v3668, %v3669
      %v3671 = vrot.slane %v3670, 2
      %v3672 = vmax.f32 %v3670, %v3671
      %v3673 = vrot.slane %v3672, 1
      %v3674 = vmax.f32 %v3672, %v3673
      %v3675 = vsel %vm3163, %v3552, -inf
      %v3676 = vmax.f32 %v3551, %v3675
      %v3677 = vrot.slane %v3676, 4
      %v3678 = vmax.f32 %v3676, %v3677
      %v3679 = vrot.slane %v3678, 2
      %v3680 = vmax.f32 %v3678, %v3679
      %v3681 = vrot.slane %v3680, 1
      %v3682 = vmax.f32 %v3680, %v3681
      %v3683 = vsel %vm3163, %v3554, -inf
      %v3684 = vmax.f32 %v3553, %v3683
      %v3685 = vrot.slane %v3684, 4
      %v3686 = vmax.f32 %v3684, %v3685
      %v3687 = vrot.slane %v3686, 2
      %v3688 = vmax.f32 %v3686, %v3687
      %v3689 = vrot.slane %v3688, 1
      %v3690 = vmax.f32 %v3688, %v3689
      %v3691 = vsel %vm3163, %v3556, -inf
      %v3692 = vmax.f32 %v3555, %v3691
      %v3693 = vrot.slane %v3692, 4
      %v3694 = vmax.f32 %v3692, %v3693
      %v3695 = vrot.slane %v3694, 2
      %v3696 = vmax.f32 %v3694, %v3695
      %v3697 = vrot.slane %v3696, 1
      %v3698 = vmax.f32 %v3696, %v3697
      %v3699 = vsel %vm3163, %v3558, -inf
      %v3700 = vmax.f32 %v3557, %v3699
      %v3701 = vrot.slane %v3700, 4
      %v3702 = vmax.f32 %v3700, %v3701
      %v3703 = vrot.slane %v3702, 2
      %v3704 = vmax.f32 %v3702, %v3703
      %v3705 = vrot.slane %v3704, 1
      %v3706 = vmax.f32 %v3704, %v3705
      %v3707 = vsel %vm3163, %v3560, -inf
      %v3708 = vmax.f32 %v3559, %v3707
      %v3709 = vrot.slane %v3708, 4
      %v3710 = vmax.f32 %v3708, %v3709
      %v3711 = vrot.slane %v3710, 2
      %v3712 = vmax.f32 %v3710, %v3711
      %v3713 = vrot.slane %v3712, 1
      %v3714 = vmax.f32 %v3712, %v3713
      %v3715 = vsel %vm3163, %v3562, -inf
      %v3716 = vmax.f32 %v3561, %v3715
      %v3717 = vrot.slane %v3716, 4
      %v3718 = vmax.f32 %v3716, %v3717
      %v3719 = vrot.slane %v3718, 2
      %v3720 = vmax.f32 %v3718, %v3719
      %v3721 = vrot.slane %v3720, 1
      %v3722 = vmax.f32 %v3720, %v3721
      %v3723 = vsel %vm3163, %v3564, -inf
      %v3724 = vmax.f32 %v3563, %v3723
      %v3725 = vrot.slane %v3724, 4
      %v3726 = vmax.f32 %v3724, %v3725
      %v3727 = vrot.slane %v3726, 2
      %v3728 = vmax.f32 %v3726, %v3727
      %v3729 = vrot.slane %v3728, 1
      %v3730 = vmax.f32 %v3728, %v3729
      %v3731 = vsel %vm3163, %v3566, -inf
      %v3732 = vmax.f32 %v3565, %v3731
      %v3733 = vrot.slane %v3732, 4
      %v3734 = vmax.f32 %v3732, %v3733
      %v3735 = vrot.slane %v3734, 2
      %v3736 = vmax.f32 %v3734, %v3735
      %v3737 = vrot.slane %v3736, 1
      %v3738 = vmax.f32 %v3736, %v3737
      %v3739 = vsel %vm3163, %v3568, -inf
      %v3740 = vmax.f32 %v3567, %v3739
      %v3741 = vrot.slane %v3740, 4
      %v3742 = vmax.f32 %v3740, %v3741
      %v3743 = vrot.slane %v3742, 2
      %v3744 = vmax.f32 %v3742, %v3743
      %v3745 = vrot.slane %v3744, 1
      %v3746 = vmax.f32 %v3744, %v3745
      %v3747 = vsel %vm3163, %v3570, -inf
      %v3748 = vmax.f32 %v3569, %v3747
      %v3749 = vrot.slane %v3748, 4
      %v3750 = vmax.f32 %v3748, %v3749
      %v3751 = vrot.slane %v3750, 2
      %v3752 = vmax.f32 %v3750, %v3751
      %v3753 = vrot.slane %v3752, 1
      %v3754 = vmax.f32 %v3752, %v3753
      %v3755 = vsel %vm3163, %v3572, -inf
      %v3756 = vmax.f32 %v3571, %v3755
      %v3757 = vrot.slane %v3756, 4
      %v3758 = vmax.f32 %v3756, %v3757
      %v3759 = vrot.slane %v3758, 2
      %v3760 = vmax.f32 %v3758, %v3759
      %v3761 = vrot.slane %v3760, 1
      %v3762 = vmax.f32 %v3760, %v3761
      %v3763 = vsel %vm3163, %v3574, -inf
      %v3764 = vmax.f32 %v3573, %v3763
      %v3765 = vrot.slane %v3764, 4
      %v3766 = vmax.f32 %v3764, %v3765
      %v3767 = vrot.slane %v3766, 2
      %v3768 = vmax.f32 %v3766, %v3767
      %v3769 = vrot.slane %v3768, 1
      %v3770 = vmax.f32 %v3768, %v3769
      %v3771 = vsel %vm3163, %v3576, -inf
      %v3772 = vmax.f32 %v3575, %v3771
      %v3773 = vrot.slane %v3772, 4
      %v3774 = vmax.f32 %v3772, %v3773
      %v3775 = vrot.slane %v3774, 2
      %v3776 = vmax.f32 %v3774, %v3775
      %v3777 = vrot.slane %v3776, 1
      %v3778 = vmax.f32 %v3776, %v3777
      %v3779 = vsel %vm3163, %v3578, -inf
      %v3780 = vmax.f32 %v3577, %v3779
      %v3781 = vrot.slane %v3780, 4
      %v3782 = vmax.f32 %v3780, %v3781
      %v3783 = vrot.slane %v3782, 2
      %v3784 = vmax.f32 %v3782, %v3783
      %v3785 = vrot.slane %v3784, 1
      %v3786 = vmax.f32 %v3784, %v3785
      %v3787 = vsel %vm3163, %v3580, -inf
      %v3788 = vmax.f32 %v3579, %v3787
      %v3789 = vrot.slane %v3788, 4
      %v3790 = vmax.f32 %v3788, %v3789
      %v3791 = vrot.slane %v3790, 2
      %v3792 = vmax.f32 %v3790, %v3791
      %v3793 = vrot.slane %v3792, 1
      %v3794 = vmax.f32 %v3792, %v3793
      %v3795 = vsel %vm3163, %v3582, -inf
      %v3796 = vmax.f32 %v3581, %v3795
      %v3797 = vrot.slane %v3796, 4
      %v3798 = vmax.f32 %v3796, %v3797
      %v3799 = vrot.slane %v3798, 2
      %v3800 = vmax.f32 %v3798, %v3799
      %v3801 = vrot.slane %v3800, 1
      %v3802 = vmax.f32 %v3800, %v3801
      %v3803 = vsel %vm3163, %v3584, -inf
      %v3804 = vmax.f32 %v3583, %v3803
      %v3805 = vrot.slane %v3804, 4
      %v3806 = vmax.f32 %v3804, %v3805
      %v3807 = vrot.slane %v3806, 2
      %v3808 = vmax.f32 %v3806, %v3807
      %v3809 = vrot.slane %v3808, 1
      %v3810 = vmax.f32 %v3808, %v3809
      %v3811 = vsel %vm3163, %v3586, -inf
      %v3812 = vmax.f32 %v3585, %v3811
      %v3813 = vrot.slane %v3812, 4
      %v3814 = vmax.f32 %v3812, %v3813
      %v3815 = vrot.slane %v3814, 2
      %v3816 = vmax.f32 %v3814, %v3815
      %v3817 = vrot.slane %v3816, 1
      %v3818 = vmax.f32 %v3816, %v3817
      %v3819 = vsel %vm3163, %v3588, -inf
      %v3820 = vmax.f32 %v3587, %v3819
      %v3821 = vrot.slane %v3820, 4
      %v3822 = vmax.f32 %v3820, %v3821
      %v3823 = vrot.slane %v3822, 2
      %v3824 = vmax.f32 %v3822, %v3823
      %v3825 = vrot.slane %v3824, 1
      %v3826 = vmax.f32 %v3824, %v3825
      %v3827 = vsel %vm3163, %v3590, -inf
      %v3828 = vmax.f32 %v3589, %v3827
      %v3829 = vrot.slane %v3828, 4
      %v3830 = vmax.f32 %v3828, %v3829
      %v3831 = vrot.slane %v3830, 2
      %v3832 = vmax.f32 %v3830, %v3831
      %v3833 = vrot.slane %v3832, 1
      %v3834 = vmax.f32 %v3832, %v3833
      %v3835 = vsel %vm3163, %v3592, -inf
      %v3836 = vmax.f32 %v3591, %v3835
      %v3837 = vrot.slane %v3836, 4
      %v3838 = vmax.f32 %v3836, %v3837
      %v3839 = vrot.slane %v3838, 2
      %v3840 = vmax.f32 %v3838, %v3839
      %v3841 = vrot.slane %v3840, 1
      %v3842 = vmax.f32 %v3840, %v3841
      %v3843 = vsel %vm3163, %v3594, -inf
      %v3844 = vmax.f32 %v3593, %v3843
      %v3845 = vrot.slane %v3844, 4
      %v3846 = vmax.f32 %v3844, %v3845
      %v3847 = vrot.slane %v3846, 2
      %v3848 = vmax.f32 %v3846, %v3847
      %v3849 = vrot.slane %v3848, 1
      %v3850 = vmax.f32 %v3848, %v3849
      %v3851 = vpack.c.bf16 %v3602, %v3602
      %v3852 = vpack.c.bf16 %v3610, %v3610
      %v3853 = vpack.c.bf16 %v3618, %v3618
      %v3854 = vpack.c.bf16 %v3626, %v3626
      %v3855 = vpack.c.bf16 %v3634, %v3634
      %v3856 = vpack.c.bf16 %v3642, %v3642
      %v3857 = vpack.c.bf16 %v3650, %v3650
      %v3858 = vpack.c.bf16 %v3658, %v3658
      %v3859 = vpack.c.bf16 %v3666, %v3666
      %v3860 = vpack.c.bf16 %v3674, %v3674
      %v3861 = vpack.c.bf16 %v3682, %v3682
      %v3862 = vpack.c.bf16 %v3690, %v3690
      %v3863 = vpack.c.bf16 %v3698, %v3698
      %v3864 = vpack.c.bf16 %v3706, %v3706
      %v3865 = vpack.c.bf16 %v3714, %v3714
      %v3866 = vpack.c.bf16 %v3722, %v3722
      %v3867 = vpack.c.bf16 %v3730, %v3730
      %v3868 = vpack.c.bf16 %v3738, %v3738
      %v3869 = vpack.c.bf16 %v3746, %v3746
      %v3870 = vpack.c.bf16 %v3754, %v3754
      %v3871 = vpack.c.bf16 %v3762, %v3762
      %v3872 = vpack.c.bf16 %v3770, %v3770
      %v3873 = vpack.c.bf16 %v3778, %v3778
      %v3874 = vpack.c.bf16 %v3786, %v3786
      %v3875 = vpack.c.bf16 %v3794, %v3794
      %v3876 = vpack.c.bf16 %v3802, %v3802
      %v3877 = vpack.c.bf16 %v3810, %v3810
      %v3878 = vpack.c.bf16 %v3818, %v3818
      %v3879 = vpack.c.bf16 %v3826, %v3826
      %v3880 = vpack.c.bf16 %v3834, %v3834
      %v3881 = vpack.c.bf16 %v3842, %v3842
      %v3882 = vpack.c.bf16 %v3850, %v3850
      %v3883 = vld [vmem:[%s4] sm:$0xf]
      %v3884 = vld [vmem:[%s4 + $0x4] sm:$0xf]
      %v3885 = vld [vmem:[%s4 + $0x8] sm:$0xf]
      %v3886 = vld [vmem:[%s4 + $0xc] sm:$0xf]
      %v3887 = vld [vmem:[%s4 + $0x10] sm:$0xf]
      %v3888 = vld [vmem:[%s4 + $0x14] sm:$0xf]
      %v3889 = vld [vmem:[%s4 + $0x18] sm:$0xf]
      %v3890 = vld [vmem:[%s4 + $0x1c] sm:$0xf]
      %v3891 = vld [vmem:[%s4 + $0x20] sm:$0xf]
      %v3892 = vld [vmem:[%s4 + $0x24] sm:$0xf]
      %v3893 = vld [vmem:[%s4 + $0x28] sm:$0xf]
      %v3894 = vld [vmem:[%s4 + $0x2c] sm:$0xf]
      %v3895 = vld [vmem:[%s4 + $0x30] sm:$0xf]
      %v3896 = vld [vmem:[%s4 + $0x34] sm:$0xf]
      %v3897 = vld [vmem:[%s4 + $0x38] sm:$0xf]
      %v3898 = vld [vmem:[%s4 + $0x3c] sm:$0xf]
      %v3899 = vld [vmem:[%s5] sm:$0x1]
      %v3901 = vperm.slane %v3899, 0
      %v3935 = vunpack.c.l.b16 %v3851
      %v3936 = vunpack.c.l.b16 %v3852
      %v3937 = vunpack.c.l.b16 %v3853
      %v3938 = vunpack.c.l.b16 %v3854
      %v3939 = vunpack.c.l.b16 %v3855
      %v3940 = vunpack.c.l.b16 %v3856
      %v3941 = vunpack.c.l.b16 %v3857
      %v3942 = vunpack.c.l.b16 %v3858
      %v3943 = vunpack.c.l.b16 %v3859
      %v3944 = vunpack.c.l.b16 %v3860
      %v3945 = vunpack.c.l.b16 %v3861
      %v3946 = vunpack.c.l.b16 %v3862
      %v3947 = vunpack.c.l.b16 %v3863
      %v3948 = vunpack.c.l.b16 %v3864
      %v3949 = vunpack.c.l.b16 %v3865
      %v3950 = vunpack.c.l.b16 %v3866
      %v3951 = vunpack.c.l.b16 %v3867
      %v3952 = vunpack.c.l.b16 %v3868
      %v3953 = vunpack.c.l.b16 %v3869
      %v3954 = vunpack.c.l.b16 %v3870
      %v3955 = vunpack.c.l.b16 %v3871
      %v3956 = vunpack.c.l.b16 %v3872
      %v3957 = vunpack.c.l.b16 %v3873
      %v3958 = vunpack.c.l.b16 %v3874
      %v3959 = vunpack.c.l.b16 %v3875
      %v3960 = vunpack.c.l.b16 %v3876
      %v3961 = vunpack.c.l.b16 %v3877
      %v3962 = vunpack.c.l.b16 %v3878
      %v3963 = vunpack.c.l.b16 %v3879
      %v3964 = vunpack.c.l.b16 %v3880
      %v3965 = vunpack.c.l.b16 %v3881
      %v3966 = vunpack.c.l.b16 %v3882
      %vm3967 = vcmask 1041409
      %v3968 = vsel %vm3967, %v3936, %v3935
      %vm3969 = vcmask 1042434
      %v3970 = vsel %vm3969, %v3937, %v3968
      %vm3971 = vcmask 1043459
      %v3972 = vsel %vm3971, %v3938, %v3970
      %vm3973 = vcmask 1044484
      %v3974 = vsel %vm3973, %v3939, %v3972
      %vm3975 = vcmask 1045509
      %v3976 = vsel %vm3975, %v3940, %v3974
      %vm3977 = vcmask 1046534
      %v3978 = vsel %vm3977, %v3941, %v3976
      %vm3979 = vcmask 1047559
      %v3980 = vsel %vm3979, %v3942, %v3978
      %v3981 = vsel %vm3967, %v3944, %v3943
      %v3982 = vsel %vm3969, %v3945, %v3981
      %v3983 = vsel %vm3971, %v3946, %v3982
      %v3984 = vsel %vm3973, %v3947, %v3983
      %v3985 = vsel %vm3975, %v3948, %v3984
      %v3986 = vsel %vm3977, %v3949, %v3985
      %v3987 = vsel %vm3979, %v3950, %v3986
      %v3988 = vsel %vm3967, %v3952, %v3951
      %v3989 = vsel %vm3969, %v3953, %v3988
      %v3990 = vsel %vm3971, %v3954, %v3989
      %v3991 = vsel %vm3973, %v3955, %v3990
      %v3992 = vsel %vm3975, %v3956, %v3991
      %v3993 = vsel %vm3977, %v3957, %v3992
      %v3994 = vsel %vm3979, %v3958, %v3993
      %v3995 = vsel %vm3967, %v3960, %v3959
      %v3996 = vsel %vm3969, %v3961, %v3995
      %v3997 = vsel %vm3971, %v3962, %v3996
      %v3998 = vsel %vm3973, %v3963, %v3997
      %v3999 = vsel %vm3975, %v3964, %v3998
      %v4000 = vsel %vm3977, %v3965, %v3999
      %v4001 = vsel %vm3979, %v3966, %v4000
      %v4002 = vpack.c.b16 %v3987, %v3980
      %v4003 = vpack.c.b16 %v4001, %v3994
      %v4022 = vunpack.c.l.b16 %v3883
      %v4023 = vunpack.c.l.b16 %v3884
      %v4024 = vunpack.c.l.b16 %v3885
      %v4025 = vunpack.c.l.b16 %v3886
      %v4026 = vunpack.c.l.b16 %v3887
      %v4027 = vunpack.c.l.b16 %v3888
      %v4028 = vunpack.c.l.b16 %v3889
      %v4029 = vunpack.c.l.b16 %v3890
      %v4030 = vunpack.c.l.b16 %v3891
      %v4031 = vunpack.c.l.b16 %v3892
      %v4032 = vunpack.c.l.b16 %v3893
      %v4033 = vunpack.c.l.b16 %v3894
      %v4034 = vunpack.c.l.b16 %v3895
      %v4035 = vunpack.c.l.b16 %v3896
      %v4036 = vunpack.c.l.b16 %v3897
      %v4037 = vunpack.c.l.b16 %v3898
      %v4038 = vpack.c.b16 %v4023, %v4022
      %v4039 = vpack.c.b16 %v4025, %v4024
      %v4040 = vpack.c.b16 %v4027, %v4026
      %v4041 = vpack.c.b16 %v4029, %v4028
      %v4042 = vpack.c.b16 %v4031, %v4030
      %v4043 = vpack.c.b16 %v4033, %v4032
      %v4044 = vpack.c.b16 %v4035, %v4034
      %v4045 = vpack.c.b16 %v4037, %v4036
      %4054 = vmatpush.bf16.msra.mxu0 %v4045
      %4055 = vmatpush.bf16.msra.mxu0 %v4044
      %4056 = vmatpush.bf16.msra.mxu0 %v4043
      %4057 = vmatpush.bf16.msra.mxu0 %v4042
      %4058 = vmatpush.bf16.msra.mxu0 %v4041
      %4059 = vmatpush.bf16.msra.mxu0 %v4040
      %4060 = vmatpush.bf16.msra.mxu0 %v4039
      %4061 = vmatpush.bf16.msra.mxu0 %v4038
      %4062 = vmatmul.bf16.gmra.mxu0 %v4002
      %v4063 = vpop.f32.mrf.mxu0
      %v4064 = vadd.f32 %v3901, %v4063
      %v4065 = vpop.f32.mrf.mxu0
      %v4066 = vadd.f32 %v3901, %v4065
      %4067 = vmatmul.bf16.gmra.mxu0 %v4003
      %v4068 = vpop.f32.mrf.mxu0
      %v4069 = vadd.f32 %v3901, %v4068
      %v4070 = vpop.f32.mrf.mxu0
      %v4071 = vadd.f32 %v3901, %v4070
      %4072 = vdwg.mxu0
      %4073 = vmax.xlane.f32.xlu0 %v4064
      %v4074 = vpop.xlane.xlu0 %4073
      %4075 = vmax.xlane.f32.xlu0 %v4066
      %v4076 = vpop.xlane.xlu0 %4075
      %4077 = vmax.xlane.f32.xlu0 %v4069
      %v4078 = vpop.xlane.xlu0 %4077
      %4079 = vmax.xlane.f32.xlu0 %v4071
      %v4080 = vpop.xlane.xlu0 %4079
      %v4081 = vsub.f32 %v4064, %v4074
      %v4082 = vsub.f32 %v4066, %v4076
      %v4083 = vsub.f32 %v4069, %v4078
      %v4084 = vsub.f32 %v4071, %v4080
      %v4085 = vmul.f32 %v4081, 1.442695
      %v4086 = vpow.pop %v4085
      %v4087 = vmul.f32 %v4082, 1.442695
      %v4088 = vpow.pop %v4087
      %v4089 = vmul.f32 %v4083, 1.442695
      %v4090 = vpow.pop %v4089
      %v4091 = vmul.f32 %v4084, 1.442695
      %v4092 = vpow.pop %v4091
      %4093 = vadd.xlane.f32.xlu0 %v4086
      %v4094 = vpop.xlane.xlu0 %4093
      %4095 = vadd.xlane.f32.xlu0 %v4088
      %v4096 = vpop.xlane.xlu0 %4095
      %4097 = vadd.xlane.f32.xlu0 %v4090
      %v4098 = vpop.xlane.xlu0 %4097
      %4099 = vadd.xlane.f32.xlu0 %v4092
      %v4100 = vpop.xlane.xlu0 %4099
      %v4101 = vrcp.pop %v4094
      %v4102 = vmul.f32 %v4094, %v4101
      %v4103 = vsub.f32 1.0, %v4102
      %v4104 = vmul.f32 %v4101, %v4103
      %v4105 = vadd.f32 %v4101, %v4104
      %vm4106 = vweird.f32 %v4094
      %vm4107 = vweird.f32 %v4101
      %vm4108 = vmor %vm4106, %vm4107
      %v4109 = vsel %vm4108, %v4101, %v4105
      %v4110 = vand.u32 2147483647, %v4094
      %vm4111 = vcmp.eq.f32.partialorder %v4110, 8.507059e+37
      %v4112 = vand.u32 %v4094, 2147483648
      %v4113 = vor.u32 1.1754944e-38, %v4112
      %v4114 = vsel %vm4111, %v4113, %v4109
      %v4115 = vmul.f32 %v4086, %v4114
      %v4116 = vrcp.pop %v4096
      %v4117 = vmul.f32 %v4096, %v4116
      %v4118 = vsub.f32 1.0, %v4117
      %v4119 = vmul.f32 %v4116, %v4118
      %v4120 = vadd.f32 %v4116, %v4119
      %vm4121 = vweird.f32 %v4096
      %vm4122 = vweird.f32 %v4116
      %vm4123 = vmor %vm4121, %vm4122
      %v4124 = vsel %vm4123, %v4116, %v4120
      %v4125 = vand.u32 2147483647, %v4096
      %vm4126 = vcmp.eq.f32.partialorder %v4125, 8.507059e+37
      %v4127 = vand.u32 %v4096, 2147483648
      %v4128 = vor.u32 1.1754944e-38, %v4127
      %v4129 = vsel %vm4126, %v4128, %v4124
      %v4130 = vmul.f32 %v4088, %v4129
      %v4131 = vrcp.pop %v4098
      %v4132 = vmul.f32 %v4098, %v4131
      %v4133 = vsub.f32 1.0, %v4132
      %v4134 = vmul.f32 %v4131, %v4133
      %v4135 = vadd.f32 %v4131, %v4134
      %vm4136 = vweird.f32 %v4098
      %vm4137 = vweird.f32 %v4131
      %vm4138 = vmor %vm4136, %vm4137
      %v4139 = vsel %vm4138, %v4131, %v4135
      %v4140 = vand.u32 2147483647, %v4098
      %vm4141 = vcmp.eq.f32.partialorder %v4140, 8.507059e+37
      %v4142 = vand.u32 %v4098, 2147483648
      %v4143 = vor.u32 1.1754944e-38, %v4142
      %v4144 = vsel %vm4141, %v4143, %v4139
      %v4145 = vmul.f32 %v4090, %v4144
      %v4146 = vrcp.pop %v4100
      %v4147 = vmul.f32 %v4100, %v4146
      %v4148 = vsub.f32 1.0, %v4147
      %v4149 = vmul.f32 %v4146, %v4148
      %v4150 = vadd.f32 %v4146, %v4149
      %vm4151 = vweird.f32 %v4100
      %vm4152 = vweird.f32 %v4146
      %vm4153 = vmor %vm4151, %vm4152
      %v4154 = vsel %vm4153, %v4146, %v4150
      %v4155 = vand.u32 2147483647, %v4100
      %vm4156 = vcmp.eq.f32.partialorder %v4155, 8.507059e+37
      %v4157 = vand.u32 %v4100, 2147483648
      %v4158 = vor.u32 1.1754944e-38, %v4157
      %v4159 = vsel %vm4156, %v4158, %v4154
      %v4160 = vmul.f32 %v4092, %v4159
      %4161 = vst [vmem:[%s256] sm:$0xff] %v4115
      %4162 = vst [vmem:[%s256 + $0x8] sm:$0xff] %v4130
      %4163 = vst [vmem:[%s256 + $0x10] sm:$0xff] %v4145
      %4164 = vst [vmem:[%s256 + $0x18] sm:$0xff] %v4160
      %s4165 = smul.u32 4, %s17
      %p4166 = scmp.lt.s32.totalorder %s4165, 7
      %s4167 = scalar_select %p4166, %s4165, 7
      %s4168 = smul.addr %s4167, 8
      %s4169 = scalar_lea.vmem %s6, %s4168
      // Predicated region
      $region45: #{textcnn_forward.1} parent=43 // pred_check
        %p4170 = pneg %p166
      $region46: #{textcnn_forward.1} parent=43 // pred_check_branch
        %4172 = sbr.rel (%p4170) target = $region48
      $region47: #{textcnn_forward.1} parent=43 // pred_region
        %s4173 = smul.u32 4, %s17
      $region48: #{textcnn_forward.1} parent=43 // pred_fallthru
        _
    $region44: #{textcnn_forward.1} parent=5 // pred_fallthru
      _
    %p4174 = scmp.le.s32.totalorder 2, %s12
    // Predicated region
    $region49: #{textcnn_forward.1} parent=5 // pred_check
      %p4175 = pneg %p4174
    $region50: #{textcnn_forward.1} parent=5 // pred_check_branch
      %4177 = sbr.rel (%p4175) target = $region52
    $region51: #{textcnn_forward.1} parent=5 // pred_region
      %s4178 = ssub.s32 %s12, 2
      // Predicated region
      $region53: #{textcnn_forward.1} parent=51 // pred_check
        %p4179 = pneg %p172
      $region54: #{textcnn_forward.1} parent=51 // pred_check_branch
        %4181 = sbr.rel (%p4179) target = $region56
      $region55: #{textcnn_forward.1} parent=51 // pred_region
        %s4182 = smul.u32 4, %s18
        %p4183 = scmp.lt.s32.totalorder %s4182, 7
        %s4184 = scalar_select %p4183, %s4182, 7
        %s4185 = smul.addr %s4184, 8
        %s4186 = scalar_lea.vmem %s6, %s4185
      $region56: #{textcnn_forward.1} parent=51 // pred_fallthru
        _
    $region52: #{textcnn_forward.1} parent=5 // pred_fallthru
      _
  $region6: #{textcnn_forward.1} parent=0 // loop_footer
    %s16 = sadd.s32 1, %s12
  $region7: #{textcnn_forward.1} parent=0 // loop_footer_branch
    %11 = sbr.rel target = $region3
  $region8: #{textcnn_forward.1} parent=0 // loop_exit
    _

</llo_original>
